<compile_context>
chip_gen: v5e
topology: v5e:2x2
jax: 0.10.0
libtpu: 0.0.40
codegen_flags: <defaults>
</compile_context>

<pallas_src>
import functools

import jax
import jax.numpy as jnp
from jax.experimental import pallas as pl
from jax.experimental.pallas import tpu as pltpu


def _round_up(x, m):
    return ((x + m - 1) // m) * m


def _const_index_map(ndim):
    def imap(b, lens_ref):
        return (0,) * ndim
    return imap


def _batch_index_map(b, lens_ref):
    return (b, 0, 0)


# ---------------------------------------------------------------------------
# Fused PosteriorEncoder kernel (one grid step per batch element)
# ---------------------------------------------------------------------------

def _posterior_encoder_kernel(*refs, T, H, K, L, dil_rate, max_pad, co_k, tau,
                              has_g, stage_taps):
    it = iter(refs)
    lens_ref = next(it)                              # scalar prefetch (SMEM)
    x_ref, noise_ref = next(it), next(it)
    pre_w_ref, pre_b_ref = next(it), next(it)
    in_w_t_ref, in_w_s_ref = next(it), next(it)
    in_b_t_ref, in_b_s_ref = next(it), next(it)
    if L > 1:
        rs_res_w_ref, rs_res_b_ref = next(it), next(it)
    rs_skip_w_ref, rs_skip_b_ref = next(it), next(it)
    proj_mu_w_ref, proj_mu_b_ref = next(it), next(it)
    proj_ls_w_ref, proj_ls_b_ref = next(it), next(it)
    if has_g:
        g_ref = next(it)
        cond_w_t_ref, cond_w_s_ref = next(it), next(it)
        cond_b_t_ref, cond_b_s_ref = next(it), next(it)
    z_ref, m_ref, logs_ref = next(it), next(it), next(it)
    xpad_ref, skip_ref = next(it), next(it)
    xcat_ref = next(it) if stage_taps else None

    b = pl.program_id(0)
    mm_dtype = pre_w_ref.dtype                       # matmul operand dtype (bf16 by default)
    f32 = jnp.float32

    # sequence mask (T, 1) computed in-kernel from x_lengths (no (B, T) mask DMA)
    t_idx = jax.lax.broadcasted_iota(jnp.int32, (T, 1), 0)
    mask = (t_idx < lens_ref[b]).astype(f32)

    # --- pre 1x1 conv (masked); x already cast to mm_dtype in the wrapper ---
    h = (jnp.dot(x_ref[...], pre_w_ref[...], preferred_element_type=f32)
         + pre_b_ref[...]) * mask

    if has_g:
        g = g_ref[...]                               # (Tg, gin) in mm_dtype

    # Zero-padded residual stream in VMEM. Halo is re-zeroed every step (2*max_pad*H stores,
    # negligible); guarding with `b == 0` would be unsafe if the batch grid is sharded across
    # TensorCores ("parallel" semantics on a multi-TC chip -> scratch is per-core).
    if max_pad > 0:
        zeros_halo = jnp.zeros((max_pad, H), f32)
        xpad_ref[pl.ds(0, max_pad), :] = zeros_halo
        xpad_ref[pl.ds(max_pad + T, max_pad), :] = zeros_halo
    xpad_ref[pl.ds(max_pad, T), :] = h
    skip_ref[...] = jnp.zeros((T, H), f32)

    # --- WN stack, unrolled; residual + skip never leave VMEM ---
    for l in range(L):
        dil = dil_rate ** l
        pad = dil * (K - 1) // 2
        base = max_pad - pad

        w_t = in_w_t_ref[l]                          # (K*H, H)
        w_s = in_w_s_ref[l]
        if stage_taps:
            # stage the K dilated taps side-by-side (bf16) -> deep (T, K*H) @ (K*H, H) matmuls
            for k in range(K):
                xcat_ref[:, k * H:(k + 1) * H] = (
                    xpad_ref[pl.ds(base + k * dil, T), :].astype(mm_dtype))
            xc = xcat_ref[...]
            a_t = jnp.dot(xc, w_t, preferred_element_type=f32)
            a_s = jnp.dot(xc, w_s, preferred_element_type=f32)
        else:
            # per-tap accumulation (v5-class): no staging scratch, taps read straight from xpad
            a_t = jnp.zeros((T, H), f32)
            a_s = jnp.zeros((T, H), f32)
            for k in range(K):
                tap = xpad_ref[pl.ds(base + k * dil, T), :].astype(mm_dtype)
                a_t = a_t + jnp.dot(tap, w_t[k * H:(k + 1) * H, :],
                                    preferred_element_type=f32)
                a_s = a_s + jnp.dot(tap, w_s[k * H:(k + 1) * H, :],
                                    preferred_element_type=f32)
        a_t = a_t + in_b_t_ref[l]
        a_s = a_s + in_b_s_ref[l]

        if has_g:
            # per-layer cond 1x1 conv (full (Tg, 2H*L) never materialized); Tg==1 broadcasts
            a_t = a_t + jnp.dot(g, cond_w_t_ref[l], preferred_element_type=f32) + cond_b_t_ref[l]
            a_s = a_s + jnp.dot(g, cond_w_s_ref[l], preferred_element_type=f32) + cond_b_s_ref[l]

        # fused_add_tanh_sigmoid_multiply
        acts = (jnp.tanh(a_t) * jax.nn.sigmoid(a_s)).astype(mm_dtype)

        skip_ref[...] += (jnp.dot(acts, rs_skip_w_ref[l], preferred_element_type=f32)
                          + rs_skip_b_ref[l])
        if l < L - 1:                                # last layer is skip-only (no residual)
            res = (jnp.dot(acts, rs_res_w_ref[l], preferred_element_type=f32)
                   + rs_res_b_ref[l])
            x_cur = xpad_ref[pl.ds(max_pad, T), :]
            xpad_ref[pl.ds(max_pad, T), :] = (x_cur + res) * mask

    # --- proj 1x1 conv (split mu/logs weights: lane-aligned, no column slicing) + sample ---
    enc_out = (skip_ref[...] * mask).astype(mm_dtype)
    mu = (jnp.dot(enc_out, proj_mu_w_ref[...], preferred_element_type=f32)
          + proj_mu_b_ref[...]) * mask
    logs = (jnp.dot(enc_out, proj_ls_w_ref[...], preferred_element_type=f32)
            + proj_ls_b_ref[...]) * mask

    # TODO(synk): noise comes from jax.random in the wrapper (deterministic per seed) rather than
    # torch.randn_like / the TPU hardware PRNG -- distribution matches, bits do not.
    z = (mu + noise_ref[...] * (tau * jnp.exp(logs))) * mask

    z_ref[...] = z.astype(z_ref.dtype)
    m_ref[...] = mu.astype(m_ref.dtype)
    logs_ref[...] = logs.astype(logs_ref.dtype)


# ---------------------------------------------------------------------------
# PosteriorEncoder module (parameters created deterministically in-script)
# ---------------------------------------------------------------------------

class PosteriorEncoderPallas:
    def __init__(self, in_channels, out_channels, hidden_channels, kernel_size,
                 dilation_rate, n_layers, gin_channels=0, param_seed=0,
                 param_dtype=jnp.bfloat16, stage_taps=None):
        assert kernel_size % 2 == 1, "WN uses odd kernel sizes ('same' dilated padding)"
        self.in_channels = in_channels
        self.out_channels = out_channels
        self.hidden_channels = hidden_channels
        self.kernel_size = kernel_size
        self.dilation_rate = dilation_rate
        self.n_layers = n_layers
        self.gin_channels = gin_channels
        self.param_dtype = param_dtype
        # lane-dense kernel-facing output width (sliced back to out_channels in the wrapper)
        self.co_k = _round_up(max(out_channels, 1), 128)

        try:
            kind = jax.devices()[0].device_kind.lower()
        except Exception:
            kind = ""
        self._device_kind = kind
        if stage_taps is None:
            # v5-class (128-deep MXU, 1 vst slot): skip staging, accumulate per tap.
            stage_taps = "v5" not in kind
        self.stage_taps = bool(stage_taps)

        def nrm(k, shape, dtype, scale=0.1):
            return (jax.random.normal(k, shape, jnp.float32) * scale).astype(dtype)

        H, K, L, co = hidden_channels, kernel_size, n_layers, out_channels
        keys = iter(jax.random.split(jax.random.PRNGKey(param_seed), 32))

        # NOTE: weight_norm is a training-time re-parametrization only; forward math uses the
        # effective weight. Weights in bf16 (MXU / DMA efficiency), biases f32 (added after the
        # f32 accumulation). Gate (tanh/sigmoid), residual/skip, mu/logs and per-layer cond
        # halves are stored as separate slabs so no matmul output needs a lane-misaligned split.
        self.pre_w = nrm(next(keys), (in_channels, H), param_dtype)
        self.pre_b = nrm(next(keys), (1, H), jnp.float32)
        # dilated conv taps flattened tap-major: (L, K*H, H) per gate half
        self.in_w_t = nrm(next(keys), (L, K * H, H), param_dtype)
        self.in_w_s = nrm(next(keys), (L, K * H, H), param_dtype)
        self.in_b_t = nrm(next(keys), (L, 1, H), jnp.float32)
        self.in_b_s = nrm(next(keys), (L, 1, H), jnp.float32)
        if L > 1:
            self.rs_res_w = nrm(next(keys), (L - 1, H, H), param_dtype)
            self.rs_res_b = nrm(next(keys), (L - 1, 1, H), jnp.float32)
        self.rs_skip_w = nrm(next(keys), (L, H, H), param_dtype)
        self.rs_skip_b = nrm(next(keys), (L, 1, H), jnp.float32)

        def pad_cols(a, width):
            return jnp.pad(a, ((0, 0), (0, width - a.shape[1])))

        self.proj_mu_w = pad_cols(nrm(next(keys), (H, co), jnp.float32), self.co_k).astype(param_dtype)
        self.proj_mu_b = pad_cols(nrm(next(keys), (1, co), jnp.float32), self.co_k)
        self.proj_ls_w = pad_cols(nrm(next(keys), (H, co), jnp.float32), self.co_k).astype(param_dtype)
        self.proj_ls_b = pad_cols(nrm(next(keys), (1, co), jnp.float32), self.co_k)

        if gin_channels > 0:
            self.cond_w_t = nrm(next(keys), (L, gin_channels, H), param_dtype)
            self.cond_w_s = nrm(next(keys), (L, gin_channels, H), param_dtype)
            self.cond_b_t = nrm(next(keys), (L, 1, H), jnp.float32)
            self.cond_b_s = nrm(next(keys), (L, 1, H), jnp.float32)

    def __call__(self, x, x_lengths, g=None, tau=1.0, noise_seed=1234):
        # x: (B, in_channels, T) ; x_lengths: (B,) int ; g: (B, gin_channels, Tg) or None
        B, Cin, T = x.shape
        assert Cin == self.in_channels
        out_dtype = x.dtype
        H, K, L = self.hidden_channels, self.kernel_size, self.n_layers
        co, co_k = self.out_channels, self.co_k
        max_pad = (self.dilation_rate ** (L - 1)) * (K - 1) // 2
        Tpad = T + 2 * max_pad
        stage_taps = self.stage_taps

        # activations cast to the weight dtype wrapper-side (halves input HBM->VMEM bytes)
        x_tc = jnp.transpose(x, (0, 2, 1)).astype(self.param_dtype)       # (B, T, Cin)
        lens = x_lengths.astype(jnp.int32)
        noise = jax.random.normal(jax.random.PRNGKey(noise_seed), (B, T, co_k), jnp.float32)

        has_g = g is not None
        weights = [self.pre_w, self.pre_b, self.in_w_t, self.in_w_s, self.in_b_t, self.in_b_s]
        if L > 1:
            weights += [self.rs_res_w, self.rs_res_b]
        weights += [self.rs_skip_w, self.rs_skip_b,
                    self.proj_mu_w, self.proj_mu_b, self.proj_ls_w, self.proj_ls_b]

        args = [lens, x_tc, noise] + weights
        if has_g:
            assert self.gin_channels > 0
            Tg = g.shape[2]
            assert Tg in (1, T), "conditioning must be per-frame (Tg==T) or global (Tg==1)"
            g_tc = jnp.transpose(g, (0, 2, 1)).astype(self.param_dtype)   # (B, Tg, gin)
            args += [g_tc, self.cond_w_t, self.cond_w_s, self.cond_b_t, self.cond_b_s]

        kern = functools.partial(_posterior_encoder_kernel, T=T, H=H, K=K, L=L,
                                 dil_rate=self.dilation_rate, max_pad=max_pad, co_k=co_k,
                                 tau=float(tau), has_g=has_g, stage_taps=stage_taps)

        out_shape = tuple(jax.ShapeDtypeStruct((B, T, co_k), out_dtype) for _ in range(3))
        out_specs = tuple(pl.BlockSpec((None, T, co_k), _batch_index_map) for _ in range(3))

        scratch = [pltpu.VMEM((Tpad, H), jnp.float32),                    # padded residual stream
                   pltpu.VMEM((T, H), jnp.float32)]                       # skip accumulator
        if stage_taps:
            scratch.append(pltpu.VMEM((T, K * H), self.param_dtype))      # staged dilated taps

        # explicit scoped-VMEM limit derived from the actual footprint (per-generation cap)
        def nbytes(a):
            return int(a.size) * jnp.dtype(a.dtype).itemsize
        wbytes = sum(nbytes(a) for a in weights)
        if has_g:
            wbytes += sum(nbytes(a) for a in
                          (self.cond_w_t, self.cond_w_s, self.cond_b_t, self.cond_b_s))
        blk_bytes = (T * Cin * 2 + T * co_k * 4 + 3 * T * co_k * jnp.dtype(out_dtype).itemsize
                     + (g.shape[2] * self.gin_channels * 2 if has_g else 0))
        scr_bytes = Tpad * H * 4 + T * H * 4 + (T * K * H * 2 if stage_taps else 0)
        est = 2 * wbytes + 2 * blk_bytes + scr_bytes + (8 << 20)          # + intermediate headroom
        cap = (56 << 20) if "7" in self._device_kind else (100 << 20)     # v7x: 64 MiB physical
        vmem_limit = int(min(max(est, 32 << 20), cap))

        def build_in_specs(single_buffer_weights):
            def wspec(arr):
                imap = _const_index_map(arr.ndim)
                if single_buffer_weights and hasattr(pl, "Buffered"):
                    try:
                        # constant index_map across the batch grid -> single buffer is enough
                        return pl.BlockSpec(arr.shape, imap, pipeline_mode=pl.Buffered(1))
                    except TypeError:
                        pass
                return pl.BlockSpec(arr.shape, imap)

            specs = [pl.BlockSpec((None, T, Cin), _batch_index_map),
                     pl.BlockSpec((None, T, co_k), _batch_index_map)]
            specs += [wspec(a) for a in weights]
            if has_g:
                specs += [pl.BlockSpec((None, g.shape[2], self.gin_channels), _batch_index_map)]
                specs += [wspec(a) for a in (self.cond_w_t, self.cond_w_s,
                                             self.cond_b_t, self.cond_b_s)]
            return specs

        # TODO(synk): for v7x (2 TCs) with B == 1, add a second "parallel" grid axis over T chunks
        # (re-reading the max_pad halo) so both cores get work; a T-tiled path would also bound
        # VMEM for very long sequences. Single batch-axis grid here.
        def run(single_buffer_weights):
            return pl.pallas_call(
                kern,
                out_shape=out_shape,
                grid_spec=pltpu.PrefetchScalarGridSpec(
                    num_scalar_prefetch=1,
                    grid=(B,),
                    in_specs=build_in_specs(single_buffer_weights),
                    out_specs=list(out_specs),
                    scratch_shapes=scratch),
                compiler_params=pltpu.CompilerParams(
                    dimension_semantics=("parallel",),
                    vmem_limit_bytes=vmem_limit),
            )(*args)

        try:
            z_p, m_p, logs_p = run(True)
        except Exception:
            # TODO(synk): pl.Buffered(1) single-buffered weights not supported on this jax
            # version / backend; rerun with default (double) buffering.
            z_p, m_p, logs_p = run(False)

        x_mask = (jnp.arange(T, dtype=jnp.int32)[None, :]
                  < lens[:, None]).astype(out_dtype)[:, None, :]          # (B, 1, T)
        to_ncl = lambda a: jnp.transpose(a[:, :, :co], (0, 2, 1))         # drop lane padding
        return to_ncl(z_p), to_ncl(m_p), to_ncl(logs_p), x_mask


# ---------------------------------------------------------------------------
# Main
# ---------------------------------------------------------------------------

if __name__ == "__main__":
    B, T = 2, 32
    in_ch, out_ch, hid, K, dil_rate, n_layers = 8, 4, 16, 5, 2, 3

    key = jax.random.PRNGKey(0)
    kx, kg = jax.random.split(key, 2)
    x = jax.random.normal(kx, (B, in_ch, T), jnp.float32)
    x_lengths = jnp.array([T, 20], jnp.int32)

    # unconditioned path (gin_channels = 0, g = None)
    enc = PosteriorEncoderPallas(in_ch, out_ch, hid, K, dil_rate, n_layers, gin_channels=0)
    z, m, logs, x_mask = enc(x, x_lengths, g=None, tau=1.0, noise_seed=1234)
    jax.block_until_ready((z, m, logs, x_mask))
    assert z.shape == (B, out_ch, T) and m.shape == (B, out_ch, T)
    assert logs.shape == (B, out_ch, T) and x_mask.shape == (B, 1, T)
    assert bool(jnp.all(jnp.isfinite(z)))
    # padded frames of the second (length-20) sequence must be masked to zero
    assert float(jnp.max(jnp.abs(z[1, :, 20:]))) == 0.0

    # conditioned path (gin_channels > 0, global speaker embedding Tg = 1)
    enc_g = PosteriorEncoderPallas(in_ch, out_ch, hid, K, dil_rate, n_layers,
                                   gin_channels=3, param_seed=1)
    g = jax.random.normal(kg, (B, 3, 1), jnp.float32)
    outs = enc_g(x, x_lengths, g=g, tau=0.5, noise_seed=7)
    jax.block_until_ready(outs)
    assert outs[0].shape == (B, out_ch, T)

    # per-tap accumulation path (v5-class default) exercised explicitly for coverage
    enc_v5 = PosteriorEncoderPallas(in_ch, out_ch, hid, K, dil_rate, n_layers,
                                    gin_channels=0, param_seed=2, stage_taps=False)
    outs2 = enc_v5(x, x_lengths, g=None, tau=1.0, noise_seed=3)
    jax.block_until_ready(outs2)
    assert outs2[0].shape == (B, out_ch, T)
    assert float(jnp.max(jnp.abs(outs2[0][1, :, 20:]))) == 0.0

    print("KERNEL_OK")
</pallas_src>

<mosaic_0001>
module attributes {stable_mosaic.version = 11 : i64} {
  func.func @_posterior_encoder_kernel(%arg0: i32, %arg1: memref<2xi32, #tpu.memory_space<smem>>, %arg2: memref<1x32x8xbf16, #tpu.memory_space<vmem>>, %arg3: memref<1x32x128xf32, #tpu.memory_space<vmem>>, %arg4: memref<8x16xbf16, #tpu.memory_space<vmem>>, %arg5: memref<1x16xf32, #tpu.memory_space<vmem>>, %arg6: memref<3x80x16xbf16, #tpu.memory_space<vmem>>, %arg7: memref<3x80x16xbf16, #tpu.memory_space<vmem>>, %arg8: memref<3x1x16xf32, #tpu.memory_space<vmem>>, %arg9: memref<3x1x16xf32, #tpu.memory_space<vmem>>, %arg10: memref<2x16x16xbf16, #tpu.memory_space<vmem>>, %arg11: memref<2x1x16xf32, #tpu.memory_space<vmem>>, %arg12: memref<3x16x16xbf16, #tpu.memory_space<vmem>>, %arg13: memref<3x1x16xf32, #tpu.memory_space<vmem>>, %arg14: memref<16x128xbf16, #tpu.memory_space<vmem>>, %arg15: memref<1x128xf32, #tpu.memory_space<vmem>>, %arg16: memref<16x128xbf16, #tpu.memory_space<vmem>>, %arg17: memref<1x128xf32, #tpu.memory_space<vmem>>, %arg18: memref<1x32x128xf32, #tpu.memory_space<vmem>>, %arg19: memref<1x32x128xf32, #tpu.memory_space<vmem>>, %arg20: memref<1x32x128xf32, #tpu.memory_space<vmem>>, %arg21: memref<48x16xf32, #tpu.memory_space<vmem>>, %arg22: memref<32x16xf32, #tpu.memory_space<vmem>>, %arg23: memref<32x80xbf16, #tpu.memory_space<vmem>>) attributes {dimension_semantics = [#tpu.dimension_semantics<parallel>], iteration_bounds = array<i64: 2>, scalar_prefetch = 1 : i64, scratch_operands = 3 : i64, tpu.core_type = #tpu.core_type<tc>, window_params = [{transform_indices = @transform_0, window_bounds = array<i64: 1, 32, 8>}, {transform_indices = @transform_1, window_bounds = array<i64: 1, 32, 128>}, {pipeline_mode = #tpu.pipeline_mode<synchronous>, transform_indices = @transform_2, window_bounds = array<i64: 8, 16>}, {pipeline_mode = #tpu.pipeline_mode<synchronous>, transform_indices = @transform_3, window_bounds = array<i64: 1, 16>}, {pipeline_mode = #tpu.pipeline_mode<synchronous>, transform_indices = @transform_4, window_bounds = array<i64: 3, 80, 16>}, {pipeline_mode = #tpu.pipeline_mode<synchronous>, transform_indices = @transform_5, window_bounds = array<i64: 3, 80, 16>}, {pipeline_mode = #tpu.pipeline_mode<synchronous>, transform_indices = @transform_6, window_bounds = array<i64: 3, 1, 16>}, {pipeline_mode = #tpu.pipeline_mode<synchronous>, transform_indices = @transform_7, window_bounds = array<i64: 3, 1, 16>}, {pipeline_mode = #tpu.pipeline_mode<synchronous>, transform_indices = @transform_8, window_bounds = array<i64: 2, 16, 16>}, {pipeline_mode = #tpu.pipeline_mode<synchronous>, transform_indices = @transform_9, window_bounds = array<i64: 2, 1, 16>}, {pipeline_mode = #tpu.pipeline_mode<synchronous>, transform_indices = @transform_10, window_bounds = array<i64: 3, 16, 16>}, {pipeline_mode = #tpu.pipeline_mode<synchronous>, transform_indices = @transform_11, window_bounds = array<i64: 3, 1, 16>}, {pipeline_mode = #tpu.pipeline_mode<synchronous>, transform_indices = @transform_12, window_bounds = array<i64: 16, 128>}, {pipeline_mode = #tpu.pipeline_mode<synchronous>, transform_indices = @transform_13, window_bounds = array<i64: 1, 128>}, {pipeline_mode = #tpu.pipeline_mode<synchronous>, transform_indices = @transform_14, window_bounds = array<i64: 16, 128>}, {pipeline_mode = #tpu.pipeline_mode<synchronous>, transform_indices = @transform_15, window_bounds = array<i64: 1, 128>}, {transform_indices = @transform_16, window_bounds = array<i64: 1, 32, 128>}, {transform_indices = @transform_17, window_bounds = array<i64: 1, 32, 128>}, {transform_indices = @transform_18, window_bounds = array<i64: 1, 32, 128>}]} {
    %0 = tpu.iota {dimensions = array<i32: 0>} : vector<32x1xi32>
    %1 = arith.index_cast %arg0 : i32 to index
    %2 = memref.load %arg1[%1] : memref<2xi32, #tpu.memory_space<smem>>
    %3 = vector.broadcast %2 : i32 to vector<32x1xi32>
    %4 = arith.cmpi slt, %0, %3 : vector<32x1xi32>
    %5 = arith.extui %4 : vector<32x1xi1> to vector<32x1xi32>
    %6 = arith.sitofp %5 : vector<32x1xi32> to vector<32x1xf32>
    %c0 = arith.constant 0 : index
    %c0_0 = arith.constant 0 : index
    %c0_1 = arith.constant 0 : index
    %7 = vector.load %arg2[%c0, %c0_0, %c0_1] : memref<1x32x8xbf16, #tpu.memory_space<vmem>>, vector<1x32x8xbf16>
    %8 = vector.shape_cast %7 : vector<1x32x8xbf16> to vector<32x8xbf16>
    %c0_2 = arith.constant 0 : index
    %c0_3 = arith.constant 0 : index
    %9 = vector.load %arg4[%c0_2, %c0_3] : memref<8x16xbf16, #tpu.memory_space<vmem>>, vector<8x16xbf16>
    %cst = arith.constant dense<0.000000e+00> : vector<32x16xf32>
    %10 = tpu.matmul %8, %9, %cst {dimension_numbers = #tpu.dot_dimension_numbers<[1], [0], [0], [1], [0, 0, 1, 1], [], []>} : vector<32x8xbf16>, vector<8x16xbf16>, vector<32x16xf32> -> vector<32x16xf32>
    %c0_4 = arith.constant 0 : index
    %c0_5 = arith.constant 0 : index
    %11 = vector.load %arg5[%c0_4, %c0_5] : memref<1x16xf32, #tpu.memory_space<vmem>>, vector<1x16xf32>
    %12 = vector.broadcast %11 : vector<1x16xf32> to vector<32x16xf32>
    %13 = arith.addf %10, %12 : vector<32x16xf32>
    %14 = vector.broadcast %6 : vector<32x1xf32> to vector<32x16xf32>
    %15 = arith.mulf %13, %14 : vector<32x16xf32>
    %cst_6 = arith.constant 0.000000e+00 : f32
    %16 = vector.broadcast %cst_6 : f32 to vector<8x16xf32>
    %c0_7 = arith.constant 0 : index
    %c0_8 = arith.constant 0 : index
    %17 = vector.load %arg21[%c0_7, %c0_8] : memref<48x16xf32, #tpu.memory_space<vmem>>, vector<8x16xf32>
    tpu.vector_store %arg21[%c0_7, %c0_8], %16 {strides = array<i32>} : memref<48x16xf32, #tpu.memory_space<vmem>>, vector<8x16xf32>,
    %c40 = arith.constant 40 : index
    %c0_9 = arith.constant 0 : index
    %18 = vector.load %arg21[%c40, %c0_9] : memref<48x16xf32, #tpu.memory_space<vmem>>, vector<8x16xf32>
    tpu.vector_store %arg21[%c40, %c0_9], %16 {strides = array<i32>} : memref<48x16xf32, #tpu.memory_space<vmem>>, vector<8x16xf32>,
    %c8 = arith.constant 8 : index
    %c0_10 = arith.constant 0 : index
    %19 = vector.load %arg21[%c8, %c0_10] : memref<48x16xf32, #tpu.memory_space<vmem>>, vector<32x16xf32>
    tpu.vector_store %arg21[%c8, %c0_10], %15 {strides = array<i32>} : memref<48x16xf32, #tpu.memory_space<vmem>>, vector<32x16xf32>,
    %cst_11 = arith.constant 0.000000e+00 : f32
    %20 = vector.broadcast %cst_11 : f32 to vector<32x16xf32>
    %c0_12 = arith.constant 0 : index
    %c0_13 = arith.constant 0 : index
    %21 = vector.load %arg22[%c0_12, %c0_13] : memref<32x16xf32, #tpu.memory_space<vmem>>, vector<32x16xf32>
    tpu.vector_store %arg22[%c0_12, %c0_13], %20 {strides = array<i32>} : memref<32x16xf32, #tpu.memory_space<vmem>>, vector<32x16xf32>,
    %c0_14 = arith.constant 0 : index
    %c0_15 = arith.constant 0 : index
    %c0_16 = arith.constant 0 : index
    %22 = vector.load %arg6[%c0_14, %c0_15, %c0_16] : memref<3x80x16xbf16, #tpu.memory_space<vmem>>, vector<1x80x16xbf16>
    %23 = vector.shape_cast %22 : vector<1x80x16xbf16> to vector<80x16xbf16>
    %c0_17 = arith.constant 0 : index
    %c0_18 = arith.constant 0 : index
    %c0_19 = arith.constant 0 : index
    %24 = vector.load %arg7[%c0_17, %c0_18, %c0_19] : memref<3x80x16xbf16, #tpu.memory_space<vmem>>, vector<1x80x16xbf16>
    %25 = vector.shape_cast %24 : vector<1x80x16xbf16> to vector<80x16xbf16>
    %c6 = arith.constant 6 : index
    %c0_20 = arith.constant 0 : index
    %26 = vector.load %arg21[%c6, %c0_20] : memref<48x16xf32, #tpu.memory_space<vmem>>, vector<32x16xf32>
    %27 = arith.truncf %26 : vector<32x16xf32> to vector<32x16xbf16>
    %c0_21 = arith.constant 0 : index
    %c0_22 = arith.constant 0 : index
    %28 = vector.load %arg23[%c0_21, %c0_22] : memref<32x80xbf16, #tpu.memory_space<vmem>>, vector<32x16xbf16>
    tpu.vector_store %arg23[%c0_21, %c0_22], %27 {strides = array<i32>} : memref<32x80xbf16, #tpu.memory_space<vmem>>, vector<32x16xbf16>,
    %c7 = arith.constant 7 : index
    %c0_23 = arith.constant 0 : index
    %29 = vector.load %arg21[%c7, %c0_23] : memref<48x16xf32, #tpu.memory_space<vmem>>, vector<32x16xf32>
    %30 = arith.truncf %29 : vector<32x16xf32> to vector<32x16xbf16>
    %c0_24 = arith.constant 0 : index
    %c16 = arith.constant 16 : index
    %31 = vector.load %arg23[%c0_24, %c16] : memref<32x80xbf16, #tpu.memory_space<vmem>>, vector<32x16xbf16>
    tpu.vector_store %arg23[%c0_24, %c16], %30 {strides = array<i32>} : memref<32x80xbf16, #tpu.memory_space<vmem>>, vector<32x16xbf16>,
    %c8_25 = arith.constant 8 : index
    %c0_26 = arith.constant 0 : index
    %32 = vector.load %arg21[%c8_25, %c0_26] : memref<48x16xf32, #tpu.memory_space<vmem>>, vector<32x16xf32>
    %33 = arith.truncf %32 : vector<32x16xf32> to vector<32x16xbf16>
    %c0_27 = arith.constant 0 : index
    %c32 = arith.constant 32 : index
    %34 = vector.load %arg23[%c0_27, %c32] : memref<32x80xbf16, #tpu.memory_space<vmem>>, vector<32x16xbf16>
    tpu.vector_store %arg23[%c0_27, %c32], %33 {strides = array<i32>} : memref<32x80xbf16, #tpu.memory_space<vmem>>, vector<32x16xbf16>,
    %c9 = arith.constant 9 : index
    %c0_28 = arith.constant 0 : index
    %35 = vector.load %arg21[%c9, %c0_28] : memref<48x16xf32, #tpu.memory_space<vmem>>, vector<32x16xf32>
    %36 = arith.truncf %35 : vector<32x16xf32> to vector<32x16xbf16>
    %c0_29 = arith.constant 0 : index
    %c48 = arith.constant 48 : index
    %37 = vector.load %arg23[%c0_29, %c48] : memref<32x80xbf16, #tpu.memory_space<vmem>>, vector<32x16xbf16>
    tpu.vector_store %arg23[%c0_29, %c48], %36 {strides = array<i32>} : memref<32x80xbf16, #tpu.memory_space<vmem>>, vector<32x16xbf16>,
    %c10 = arith.constant 10 : index
    %c0_30 = arith.constant 0 : index
    %38 = vector.load %arg21[%c10, %c0_30] : memref<48x16xf32, #tpu.memory_space<vmem>>, vector<32x16xf32>
    %39 = arith.truncf %38 : vector<32x16xf32> to vector<32x16xbf16>
    %c0_31 = arith.constant 0 : index
    %c64 = arith.constant 64 : index
    %40 = vector.load %arg23[%c0_31, %c64] : memref<32x80xbf16, #tpu.memory_space<vmem>>, vector<32x16xbf16>
    tpu.vector_store %arg23[%c0_31, %c64], %39 {strides = array<i32>} : memref<32x80xbf16, #tpu.memory_space<vmem>>, vector<32x16xbf16>,
    %c0_32 = arith.constant 0 : index
    %c0_33 = arith.constant 0 : index
    %41 = vector.load %arg23[%c0_32, %c0_33] : memref<32x80xbf16, #tpu.memory_space<vmem>>, vector<32x80xbf16>
    %cst_34 = arith.constant dense<0.000000e+00> : vector<32x16xf32>
    %42 = tpu.matmul %41, %23, %cst_34 {dimension_numbers = #tpu.dot_dimension_numbers<[1], [0], [0], [1], [0, 0, 1, 1], [], []>} : vector<32x80xbf16>, vector<80x16xbf16>, vector<32x16xf32> -> vector<32x16xf32>
    %cst_35 = arith.constant dense<0.000000e+00> : vector<32x16xf32>
    %43 = tpu.matmul %41, %25, %cst_35 {dimension_numbers = #tpu.dot_dimension_numbers<[1], [0], [0], [1], [0, 0, 1, 1], [], []>} : vector<32x80xbf16>, vector<80x16xbf16>, vector<32x16xf32> -> vector<32x16xf32>
    %c0_36 = arith.constant 0 : index
    %c0_37 = arith.constant 0 : index
    %c0_38 = arith.constant 0 : index
    %44 = vector.load %arg8[%c0_36, %c0_37, %c0_38] : memref<3x1x16xf32, #tpu.memory_space<vmem>>, vector<1x1x16xf32>
    %45 = vector.shape_cast %44 : vector<1x1x16xf32> to vector<1x16xf32>
    %46 = vector.broadcast %45 : vector<1x16xf32> to vector<32x16xf32>
    %47 = arith.addf %42, %46 : vector<32x16xf32>
    %c0_39 = arith.constant 0 : index
    %c0_40 = arith.constant 0 : index
    %c0_41 = arith.constant 0 : index
    %48 = vector.load %arg9[%c0_39, %c0_40, %c0_41] : memref<3x1x16xf32, #tpu.memory_space<vmem>>, vector<1x1x16xf32>
    %49 = vector.shape_cast %48 : vector<1x1x16xf32> to vector<1x16xf32>
    %50 = vector.broadcast %49 : vector<1x16xf32> to vector<32x16xf32>
    %51 = arith.addf %43, %50 : vector<32x16xf32>
    %52 = math.tanh %47 : vector<32x16xf32>
    %53 = arith.negf %51 : vector<32x16xf32>
    %54 = math.exp %53 : vector<32x16xf32>
    %cst_42 = arith.constant 1.000000e+00 : f32
    %55 = vector.broadcast %cst_42 : f32 to vector<32x16xf32>
    %56 = arith.addf %55, %54 : vector<32x16xf32>
    %57 = arith.divf %55, %56 : vector<32x16xf32>
    %58 = arith.mulf %52, %57 : vector<32x16xf32>
    %59 = arith.truncf %58 : vector<32x16xf32> to vector<32x16xbf16>
    %c0_43 = arith.constant 0 : index
    %c0_44 = arith.constant 0 : index
    %60 = vector.load %arg22[%c0_43, %c0_44] : memref<32x16xf32, #tpu.memory_space<vmem>>, vector<32x16xf32>
    %c0_45 = arith.constant 0 : index
    %c0_46 = arith.constant 0 : index
    %c0_47 = arith.constant 0 : index
    %61 = vector.load %arg12[%c0_45, %c0_46, %c0_47] : memref<3x16x16xbf16, #tpu.memory_space<vmem>>, vector<1x16x16xbf16>
    %62 = vector.shape_cast %61 : vector<1x16x16xbf16> to vector<16x16xbf16>
    %cst_48 = arith.constant dense<0.000000e+00> : vector<32x16xf32>
    %63 = tpu.matmul %59, %62, %cst_48 {dimension_numbers = #tpu.dot_dimension_numbers<[1], [0], [0], [1], [0, 0, 1, 1], [], []>} : vector<32x16xbf16>, vector<16x16xbf16>, vector<32x16xf32> -> vector<32x16xf32>
    %c0_49 = arith.constant 0 : index
    %c0_50 = arith.constant 0 : index
    %c0_51 = arith.constant 0 : index
    %64 = vector.load %arg13[%c0_49, %c0_50, %c0_51] : memref<3x1x16xf32, #tpu.memory_space<vmem>>, vector<1x1x16xf32>
    %65 = vector.shape_cast %64 : vector<1x1x16xf32> to vector<1x16xf32>
    %66 = vector.broadcast %65 : vector<1x16xf32> to vector<32x16xf32>
    %67 = arith.addf %63, %66 : vector<32x16xf32>
    %68 = arith.addf %60, %67 : vector<32x16xf32>
    %c0_52 = arith.constant 0 : index
    %c0_53 = arith.constant 0 : index
    %69 = vector.load %arg22[%c0_52, %c0_53] : memref<32x16xf32, #tpu.memory_space<vmem>>, vector<32x16xf32>
    tpu.vector_store %arg22[%c0_52, %c0_53], %68 {strides = array<i32>} : memref<32x16xf32, #tpu.memory_space<vmem>>, vector<32x16xf32>,
    %c0_54 = arith.constant 0 : index
    %c0_55 = arith.constant 0 : index
    %c0_56 = arith.constant 0 : index
    %70 = vector.load %arg10[%c0_54, %c0_55, %c0_56] : memref<2x16x16xbf16, #tpu.memory_space<vmem>>, vector<1x16x16xbf16>
    %71 = vector.shape_cast %70 : vector<1x16x16xbf16> to vector<16x16xbf16>
    %cst_57 = arith.constant dense<0.000000e+00> : vector<32x16xf32>
    %72 = tpu.matmul %59, %71, %cst_57 {dimension_numbers = #tpu.dot_dimension_numbers<[1], [0], [0], [1], [0, 0, 1, 1], [], []>} : vector<32x16xbf16>, vector<16x16xbf16>, vector<32x16xf32> -> vector<32x16xf32>
    %c0_58 = arith.constant 0 : index
    %c0_59 = arith.constant 0 : index
    %c0_60 = arith.constant 0 : index
    %73 = vector.load %arg11[%c0_58, %c0_59, %c0_60] : memref<2x1x16xf32, #tpu.memory_space<vmem>>, vector<1x1x16xf32>
    %74 = vector.shape_cast %73 : vector<1x1x16xf32> to vector<1x16xf32>
    %75 = vector.broadcast %74 : vector<1x16xf32> to vector<32x16xf32>
    %76 = arith.addf %72, %75 : vector<32x16xf32>
    %c8_61 = arith.constant 8 : index
    %c0_62 = arith.constant 0 : index
    %77 = vector.load %arg21[%c8_61, %c0_62] : memref<48x16xf32, #tpu.memory_space<vmem>>, vector<32x16xf32>
    %78 = arith.addf %77, %76 : vector<32x16xf32>
    %79 = vector.broadcast %6 : vector<32x1xf32> to vector<32x16xf32>
    %80 = arith.mulf %78, %79 : vector<32x16xf32>
    %c8_63 = arith.constant 8 : index
    %c0_64 = arith.constant 0 : index
    %81 = vector.load %arg21[%c8_63, %c0_64] : memref<48x16xf32, #tpu.memory_space<vmem>>, vector<32x16xf32>
    tpu.vector_store %arg21[%c8_63, %c0_64], %80 {strides = array<i32>} : memref<48x16xf32, #tpu.memory_space<vmem>>, vector<32x16xf32>,
    %c1 = arith.constant 1 : index
    %c0_65 = arith.constant 0 : index
    %c0_66 = arith.constant 0 : index
    %82 = vector.load %arg6[%c1, %c0_65, %c0_66] : memref<3x80x16xbf16, #tpu.memory_space<vmem>>, vector<1x80x16xbf16>
    %83 = vector.shape_cast %82 : vector<1x80x16xbf16> to vector<80x16xbf16>
    %c1_67 = arith.constant 1 : index
    %c0_68 = arith.constant 0 : index
    %c0_69 = arith.constant 0 : index
    %84 = vector.load %arg7[%c1_67, %c0_68, %c0_69] : memref<3x80x16xbf16, #tpu.memory_space<vmem>>, vector<1x80x16xbf16>
    %85 = vector.shape_cast %84 : vector<1x80x16xbf16> to vector<80x16xbf16>
    %c4 = arith.constant 4 : index
    %c0_70 = arith.constant 0 : index
    %86 = vector.load %arg21[%c4, %c0_70] : memref<48x16xf32, #tpu.memory_space<vmem>>, vector<32x16xf32>
    %87 = arith.truncf %86 : vector<32x16xf32> to vector<32x16xbf16>
    %c0_71 = arith.constant 0 : index
    %c0_72 = arith.constant 0 : index
    %88 = vector.load %arg23[%c0_71, %c0_72] : memref<32x80xbf16, #tpu.memory_space<vmem>>, vector<32x16xbf16>
    tpu.vector_store %arg23[%c0_71, %c0_72], %87 {strides = array<i32>} : memref<32x80xbf16, #tpu.memory_space<vmem>>, vector<32x16xbf16>,
    %c6_73 = arith.constant 6 : index
    %c0_74 = arith.constant 0 : index
    %89 = vector.load %arg21[%c6_73, %c0_74] : memref<48x16xf32, #tpu.memory_space<vmem>>, vector<32x16xf32>
    %90 = arith.truncf %89 : vector<32x16xf32> to vector<32x16xbf16>
    %c0_75 = arith.constant 0 : index
    %c16_76 = arith.constant 16 : index
    %91 = vector.load %arg23[%c0_75, %c16_76] : memref<32x80xbf16, #tpu.memory_space<vmem>>, vector<32x16xbf16>
    tpu.vector_store %arg23[%c0_75, %c16_76], %90 {strides = array<i32>} : memref<32x80xbf16, #tpu.memory_space<vmem>>, vector<32x16xbf16>,
    %c8_77 = arith.constant 8 : index
    %c0_78 = arith.constant 0 : index
    %92 = vector.load %arg21[%c8_77, %c0_78] : memref<48x16xf32, #tpu.memory_space<vmem>>, vector<32x16xf32>
    %93 = arith.truncf %92 : vector<32x16xf32> to vector<32x16xbf16>
    %c0_79 = arith.constant 0 : index
    %c32_80 = arith.constant 32 : index
    %94 = vector.load %arg23[%c0_79, %c32_80] : memref<32x80xbf16, #tpu.memory_space<vmem>>, vector<32x16xbf16>
    tpu.vector_store %arg23[%c0_79, %c32_80], %93 {strides = array<i32>} : memref<32x80xbf16, #tpu.memory_space<vmem>>, vector<32x16xbf16>,
    %c10_81 = arith.constant 10 : index
    %c0_82 = arith.constant 0 : index
    %95 = vector.load %arg21[%c10_81, %c0_82] : memref<48x16xf32, #tpu.memory_space<vmem>>, vector<32x16xf32>
    %96 = arith.truncf %95 : vector<32x16xf32> to vector<32x16xbf16>
    %c0_83 = arith.constant 0 : index
    %c48_84 = arith.constant 48 : index
    %97 = vector.load %arg23[%c0_83, %c48_84] : memref<32x80xbf16, #tpu.memory_space<vmem>>, vector<32x16xbf16>
    tpu.vector_store %arg23[%c0_83, %c48_84], %96 {strides = array<i32>} : memref<32x80xbf16, #tpu.memory_space<vmem>>, vector<32x16xbf16>,
    %c12 = arith.constant 12 : index
    %c0_85 = arith.constant 0 : index
    %98 = vector.load %arg21[%c12, %c0_85] : memref<48x16xf32, #tpu.memory_space<vmem>>, vector<32x16xf32>
    %99 = arith.truncf %98 : vector<32x16xf32> to vector<32x16xbf16>
    %c0_86 = arith.constant 0 : index
    %c64_87 = arith.constant 64 : index
    %100 = vector.load %arg23[%c0_86, %c64_87] : memref<32x80xbf16, #tpu.memory_space<vmem>>, vector<32x16xbf16>
    tpu.vector_store %arg23[%c0_86, %c64_87], %99 {strides = array<i32>} : memref<32x80xbf16, #tpu.memory_space<vmem>>, vector<32x16xbf16>,
    %c0_88 = arith.constant 0 : index
    %c0_89 = arith.constant 0 : index
    %101 = vector.load %arg23[%c0_88, %c0_89] : memref<32x80xbf16, #tpu.memory_space<vmem>>, vector<32x80xbf16>
    %cst_90 = arith.constant dense<0.000000e+00> : vector<32x16xf32>
    %102 = tpu.matmul %101, %83, %cst_90 {dimension_numbers = #tpu.dot_dimension_numbers<[1], [0], [0], [1], [0, 0, 1, 1], [], []>} : vector<32x80xbf16>, vector<80x16xbf16>, vector<32x16xf32> -> vector<32x16xf32>
    %cst_91 = arith.constant dense<0.000000e+00> : vector<32x16xf32>
    %103 = tpu.matmul %101, %85, %cst_91 {dimension_numbers = #tpu.dot_dimension_numbers<[1], [0], [0], [1], [0, 0, 1, 1], [], []>} : vector<32x80xbf16>, vector<80x16xbf16>, vector<32x16xf32> -> vector<32x16xf32>
    %c1_92 = arith.constant 1 : index
    %c0_93 = arith.constant 0 : index
    %c0_94 = arith.constant 0 : index
    %104 = vector.load %arg8[%c1_92, %c0_93, %c0_94] : memref<3x1x16xf32, #tpu.memory_space<vmem>>, vector<1x1x16xf32>
    %105 = vector.shape_cast %104 : vector<1x1x16xf32> to vector<1x16xf32>
    %106 = vector.broadcast %105 : vector<1x16xf32> to vector<32x16xf32>
    %107 = arith.addf %102, %106 : vector<32x16xf32>
    %c1_95 = arith.constant 1 : index
    %c0_96 = arith.constant 0 : index
    %c0_97 = arith.constant 0 : index
    %108 = vector.load %arg9[%c1_95, %c0_96, %c0_97] : memref<3x1x16xf32, #tpu.memory_space<vmem>>, vector<1x1x16xf32>
    %109 = vector.shape_cast %108 : vector<1x1x16xf32> to vector<1x16xf32>
    %110 = vector.broadcast %109 : vector<1x16xf32> to vector<32x16xf32>
    %111 = arith.addf %103, %110 : vector<32x16xf32>
    %112 = math.tanh %107 : vector<32x16xf32>
    %113 = arith.negf %111 : vector<32x16xf32>
    %114 = math.exp %113 : vector<32x16xf32>
    %cst_98 = arith.constant 1.000000e+00 : f32
    %115 = vector.broadcast %cst_98 : f32 to vector<32x16xf32>
    %116 = arith.addf %115, %114 : vector<32x16xf32>
    %117 = arith.divf %115, %116 : vector<32x16xf32>
    %118 = arith.mulf %112, %117 : vector<32x16xf32>
    %119 = arith.truncf %118 : vector<32x16xf32> to vector<32x16xbf16>
    %c0_99 = arith.constant 0 : index
    %c0_100 = arith.constant 0 : index
    %120 = vector.load %arg22[%c0_99, %c0_100] : memref<32x16xf32, #tpu.memory_space<vmem>>, vector<32x16xf32>
    %c1_101 = arith.constant 1 : index
    %c0_102 = arith.constant 0 : index
    %c0_103 = arith.constant 0 : index
    %121 = vector.load %arg12[%c1_101, %c0_102, %c0_103] : memref<3x16x16xbf16, #tpu.memory_space<vmem>>, vector<1x16x16xbf16>
    %122 = vector.shape_cast %121 : vector<1x16x16xbf16> to vector<16x16xbf16>
    %cst_104 = arith.constant dense<0.000000e+00> : vector<32x16xf32>
    %123 = tpu.matmul %119, %122, %cst_104 {dimension_numbers = #tpu.dot_dimension_numbers<[1], [0], [0], [1], [0, 0, 1, 1], [], []>} : vector<32x16xbf16>, vector<16x16xbf16>, vector<32x16xf32> -> vector<32x16xf32>
    %c1_105 = arith.constant 1 : index
    %c0_106 = arith.constant 0 : index
    %c0_107 = arith.constant 0 : index
    %124 = vector.load %arg13[%c1_105, %c0_106, %c0_107] : memref<3x1x16xf32, #tpu.memory_space<vmem>>, vector<1x1x16xf32>
    %125 = vector.shape_cast %124 : vector<1x1x16xf32> to vector<1x16xf32>
    %126 = vector.broadcast %125 : vector<1x16xf32> to vector<32x16xf32>
    %127 = arith.addf %123, %126 : vector<32x16xf32>
    %128 = arith.addf %120, %127 : vector<32x16xf32>
    %c0_108 = arith.constant 0 : index
    %c0_109 = arith.constant 0 : index
    %129 = vector.load %arg22[%c0_108, %c0_109] : memref<32x16xf32, #tpu.memory_space<vmem>>, vector<32x16xf32>
    tpu.vector_store %arg22[%c0_108, %c0_109], %128 {strides = array<i32>} : memref<32x16xf32, #tpu.memory_space<vmem>>, vector<32x16xf32>,
    %c1_110 = arith.constant 1 : index
    %c0_111 = arith.constant 0 : index
    %c0_112 = arith.constant 0 : index
    %130 = vector.load %arg10[%c1_110, %c0_111, %c0_112] : memref<2x16x16xbf16, #tpu.memory_space<vmem>>, vector<1x16x16xbf16>
    %131 = vector.shape_cast %130 : vector<1x16x16xbf16> to vector<16x16xbf16>
    %cst_113 = arith.constant dense<0.000000e+00> : vector<32x16xf32>
    %132 = tpu.matmul %119, %131, %cst_113 {dimension_numbers = #tpu.dot_dimension_numbers<[1], [0], [0], [1], [0, 0, 1, 1], [], []>} : vector<32x16xbf16>, vector<16x16xbf16>, vector<32x16xf32> -> vector<32x16xf32>
    %c1_114 = arith.constant 1 : index
    %c0_115 = arith.constant 0 : index
    %c0_116 = arith.constant 0 : index
    %133 = vector.load %arg11[%c1_114, %c0_115, %c0_116] : memref<2x1x16xf32, #tpu.memory_space<vmem>>, vector<1x1x16xf32>
    %134 = vector.shape_cast %133 : vector<1x1x16xf32> to vector<1x16xf32>
    %135 = vector.broadcast %134 : vector<1x16xf32> to vector<32x16xf32>
    %136 = arith.addf %132, %135 : vector<32x16xf32>
    %c8_117 = arith.constant 8 : index
    %c0_118 = arith.constant 0 : index
    %137 = vector.load %arg21[%c8_117, %c0_118] : memref<48x16xf32, #tpu.memory_space<vmem>>, vector<32x16xf32>
    %138 = arith.addf %137, %136 : vector<32x16xf32>
    %139 = vector.broadcast %6 : vector<32x1xf32> to vector<32x16xf32>
    %140 = arith.mulf %138, %139 : vector<32x16xf32>
    %c8_119 = arith.constant 8 : index
    %c0_120 = arith.constant 0 : index
    %141 = vector.load %arg21[%c8_119, %c0_120] : memref<48x16xf32, #tpu.memory_space<vmem>>, vector<32x16xf32>
    tpu.vector_store %arg21[%c8_119, %c0_120], %140 {strides = array<i32>} : memref<48x16xf32, #tpu.memory_space<vmem>>, vector<32x16xf32>,
    %c2 = arith.constant 2 : index
    %c0_121 = arith.constant 0 : index
    %c0_122 = arith.constant 0 : index
    %142 = vector.load %arg6[%c2, %c0_121, %c0_122] : memref<3x80x16xbf16, #tpu.memory_space<vmem>>, vector<1x80x16xbf16>
    %143 = vector.shape_cast %142 : vector<1x80x16xbf16> to vector<80x16xbf16>
    %c2_123 = arith.constant 2 : index
    %c0_124 = arith.constant 0 : index
    %c0_125 = arith.constant 0 : index
    %144 = vector.load %arg7[%c2_123, %c0_124, %c0_125] : memref<3x80x16xbf16, #tpu.memory_space<vmem>>, vector<1x80x16xbf16>
    %145 = vector.shape_cast %144 : vector<1x80x16xbf16> to vector<80x16xbf16>
    %c0_126 = arith.constant 0 : index
    %c0_127 = arith.constant 0 : index
    %146 = vector.load %arg21[%c0_126, %c0_127] : memref<48x16xf32, #tpu.memory_space<vmem>>, vector<32x16xf32>
    %147 = arith.truncf %146 : vector<32x16xf32> to vector<32x16xbf16>
    %c0_128 = arith.constant 0 : index
    %c0_129 = arith.constant 0 : index
    %148 = vector.load %arg23[%c0_128, %c0_129] : memref<32x80xbf16, #tpu.memory_space<vmem>>, vector<32x16xbf16>
    tpu.vector_store %arg23[%c0_128, %c0_129], %147 {strides = array<i32>} : memref<32x80xbf16, #tpu.memory_space<vmem>>, vector<32x16xbf16>,
    %c4_130 = arith.constant 4 : index
    %c0_131 = arith.constant 0 : index
    %149 = vector.load %arg21[%c4_130, %c0_131] : memref<48x16xf32, #tpu.memory_space<vmem>>, vector<32x16xf32>
    %150 = arith.truncf %149 : vector<32x16xf32> to vector<32x16xbf16>
    %c0_132 = arith.constant 0 : index
    %c16_133 = arith.constant 16 : index
    %151 = vector.load %arg23[%c0_132, %c16_133] : memref<32x80xbf16, #tpu.memory_space<vmem>>, vector<32x16xbf16>
    tpu.vector_store %arg23[%c0_132, %c16_133], %150 {strides = array<i32>} : memref<32x80xbf16, #tpu.memory_space<vmem>>, vector<32x16xbf16>,
    %c8_134 = arith.constant 8 : index
    %c0_135 = arith.constant 0 : index
    %152 = vector.load %arg21[%c8_134, %c0_135] : memref<48x16xf32, #tpu.memory_space<vmem>>, vector<32x16xf32>
    %153 = arith.truncf %152 : vector<32x16xf32> to vector<32x16xbf16>
    %c0_136 = arith.constant 0 : index
    %c32_137 = arith.constant 32 : index
    %154 = vector.load %arg23[%c0_136, %c32_137] : memref<32x80xbf16, #tpu.memory_space<vmem>>, vector<32x16xbf16>
    tpu.vector_store %arg23[%c0_136, %c32_137], %153 {strides = array<i32>} : memref<32x80xbf16, #tpu.memory_space<vmem>>, vector<32x16xbf16>,
    %c12_138 = arith.constant 12 : index
    %c0_139 = arith.constant 0 : index
    %155 = vector.load %arg21[%c12_138, %c0_139] : memref<48x16xf32, #tpu.memory_space<vmem>>, vector<32x16xf32>
    %156 = arith.truncf %155 : vector<32x16xf32> to vector<32x16xbf16>
    %c0_140 = arith.constant 0 : index
    %c48_141 = arith.constant 48 : index
    %157 = vector.load %arg23[%c0_140, %c48_141] : memref<32x80xbf16, #tpu.memory_space<vmem>>, vector<32x16xbf16>
    tpu.vector_store %arg23[%c0_140, %c48_141], %156 {strides = array<i32>} : memref<32x80xbf16, #tpu.memory_space<vmem>>, vector<32x16xbf16>,
    %c16_142 = arith.constant 16 : index
    %c0_143 = arith.constant 0 : index
    %158 = vector.load %arg21[%c16_142, %c0_143] : memref<48x16xf32, #tpu.memory_space<vmem>>, vector<32x16xf32>
    %159 = arith.truncf %158 : vector<32x16xf32> to vector<32x16xbf16>
    %c0_144 = arith.constant 0 : index
    %c64_145 = arith.constant 64 : index
    %160 = vector.load %arg23[%c0_144, %c64_145] : memref<32x80xbf16, #tpu.memory_space<vmem>>, vector<32x16xbf16>
    tpu.vector_store %arg23[%c0_144, %c64_145], %159 {strides = array<i32>} : memref<32x80xbf16, #tpu.memory_space<vmem>>, vector<32x16xbf16>,
    %c0_146 = arith.constant 0 : index
    %c0_147 = arith.constant 0 : index
    %161 = vector.load %arg23[%c0_146, %c0_147] : memref<32x80xbf16, #tpu.memory_space<vmem>>, vector<32x80xbf16>
    %cst_148 = arith.constant dense<0.000000e+00> : vector<32x16xf32>
    %162 = tpu.matmul %161, %143, %cst_148 {dimension_numbers = #tpu.dot_dimension_numbers<[1], [0], [0], [1], [0, 0, 1, 1], [], []>} : vector<32x80xbf16>, vector<80x16xbf16>, vector<32x16xf32> -> vector<32x16xf32>
    %cst_149 = arith.constant dense<0.000000e+00> : vector<32x16xf32>
    %163 = tpu.matmul %161, %145, %cst_149 {dimension_numbers = #tpu.dot_dimension_numbers<[1], [0], [0], [1], [0, 0, 1, 1], [], []>} : vector<32x80xbf16>, vector<80x16xbf16>, vector<32x16xf32> -> vector<32x16xf32>
    %c2_150 = arith.constant 2 : index
    %c0_151 = arith.constant 0 : index
    %c0_152 = arith.constant 0 : index
    %164 = vector.load %arg8[%c2_150, %c0_151, %c0_152] : memref<3x1x16xf32, #tpu.memory_space<vmem>>, vector<1x1x16xf32>
    %165 = vector.shape_cast %164 : vector<1x1x16xf32> to vector<1x16xf32>
    %166 = vector.broadcast %165 : vector<1x16xf32> to vector<32x16xf32>
    %167 = arith.addf %162, %166 : vector<32x16xf32>
    %c2_153 = arith.constant 2 : index
    %c0_154 = arith.constant 0 : index
    %c0_155 = arith.constant 0 : index
    %168 = vector.load %arg9[%c2_153, %c0_154, %c0_155] : memref<3x1x16xf32, #tpu.memory_space<vmem>>, vector<1x1x16xf32>
    %169 = vector.shape_cast %168 : vector<1x1x16xf32> to vector<1x16xf32>
    %170 = vector.broadcast %169 : vector<1x16xf32> to vector<32x16xf32>
    %171 = arith.addf %163, %170 : vector<32x16xf32>
    %172 = math.tanh %167 : vector<32x16xf32>
    %173 = arith.negf %171 : vector<32x16xf32>
    %174 = math.exp %173 : vector<32x16xf32>
    %cst_156 = arith.constant 1.000000e+00 : f32
    %175 = vector.broadcast %cst_156 : f32 to vector<32x16xf32>
    %176 = arith.addf %175, %174 : vector<32x16xf32>
    %177 = arith.divf %175, %176 : vector<32x16xf32>
    %178 = arith.mulf %172, %177 : vector<32x16xf32>
    %179 = arith.truncf %178 : vector<32x16xf32> to vector<32x16xbf16>
    %c0_157 = arith.constant 0 : index
    %c0_158 = arith.constant 0 : index
    %180 = vector.load %arg22[%c0_157, %c0_158] : memref<32x16xf32, #tpu.memory_space<vmem>>, vector<32x16xf32>
    %c2_159 = arith.constant 2 : index
    %c0_160 = arith.constant 0 : index
    %c0_161 = arith.constant 0 : index
    %181 = vector.load %arg12[%c2_159, %c0_160, %c0_161] : memref<3x16x16xbf16, #tpu.memory_space<vmem>>, vector<1x16x16xbf16>
    %182 = vector.shape_cast %181 : vector<1x16x16xbf16> to vector<16x16xbf16>
    %cst_162 = arith.constant dense<0.000000e+00> : vector<32x16xf32>
    %183 = tpu.matmul %179, %182, %cst_162 {dimension_numbers = #tpu.dot_dimension_numbers<[1], [0], [0], [1], [0, 0, 1, 1], [], []>} : vector<32x16xbf16>, vector<16x16xbf16>, vector<32x16xf32> -> vector<32x16xf32>
    %c2_163 = arith.constant 2 : index
    %c0_164 = arith.constant 0 : index
    %c0_165 = arith.constant 0 : index
    %184 = vector.load %arg13[%c2_163, %c0_164, %c0_165] : memref<3x1x16xf32, #tpu.memory_space<vmem>>, vector<1x1x16xf32>
    %185 = vector.shape_cast %184 : vector<1x1x16xf32> to vector<1x16xf32>
    %186 = vector.broadcast %185 : vector<1x16xf32> to vector<32x16xf32>
    %187 = arith.addf %183, %186 : vector<32x16xf32>
    %188 = arith.addf %180, %187 : vector<32x16xf32>
    %c0_166 = arith.constant 0 : index
    %c0_167 = arith.constant 0 : index
    %189 = vector.load %arg22[%c0_166, %c0_167] : memref<32x16xf32, #tpu.memory_space<vmem>>, vector<32x16xf32>
    tpu.vector_store %arg22[%c0_166, %c0_167], %188 {strides = array<i32>} : memref<32x16xf32, #tpu.memory_space<vmem>>, vector<32x16xf32>,
    %c0_168 = arith.constant 0 : index
    %c0_169 = arith.constant 0 : index
    %190 = vector.load %arg22[%c0_168, %c0_169] : memref<32x16xf32, #tpu.memory_space<vmem>>, vector<32x16xf32>
    %191 = vector.broadcast %6 : vector<32x1xf32> to vector<32x16xf32>
    %192 = arith.mulf %190, %191 : vector<32x16xf32>
    %193 = arith.truncf %192 : vector<32x16xf32> to vector<32x16xbf16>
    %c0_170 = arith.constant 0 : index
    %c0_171 = arith.constant 0 : index
    %194 = vector.load %arg14[%c0_170, %c0_171] : memref<16x128xbf16, #tpu.memory_space<vmem>>, vector<16x128xbf16>
    %cst_172 = arith.constant dense<0.000000e+00> : vector<32x128xf32>
    %195 = tpu.matmul %193, %194, %cst_172 {dimension_numbers = #tpu.dot_dimension_numbers<[1], [0], [0], [1], [0, 0, 1, 1], [], []>} : vector<32x16xbf16>, vector<16x128xbf16>, vector<32x128xf32> -> vector<32x128xf32>
    %c0_173 = arith.constant 0 : index
    %c0_174 = arith.constant 0 : index
    %196 = vector.load %arg15[%c0_173, %c0_174] : memref<1x128xf32, #tpu.memory_space<vmem>>, vector<1x128xf32>
    %197 = vector.broadcast %196 : vector<1x128xf32> to vector<32x128xf32>
    %198 = arith.addf %195, %197 : vector<32x128xf32>
    %199 = vector.broadcast %6 : vector<32x1xf32> to vector<32x128xf32>
    %200 = arith.mulf %198, %199 : vector<32x128xf32>
    %c0_175 = arith.constant 0 : index
    %c0_176 = arith.constant 0 : index
    %201 = vector.load %arg16[%c0_175, %c0_176] : memref<16x128xbf16, #tpu.memory_space<vmem>>, vector<16x128xbf16>
    %cst_177 = arith.constant dense<0.000000e+00> : vector<32x128xf32>
    %202 = tpu.matmul %193, %201, %cst_177 {dimension_numbers = #tpu.dot_dimension_numbers<[1], [0], [0], [1], [0, 0, 1, 1], [], []>} : vector<32x16xbf16>, vector<16x128xbf16>, vector<32x128xf32> -> vector<32x128xf32>
    %c0_178 = arith.constant 0 : index
    %c0_179 = arith.constant 0 : index
    %203 = vector.load %arg17[%c0_178, %c0_179] : memref<1x128xf32, #tpu.memory_space<vmem>>, vector<1x128xf32>
    %204 = vector.broadcast %203 : vector<1x128xf32> to vector<32x128xf32>
    %205 = arith.addf %202, %204 : vector<32x128xf32>
    %206 = vector.broadcast %6 : vector<32x1xf32> to vector<32x128xf32>
    %207 = arith.mulf %205, %206 : vector<32x128xf32>
    %c0_180 = arith.constant 0 : index
    %c0_181 = arith.constant 0 : index
    %c0_182 = arith.constant 0 : index
    %208 = vector.load %arg3[%c0_180, %c0_181, %c0_182] : memref<1x32x128xf32, #tpu.memory_space<vmem>>, vector<1x32x128xf32>
    %209 = vector.shape_cast %208 : vector<1x32x128xf32> to vector<32x128xf32>
    %210 = math.exp %207 : vector<32x128xf32>
    %cst_183 = arith.constant 1.000000e+00 : f32
    %211 = vector.broadcast %cst_183 : f32 to vector<32x128xf32>
    %212 = arith.mulf %211, %210 : vector<32x128xf32>
    %213 = arith.mulf %209, %212 : vector<32x128xf32>
    %214 = arith.addf %200, %213 : vector<32x128xf32>
    %215 = vector.broadcast %6 : vector<32x1xf32> to vector<32x128xf32>
    %216 = arith.mulf %214, %215 : vector<32x128xf32>
    %c0_184 = arith.constant 0 : index
    %c0_185 = arith.constant 0 : index
    %c0_186 = arith.constant 0 : index
    %217 = vector.load %arg18[%c0_184, %c0_185, %c0_186] : memref<1x32x128xf32, #tpu.memory_space<vmem>>, vector<1x32x128xf32>
    %218 = vector.shape_cast %217 : vector<1x32x128xf32> to vector<32x128xf32>
    %219 = vector.shape_cast %216 : vector<32x128xf32> to vector<1x32x128xf32>
    tpu.vector_store %arg18[%c0_184, %c0_185, %c0_186], %219 {strides = array<i32>} : memref<1x32x128xf32, #tpu.memory_space<vmem>>, vector<1x32x128xf32>,
    %c0_187 = arith.constant 0 : index
    %c0_188 = arith.constant 0 : index
    %c0_189 = arith.constant 0 : index
    %220 = vector.load %arg19[%c0_187, %c0_188, %c0_189] : memref<1x32x128xf32, #tpu.memory_space<vmem>>, vector<1x32x128xf32>
    %221 = vector.shape_cast %220 : vector<1x32x128xf32> to vector<32x128xf32>
    %222 = vector.shape_cast %200 : vector<32x128xf32> to vector<1x32x128xf32>
    tpu.vector_store %arg19[%c0_187, %c0_188, %c0_189], %222 {strides = array<i32>} : memref<1x32x128xf32, #tpu.memory_space<vmem>>, vector<1x32x128xf32>,
    %c0_190 = arith.constant 0 : index
    %c0_191 = arith.constant 0 : index
    %c0_192 = arith.constant 0 : index
    %223 = vector.load %arg20[%c0_190, %c0_191, %c0_192] : memref<1x32x128xf32, #tpu.memory_space<vmem>>, vector<1x32x128xf32>
    %224 = vector.shape_cast %223 : vector<1x32x128xf32> to vector<32x128xf32>
    %225 = vector.shape_cast %207 : vector<32x128xf32> to vector<1x32x128xf32>
    tpu.vector_store %arg20[%c0_190, %c0_191, %c0_192], %225 {strides = array<i32>} : memref<1x32x128xf32, #tpu.memory_space<vmem>>, vector<1x32x128xf32>,
    return
  }
  func.func @transform_0(%arg0: i32, %arg1: memref<2xi32, #tpu.memory_space<smem>>) -> (i32, i32, i32) {
    %c0_i32 = arith.constant 0 : i32
    %c0_i32_0 = arith.constant 0 : i32
    %c0_i32_1 = arith.constant 0 : i32
    return %arg0, %c0_i32, %c0_i32_0 : i32, i32, i32
  }
  func.func @transform_1(%arg0: i32, %arg1: memref<2xi32, #tpu.memory_space<smem>>) -> (i32, i32, i32) {
    %c0_i32 = arith.constant 0 : i32
    %c0_i32_0 = arith.constant 0 : i32
    %c0_i32_1 = arith.constant 0 : i32
    return %arg0, %c0_i32, %c0_i32_0 : i32, i32, i32
  }
  func.func @transform_2(%arg0: i32, %arg1: memref<2xi32, #tpu.memory_space<smem>>) -> (i32, i32) {
    %c0_i32 = arith.constant 0 : i32
    %c0_i32_0 = arith.constant 0 : i32
    %c0_i32_1 = arith.constant 0 : i32
    return %c0_i32, %c0_i32_0 : i32, i32
  }
  func.func @transform_3(%arg0: i32, %arg1: memref<2xi32, #tpu.memory_space<smem>>) -> (i32, i32) {
    %c0_i32 = arith.constant 0 : i32
    %c0_i32_0 = arith.constant 0 : i32
    %c0_i32_1 = arith.constant 0 : i32
    return %c0_i32, %c0_i32_0 : i32, i32
  }
  func.func @transform_4(%arg0: i32, %arg1: memref<2xi32, #tpu.memory_space<smem>>) -> (i32, i32, i32) {
    %c0_i32 = arith.constant 0 : i32
    %c0_i32_0 = arith.constant 0 : i32
    %c0_i32_1 = arith.constant 0 : i32
    %c0_i32_2 = arith.constant 0 : i32
    return %c0_i32, %c0_i32_0, %c0_i32_1 : i32, i32, i32
  }
  func.func @transform_5(%arg0: i32, %arg1: memref<2xi32, #tpu.memory_space<smem>>) -> (i32, i32, i32) {
    %c0_i32 = arith.constant 0 : i32
    %c0_i32_0 = arith.constant 0 : i32
    %c0_i32_1 = arith.constant 0 : i32
    %c0_i32_2 = arith.constant 0 : i32
    return %c0_i32, %c0_i32_0, %c0_i32_1 : i32, i32, i32
  }
  func.func @transform_6(%arg0: i32, %arg1: memref<2xi32, #tpu.memory_space<smem>>) -> (i32, i32, i32) {
    %c0_i32 = arith.constant 0 : i32
    %c0_i32_0 = arith.constant 0 : i32
    %c0_i32_1 = arith.constant 0 : i32
    %c0_i32_2 = arith.constant 0 : i32
    return %c0_i32, %c0_i32_0, %c0_i32_1 : i32, i32, i32
  }
  func.func @transform_7(%arg0: i32, %arg1: memref<2xi32, #tpu.memory_space<smem>>) -> (i32, i32, i32) {
    %c0_i32 = arith.constant 0 : i32
    %c0_i32_0 = arith.constant 0 : i32
    %c0_i32_1 = arith.constant 0 : i32
    %c0_i32_2 = arith.constant 0 : i32
    return %c0_i32, %c0_i32_0, %c0_i32_1 : i32, i32, i32
  }
  func.func @transform_8(%arg0: i32, %arg1: memref<2xi32, #tpu.memory_space<smem>>) -> (i32, i32, i32) {
    %c0_i32 = arith.constant 0 : i32
    %c0_i32_0 = arith.constant 0 : i32
    %c0_i32_1 = arith.constant 0 : i32
    %c0_i32_2 = arith.constant 0 : i32
    return %c0_i32, %c0_i32_0, %c0_i32_1 : i32, i32, i32
  }
  func.func @transform_9(%arg0: i32, %arg1: memref<2xi32, #tpu.memory_space<smem>>) -> (i32, i32, i32) {
    %c0_i32 = arith.constant 0 : i32
    %c0_i32_0 = arith.constant 0 : i32
    %c0_i32_1 = arith.constant 0 : i32
    %c0_i32_2 = arith.constant 0 : i32
    return %c0_i32, %c0_i32_0, %c0_i32_1 : i32, i32, i32
  }
  func.func @transform_10(%arg0: i32, %arg1: memref<2xi32, #tpu.memory_space<smem>>) -> (i32, i32, i32) {
    %c0_i32 = arith.constant 0 : i32
    %c0_i32_0 = arith.constant 0 : i32
    %c0_i32_1 = arith.constant 0 : i32
    %c0_i32_2 = arith.constant 0 : i32
    return %c0_i32, %c0_i32_0, %c0_i32_1 : i32, i32, i32
  }
  func.func @transform_11(%arg0: i32, %arg1: memref<2xi32, #tpu.memory_space<smem>>) -> (i32, i32, i32) {
    %c0_i32 = arith.constant 0 : i32
    %c0_i32_0 = arith.constant 0 : i32
    %c0_i32_1 = arith.constant 0 : i32
    %c0_i32_2 = arith.constant 0 : i32
    return %c0_i32, %c0_i32_0, %c0_i32_1 : i32, i32, i32
  }
  func.func @transform_12(%arg0: i32, %arg1: memref<2xi32, #tpu.memory_space<smem>>) -> (i32, i32) {
    %c0_i32 = arith.constant 0 : i32
    %c0_i32_0 = arith.constant 0 : i32
    %c0_i32_1 = arith.constant 0 : i32
    return %c0_i32, %c0_i32_0 : i32, i32
  }
  func.func @transform_13(%arg0: i32, %arg1: memref<2xi32, #tpu.memory_space<smem>>) -> (i32, i32) {
    %c0_i32 = arith.constant 0 : i32
    %c0_i32_0 = arith.constant 0 : i32
    %c0_i32_1 = arith.constant 0 : i32
    return %c0_i32, %c0_i32_0 : i32, i32
  }
  func.func @transform_14(%arg0: i32, %arg1: memref<2xi32, #tpu.memory_space<smem>>) -> (i32, i32) {
    %c0_i32 = arith.constant 0 : i32
    %c0_i32_0 = arith.constant 0 : i32
    %c0_i32_1 = arith.constant 0 : i32
    return %c0_i32, %c0_i32_0 : i32, i32
  }
  func.func @transform_15(%arg0: i32, %arg1: memref<2xi32, #tpu.memory_space<smem>>) -> (i32, i32) {
    %c0_i32 = arith.constant 0 : i32
    %c0_i32_0 = arith.constant 0 : i32
    %c0_i32_1 = arith.constant 0 : i32
    return %c0_i32, %c0_i32_0 : i32, i32
  }
  func.func @transform_16(%arg0: i32, %arg1: memref<2xi32, #tpu.memory_space<smem>>) -> (i32, i32, i32) {
    %c0_i32 = arith.constant 0 : i32
    %c0_i32_0 = arith.constant 0 : i32
    %c0_i32_1 = arith.constant 0 : i32
    return %arg0, %c0_i32, %c0_i32_0 : i32, i32, i32
  }
  func.func @transform_17(%arg0: i32, %arg1: memref<2xi32, #tpu.memory_space<smem>>) -> (i32, i32, i32) {
    %c0_i32 = arith.constant 0 : i32
    %c0_i32_0 = arith.constant 0 : i32
    %c0_i32_1 = arith.constant 0 : i32
    return %arg0, %c0_i32, %c0_i32_0 : i32, i32, i32
  }
  func.func @transform_18(%arg0: i32, %arg1: memref<2xi32, #tpu.memory_space<smem>>) -> (i32, i32, i32) {
    %c0_i32 = arith.constant 0 : i32
    %c0_i32_0 = arith.constant 0 : i32
    %c0_i32_1 = arith.constant 0 : i32
    return %arg0, %c0_i32, %c0_i32_0 : i32, i32, i32
  }
}

module attributes {stable_mosaic.version = 11 : i64} {
  func.func @_posterior_encoder_kernel(%arg0: i32, %arg1: memref<2xi32, #tpu.memory_space<smem>>, %arg2: memref<1x32x8xbf16, #tpu.memory_space<vmem>>, %arg3: memref<1x32x128xf32, #tpu.memory_space<vmem>>, %arg4: memref<8x16xbf16, #tpu.memory_space<vmem>>, %arg5: memref<1x16xf32, #tpu.memory_space<vmem>>, %arg6: memref<3x80x16xbf16, #tpu.memory_space<vmem>>, %arg7: memref<3x80x16xbf16, #tpu.memory_space<vmem>>, %arg8: memref<3x1x16xf32, #tpu.memory_space<vmem>>, %arg9: memref<3x1x16xf32, #tpu.memory_space<vmem>>, %arg10: memref<2x16x16xbf16, #tpu.memory_space<vmem>>, %arg11: memref<2x1x16xf32, #tpu.memory_space<vmem>>, %arg12: memref<3x16x16xbf16, #tpu.memory_space<vmem>>, %arg13: memref<3x1x16xf32, #tpu.memory_space<vmem>>, %arg14: memref<16x128xbf16, #tpu.memory_space<vmem>>, %arg15: memref<1x128xf32, #tpu.memory_space<vmem>>, %arg16: memref<16x128xbf16, #tpu.memory_space<vmem>>, %arg17: memref<1x128xf32, #tpu.memory_space<vmem>>, %arg18: memref<1x32x128xf32, #tpu.memory_space<vmem>>, %arg19: memref<1x32x128xf32, #tpu.memory_space<vmem>>, %arg20: memref<1x32x128xf32, #tpu.memory_space<vmem>>, %arg21: memref<48x16xf32, #tpu.memory_space<vmem>>, %arg22: memref<32x16xf32, #tpu.memory_space<vmem>>, %arg23: memref<32x80xbf16, #tpu.memory_space<vmem>>) attributes {dimension_semantics = [#tpu.dimension_semantics<parallel>], iteration_bounds = array<i64: 2>, scalar_prefetch = 1 : i64, scratch_operands = 3 : i64, tpu.core_type = #tpu.core_type<tc>, window_params = [{transform_indices = @transform_0, window_bounds = array<i64: 1, 32, 8>}, {transform_indices = @transform_1, window_bounds = array<i64: 1, 32, 128>}, {pipeline_mode = #tpu.pipeline_mode<synchronous>, transform_indices = @transform_2, window_bounds = array<i64: 8, 16>}, {pipeline_mode = #tpu.pipeline_mode<synchronous>, transform_indices = @transform_3, window_bounds = array<i64: 1, 16>}, {pipeline_mode = #tpu.pipeline_mode<synchronous>, transform_indices = @transform_4, window_bounds = array<i64: 3, 80, 16>}, {pipeline_mode = #tpu.pipeline_mode<synchronous>, transform_indices = @transform_5, window_bounds = array<i64: 3, 80, 16>}, {pipeline_mode = #tpu.pipeline_mode<synchronous>, transform_indices = @transform_6, window_bounds = array<i64: 3, 1, 16>}, {pipeline_mode = #tpu.pipeline_mode<synchronous>, transform_indices = @transform_7, window_bounds = array<i64: 3, 1, 16>}, {pipeline_mode = #tpu.pipeline_mode<synchronous>, transform_indices = @transform_8, window_bounds = array<i64: 2, 16, 16>}, {pipeline_mode = #tpu.pipeline_mode<synchronous>, transform_indices = @transform_9, window_bounds = array<i64: 2, 1, 16>}, {pipeline_mode = #tpu.pipeline_mode<synchronous>, transform_indices = @transform_10, window_bounds = array<i64: 3, 16, 16>}, {pipeline_mode = #tpu.pipeline_mode<synchronous>, transform_indices = @transform_11, window_bounds = array<i64: 3, 1, 16>}, {pipeline_mode = #tpu.pipeline_mode<synchronous>, transform_indices = @transform_12, window_bounds = array<i64: 16, 128>}, {pipeline_mode = #tpu.pipeline_mode<synchronous>, transform_indices = @transform_13, window_bounds = array<i64: 1, 128>}, {pipeline_mode = #tpu.pipeline_mode<synchronous>, transform_indices = @transform_14, window_bounds = array<i64: 16, 128>}, {pipeline_mode = #tpu.pipeline_mode<synchronous>, transform_indices = @transform_15, window_bounds = array<i64: 1, 128>}, {transform_indices = @transform_16, window_bounds = array<i64: 1, 32, 128>}, {transform_indices = @transform_17, window_bounds = array<i64: 1, 32, 128>}, {transform_indices = @transform_18, window_bounds = array<i64: 1, 32, 128>}]} {
    %0 = tpu.iota {dimensions = array<i32: 0>} : vector<32x1xi32>
    %1 = arith.index_cast %arg0 : i32 to index
    %2 = memref.load %arg1[%1] : memref<2xi32, #tpu.memory_space<smem>>
    %3 = vector.broadcast %2 : i32 to vector<32x1xi32>
    %4 = arith.cmpi slt, %0, %3 : vector<32x1xi32>
    %5 = arith.extui %4 : vector<32x1xi1> to vector<32x1xi32>
    %6 = arith.sitofp %5 : vector<32x1xi32> to vector<32x1xf32>
    %c0 = arith.constant 0 : index
    %c0_0 = arith.constant 0 : index
    %c0_1 = arith.constant 0 : index
    %7 = vector.load %arg2[%c0, %c0_0, %c0_1] : memref<1x32x8xbf16, #tpu.memory_space<vmem>>, vector<1x32x8xbf16>
    %8 = vector.shape_cast %7 : vector<1x32x8xbf16> to vector<32x8xbf16>
    %c0_2 = arith.constant 0 : index
    %c0_3 = arith.constant 0 : index
    %9 = vector.load %arg4[%c0_2, %c0_3] : memref<8x16xbf16, #tpu.memory_space<vmem>>, vector<8x16xbf16>
    %cst = arith.constant dense<0.000000e+00> : vector<32x16xf32>
    %10 = tpu.matmul %8, %9, %cst {dimension_numbers = #tpu.dot_dimension_numbers<[1], [0], [0], [1], [0, 0, 1, 1], [], []>} : vector<32x8xbf16>, vector<8x16xbf16>, vector<32x16xf32> -> vector<32x16xf32>
    %c0_4 = arith.constant 0 : index
    %c0_5 = arith.constant 0 : index
    %11 = vector.load %arg5[%c0_4, %c0_5] : memref<1x16xf32, #tpu.memory_space<vmem>>, vector<1x16xf32>
    %12 = vector.broadcast %11 : vector<1x16xf32> to vector<32x16xf32>
    %13 = arith.addf %10, %12 : vector<32x16xf32>
    %14 = vector.broadcast %6 : vector<32x1xf32> to vector<32x16xf32>
    %15 = arith.mulf %13, %14 : vector<32x16xf32>
    %cst_6 = arith.constant 0.000000e+00 : f32
    %16 = vector.broadcast %cst_6 : f32 to vector<8x16xf32>
    %c0_7 = arith.constant 0 : index
    %c0_8 = arith.constant 0 : index
    %17 = vector.load %arg21[%c0_7, %c0_8] : memref<48x16xf32, #tpu.memory_space<vmem>>, vector<8x16xf32>
    tpu.vector_store %arg21[%c0_7, %c0_8], %16 {strides = array<i32>} : memref<48x16xf32, #tpu.memory_space<vmem>>, vector<8x16xf32>,
    %c40 = arith.constant 40 : index
    %c0_9 = arith.constant 0 : index
    %18 = vector.load %arg21[%c40, %c0_9] : memref<48x16xf32, #tpu.memory_space<vmem>>, vector<8x16xf32>
    tpu.vector_store %arg21[%c40, %c0_9], %16 {strides = array<i32>} : memref<48x16xf32, #tpu.memory_space<vmem>>, vector<8x16xf32>,
    %c8 = arith.constant 8 : index
    %c0_10 = arith.constant 0 : index
    %19 = vector.load %arg21[%c8, %c0_10] : memref<48x16xf32, #tpu.memory_space<vmem>>, vector<32x16xf32>
    tpu.vector_store %arg21[%c8, %c0_10], %15 {strides = array<i32>} : memref<48x16xf32, #tpu.memory_space<vmem>>, vector<32x16xf32>,
    %cst_11 = arith.constant 0.000000e+00 : f32
    %20 = vector.broadcast %cst_11 : f32 to vector<32x16xf32>
    %c0_12 = arith.constant 0 : index
    %c0_13 = arith.constant 0 : index
    %21 = vector.load %arg22[%c0_12, %c0_13] : memref<32x16xf32, #tpu.memory_space<vmem>>, vector<32x16xf32>
    tpu.vector_store %arg22[%c0_12, %c0_13], %20 {strides = array<i32>} : memref<32x16xf32, #tpu.memory_space<vmem>>, vector<32x16xf32>,
    %c0_14 = arith.constant 0 : index
    %c0_15 = arith.constant 0 : index
    %c0_16 = arith.constant 0 : index
    %22 = vector.load %arg6[%c0_14, %c0_15, %c0_16] : memref<3x80x16xbf16, #tpu.memory_space<vmem>>, vector<1x80x16xbf16>
    %23 = vector.shape_cast %22 : vector<1x80x16xbf16> to vector<80x16xbf16>
    %c0_17 = arith.constant 0 : index
    %c0_18 = arith.constant 0 : index
    %c0_19 = arith.constant 0 : index
    %24 = vector.load %arg7[%c0_17, %c0_18, %c0_19] : memref<3x80x16xbf16, #tpu.memory_space<vmem>>, vector<1x80x16xbf16>
    %25 = vector.shape_cast %24 : vector<1x80x16xbf16> to vector<80x16xbf16>
    %c6 = arith.constant 6 : index
    %c0_20 = arith.constant 0 : index
    %26 = vector.load %arg21[%c6, %c0_20] : memref<48x16xf32, #tpu.memory_space<vmem>>, vector<32x16xf32>
    %27 = arith.truncf %26 : vector<32x16xf32> to vector<32x16xbf16>
    %c0_21 = arith.constant 0 : index
    %c0_22 = arith.constant 0 : index
    %28 = vector.load %arg23[%c0_21, %c0_22] : memref<32x80xbf16, #tpu.memory_space<vmem>>, vector<32x16xbf16>
    tpu.vector_store %arg23[%c0_21, %c0_22], %27 {strides = array<i32>} : memref<32x80xbf16, #tpu.memory_space<vmem>>, vector<32x16xbf16>,
    %c7 = arith.constant 7 : index
    %c0_23 = arith.constant 0 : index
    %29 = vector.load %arg21[%c7, %c0_23] : memref<48x16xf32, #tpu.memory_space<vmem>>, vector<32x16xf32>
    %30 = arith.truncf %29 : vector<32x16xf32> to vector<32x16xbf16>
    %c0_24 = arith.constant 0 : index
    %c16 = arith.constant 16 : index
    %31 = vector.load %arg23[%c0_24, %c16] : memref<32x80xbf16, #tpu.memory_space<vmem>>, vector<32x16xbf16>
    tpu.vector_store %arg23[%c0_24, %c16], %30 {strides = array<i32>} : memref<32x80xbf16, #tpu.memory_space<vmem>>, vector<32x16xbf16>,
    %c8_25 = arith.constant 8 : index
    %c0_26 = arith.constant 0 : index
    %32 = vector.load %arg21[%c8_25, %c0_26] : memref<48x16xf32, #tpu.memory_space<vmem>>, vector<32x16xf32>
    %33 = arith.truncf %32 : vector<32x16xf32> to vector<32x16xbf16>
    %c0_27 = arith.constant 0 : index
    %c32 = arith.constant 32 : index
    %34 = vector.load %arg23[%c0_27, %c32] : memref<32x80xbf16, #tpu.memory_space<vmem>>, vector<32x16xbf16>
    tpu.vector_store %arg23[%c0_27, %c32], %33 {strides = array<i32>} : memref<32x80xbf16, #tpu.memory_space<vmem>>, vector<32x16xbf16>,
    %c9 = arith.constant 9 : index
    %c0_28 = arith.constant 0 : index
    %35 = vector.load %arg21[%c9, %c0_28] : memref<48x16xf32, #tpu.memory_space<vmem>>, vector<32x16xf32>
    %36 = arith.truncf %35 : vector<32x16xf32> to vector<32x16xbf16>
    %c0_29 = arith.constant 0 : index
    %c48 = arith.constant 48 : index
    %37 = vector.load %arg23[%c0_29, %c48] : memref<32x80xbf16, #tpu.memory_space<vmem>>, vector<32x16xbf16>
    tpu.vector_store %arg23[%c0_29, %c48], %36 {strides = array<i32>} : memref<32x80xbf16, #tpu.memory_space<vmem>>, vector<32x16xbf16>,
    %c10 = arith.constant 10 : index
    %c0_30 = arith.constant 0 : index
    %38 = vector.load %arg21[%c10, %c0_30] : memref<48x16xf32, #tpu.memory_space<vmem>>, vector<32x16xf32>
    %39 = arith.truncf %38 : vector<32x16xf32> to vector<32x16xbf16>
    %c0_31 = arith.constant 0 : index
    %c64 = arith.constant 64 : index
    %40 = vector.load %arg23[%c0_31, %c64] : memref<32x80xbf16, #tpu.memory_space<vmem>>, vector<32x16xbf16>
    tpu.vector_store %arg23[%c0_31, %c64], %39 {strides = array<i32>} : memref<32x80xbf16, #tpu.memory_space<vmem>>, vector<32x16xbf16>,
    %c0_32 = arith.constant 0 : index
    %c0_33 = arith.constant 0 : index
    %41 = vector.load %arg23[%c0_32, %c0_33] : memref<32x80xbf16, #tpu.memory_space<vmem>>, vector<32x80xbf16>
    %cst_34 = arith.constant dense<0.000000e+00> : vector<32x16xf32>
    %42 = tpu.matmul %41, %23, %cst_34 {dimension_numbers = #tpu.dot_dimension_numbers<[1], [0], [0], [1], [0, 0, 1, 1], [], []>} : vector<32x80xbf16>, vector<80x16xbf16>, vector<32x16xf32> -> vector<32x16xf32>
    %cst_35 = arith.constant dense<0.000000e+00> : vector<32x16xf32>
    %43 = tpu.matmul %41, %25, %cst_35 {dimension_numbers = #tpu.dot_dimension_numbers<[1], [0], [0], [1], [0, 0, 1, 1], [], []>} : vector<32x80xbf16>, vector<80x16xbf16>, vector<32x16xf32> -> vector<32x16xf32>
    %c0_36 = arith.constant 0 : index
    %c0_37 = arith.constant 0 : index
    %c0_38 = arith.constant 0 : index
    %44 = vector.load %arg8[%c0_36, %c0_37, %c0_38] : memref<3x1x16xf32, #tpu.memory_space<vmem>>, vector<1x1x16xf32>
    %45 = vector.shape_cast %44 : vector<1x1x16xf32> to vector<1x16xf32>
    %46 = vector.broadcast %45 : vector<1x16xf32> to vector<32x16xf32>
    %47 = arith.addf %42, %46 : vector<32x16xf32>
    %c0_39 = arith.constant 0 : index
    %c0_40 = arith.constant 0 : index
    %c0_41 = arith.constant 0 : index
    %48 = vector.load %arg9[%c0_39, %c0_40, %c0_41] : memref<3x1x16xf32, #tpu.memory_space<vmem>>, vector<1x1x16xf32>
    %49 = vector.shape_cast %48 : vector<1x1x16xf32> to vector<1x16xf32>
    %50 = vector.broadcast %49 : vector<1x16xf32> to vector<32x16xf32>
    %51 = arith.addf %43, %50 : vector<32x16xf32>
    %52 = math.tanh %47 : vector<32x16xf32>
    %53 = arith.negf %51 : vector<32x16xf32>
    %54 = math.exp %53 : vector<32x16xf32>
    %cst_42 = arith.constant 1.000000e+00 : f32
    %55 = vector.broadcast %cst_42 : f32 to vector<32x16xf32>
    %56 = arith.addf %55, %54 : vector<32x16xf32>
    %57 = arith.divf %55, %56 : vector<32x16xf32>
    %58 = arith.mulf %52, %57 : vector<32x16xf32>
    %59 = arith.truncf %58 : vector<32x16xf32> to vector<32x16xbf16>
    %c0_43 = arith.constant 0 : index
    %c0_44 = arith.constant 0 : index
    %60 = vector.load %arg22[%c0_43, %c0_44] : memref<32x16xf32, #tpu.memory_space<vmem>>, vector<32x16xf32>
    %c0_45 = arith.constant 0 : index
    %c0_46 = arith.constant 0 : index
    %c0_47 = arith.constant 0 : index
    %61 = vector.load %arg12[%c0_45, %c0_46, %c0_47] : memref<3x16x16xbf16, #tpu.memory_space<vmem>>, vector<1x16x16xbf16>
    %62 = vector.shape_cast %61 : vector<1x16x16xbf16> to vector<16x16xbf16>
    %cst_48 = arith.constant dense<0.000000e+00> : vector<32x16xf32>
    %63 = tpu.matmul %59, %62, %cst_48 {dimension_numbers = #tpu.dot_dimension_numbers<[1], [0], [0], [1], [0, 0, 1, 1], [], []>} : vector<32x16xbf16>, vector<16x16xbf16>, vector<32x16xf32> -> vector<32x16xf32>
    %c0_49 = arith.constant 0 : index
    %c0_50 = arith.constant 0 : index
    %c0_51 = arith.constant 0 : index
    %64 = vector.load %arg13[%c0_49, %c0_50, %c0_51] : memref<3x1x16xf32, #tpu.memory_space<vmem>>, vector<1x1x16xf32>
    %65 = vector.shape_cast %64 : vector<1x1x16xf32> to vector<1x16xf32>
    %66 = vector.broadcast %65 : vector<1x16xf32> to vector<32x16xf32>
    %67 = arith.addf %63, %66 : vector<32x16xf32>
    %68 = arith.addf %60, %67 : vector<32x16xf32>
    %c0_52 = arith.constant 0 : index
    %c0_53 = arith.constant 0 : index
    %69 = vector.load %arg22[%c0_52, %c0_53] : memref<32x16xf32, #tpu.memory_space<vmem>>, vector<32x16xf32>
    tpu.vector_store %arg22[%c0_52, %c0_53], %68 {strides = array<i32>} : memref<32x16xf32, #tpu.memory_space<vmem>>, vector<32x16xf32>,
    %c0_54 = arith.constant 0 : index
    %c0_55 = arith.constant 0 : index
    %c0_56 = arith.constant 0 : index
    %70 = vector.load %arg10[%c0_54, %c0_55, %c0_56] : memref<2x16x16xbf16, #tpu.memory_space<vmem>>, vector<1x16x16xbf16>
    %71 = vector.shape_cast %70 : vector<1x16x16xbf16> to vector<16x16xbf16>
    %cst_57 = arith.constant dense<0.000000e+00> : vector<32x16xf32>
    %72 = tpu.matmul %59, %71, %cst_57 {dimension_numbers = #tpu.dot_dimension_numbers<[1], [0], [0], [1], [0, 0, 1, 1], [], []>} : vector<32x16xbf16>, vector<16x16xbf16>, vector<32x16xf32> -> vector<32x16xf32>
    %c0_58 = arith.constant 0 : index
    %c0_59 = arith.constant 0 : index
    %c0_60 = arith.constant 0 : index
    %73 = vector.load %arg11[%c0_58, %c0_59, %c0_60] : memref<2x1x16xf32, #tpu.memory_space<vmem>>, vector<1x1x16xf32>
    %74 = vector.shape_cast %73 : vector<1x1x16xf32> to vector<1x16xf32>
    %75 = vector.broadcast %74 : vector<1x16xf32> to vector<32x16xf32>
    %76 = arith.addf %72, %75 : vector<32x16xf32>
    %c8_61 = arith.constant 8 : index
    %c0_62 = arith.constant 0 : index
    %77 = vector.load %arg21[%c8_61, %c0_62] : memref<48x16xf32, #tpu.memory_space<vmem>>, vector<32x16xf32>
    %78 = arith.addf %77, %76 : vector<32x16xf32>
    %79 = vector.broadcast %6 : vector<32x1xf32> to vector<32x16xf32>
    %80 = arith.mulf %78, %79 : vector<32x16xf32>
    %c8_63 = arith.constant 8 : index
    %c0_64 = arith.constant 0 : index
    %81 = vector.load %arg21[%c8_63, %c0_64] : memref<48x16xf32, #tpu.memory_space<vmem>>, vector<32x16xf32>
    tpu.vector_store %arg21[%c8_63, %c0_64], %80 {strides = array<i32>} : memref<48x16xf32, #tpu.memory_space<vmem>>, vector<32x16xf32>,
    %c1 = arith.constant 1 : index
    %c0_65 = arith.constant 0 : index
    %c0_66 = arith.constant 0 : index
    %82 = vector.load %arg6[%c1, %c0_65, %c0_66] : memref<3x80x16xbf16, #tpu.memory_space<vmem>>, vector<1x80x16xbf16>
    %83 = vector.shape_cast %82 : vector<1x80x16xbf16> to vector<80x16xbf16>
    %c1_67 = arith.constant 1 : index
    %c0_68 = arith.constant 0 : index
    %c0_69 = arith.constant 0 : index
    %84 = vector.load %arg7[%c1_67, %c0_68, %c0_69] : memref<3x80x16xbf16, #tpu.memory_space<vmem>>, vector<1x80x16xbf16>
    %85 = vector.shape_cast %84 : vector<1x80x16xbf16> to vector<80x16xbf16>
    %c4 = arith.constant 4 : index
    %c0_70 = arith.constant 0 : index
    %86 = vector.load %arg21[%c4, %c0_70] : memref<48x16xf32, #tpu.memory_space<vmem>>, vector<32x16xf32>
    %87 = arith.truncf %86 : vector<32x16xf32> to vector<32x16xbf16>
    %c0_71 = arith.constant 0 : index
    %c0_72 = arith.constant 0 : index
    %88 = vector.load %arg23[%c0_71, %c0_72] : memref<32x80xbf16, #tpu.memory_space<vmem>>, vector<32x16xbf16>
    tpu.vector_store %arg23[%c0_71, %c0_72], %87 {strides = array<i32>} : memref<32x80xbf16, #tpu.memory_space<vmem>>, vector<32x16xbf16>,
    %c6_73 = arith.constant 6 : index
    %c0_74 = arith.constant 0 : index
    %89 = vector.load %arg21[%c6_73, %c0_74] : memref<48x16xf32, #tpu.memory_space<vmem>>, vector<32x16xf32>
    %90 = arith.truncf %89 : vector<32x16xf32> to vector<32x16xbf16>
    %c0_75 = arith.constant 0 : index
    %c16_76 = arith.constant 16 : index
    %91 = vector.load %arg23[%c0_75, %c16_76] : memref<32x80xbf16, #tpu.memory_space<vmem>>, vector<32x16xbf16>
    tpu.vector_store %arg23[%c0_75, %c16_76], %90 {strides = array<i32>} : memref<32x80xbf16, #tpu.memory_space<vmem>>, vector<32x16xbf16>,
    %c8_77 = arith.constant 8 : index
    %c0_78 = arith.constant 0 : index
    %92 = vector.load %arg21[%c8_77, %c0_78] : memref<48x16xf32, #tpu.memory_space<vmem>>, vector<32x16xf32>
    %93 = arith.truncf %92 : vector<32x16xf32> to vector<32x16xbf16>
    %c0_79 = arith.constant 0 : index
    %c32_80 = arith.constant 32 : index
    %94 = vector.load %arg23[%c0_79, %c32_80] : memref<32x80xbf16, #tpu.memory_space<vmem>>, vector<32x16xbf16>
    tpu.vector_store %arg23[%c0_79, %c32_80], %93 {strides = array<i32>} : memref<32x80xbf16, #tpu.memory_space<vmem>>, vector<32x16xbf16>,
    %c10_81 = arith.constant 10 : index
    %c0_82 = arith.constant 0 : index
    %95 = vector.load %arg21[%c10_81, %c0_82] : memref<48x16xf32, #tpu.memory_space<vmem>>, vector<32x16xf32>
    %96 = arith.truncf %95 : vector<32x16xf32> to vector<32x16xbf16>
    %c0_83 = arith.constant 0 : index
    %c48_84 = arith.constant 48 : index
    %97 = vector.load %arg23[%c0_83, %c48_84] : memref<32x80xbf16, #tpu.memory_space<vmem>>, vector<32x16xbf16>
    tpu.vector_store %arg23[%c0_83, %c48_84], %96 {strides = array<i32>} : memref<32x80xbf16, #tpu.memory_space<vmem>>, vector<32x16xbf16>,
    %c12 = arith.constant 12 : index
    %c0_85 = arith.constant 0 : index
    %98 = vector.load %arg21[%c12, %c0_85] : memref<48x16xf32, #tpu.memory_space<vmem>>, vector<32x16xf32>
    %99 = arith.truncf %98 : vector<32x16xf32> to vector<32x16xbf16>
    %c0_86 = arith.constant 0 : index
    %c64_87 = arith.constant 64 : index
    %100 = vector.load %arg23[%c0_86, %c64_87] : memref<32x80xbf16, #tpu.memory_space<vmem>>, vector<32x16xbf16>
    tpu.vector_store %arg23[%c0_86, %c64_87], %99 {strides = array<i32>} : memref<32x80xbf16, #tpu.memory_space<vmem>>, vector<32x16xbf16>,
    %c0_88 = arith.constant 0 : index
    %c0_89 = arith.constant 0 : index
    %101 = vector.load %arg23[%c0_88, %c0_89] : memref<32x80xbf16, #tpu.memory_space<vmem>>, vector<32x80xbf16>
    %cst_90 = arith.constant dense<0.000000e+00> : vector<32x16xf32>
    %102 = tpu.matmul %101, %83, %cst_90 {dimension_numbers = #tpu.dot_dimension_numbers<[1], [0], [0], [1], [0, 0, 1, 1], [], []>} : vector<32x80xbf16>, vector<80x16xbf16>, vector<32x16xf32> -> vector<32x16xf32>
    %cst_91 = arith.constant dense<0.000000e+00> : vector<32x16xf32>
    %103 = tpu.matmul %101, %85, %cst_91 {dimension_numbers = #tpu.dot_dimension_numbers<[1], [0], [0], [1], [0, 0, 1, 1], [], []>} : vector<32x80xbf16>, vector<80x16xbf16>, vector<32x16xf32> -> vector<32x16xf32>
    %c1_92 = arith.constant 1 : index
    %c0_93 = arith.constant 0 : index
    %c0_94 = arith.constant 0 : index
    %104 = vector.load %arg8[%c1_92, %c0_93, %c0_94] : memref<3x1x16xf32, #tpu.memory_space<vmem>>, vector<1x1x16xf32>
    %105 = vector.shape_cast %104 : vector<1x1x16xf32> to vector<1x16xf32>
    %106 = vector.broadcast %105 : vector<1x16xf32> to vector<32x16xf32>
    %107 = arith.addf %102, %106 : vector<32x16xf32>
    %c1_95 = arith.constant 1 : index
    %c0_96 = arith.constant 0 : index
    %c0_97 = arith.constant 0 : index
    %108 = vector.load %arg9[%c1_95, %c0_96, %c0_97] : memref<3x1x16xf32, #tpu.memory_space<vmem>>, vector<1x1x16xf32>
    %109 = vector.shape_cast %108 : vector<1x1x16xf32> to vector<1x16xf32>
    %110 = vector.broadcast %109 : vector<1x16xf32> to vector<32x16xf32>
    %111 = arith.addf %103, %110 : vector<32x16xf32>
    %112 = math.tanh %107 : vector<32x16xf32>
    %113 = arith.negf %111 : vector<32x16xf32>
    %114 = math.exp %113 : vector<32x16xf32>
    %cst_98 = arith.constant 1.000000e+00 : f32
    %115 = vector.broadcast %cst_98 : f32 to vector<32x16xf32>
    %116 = arith.addf %115, %114 : vector<32x16xf32>
    %117 = arith.divf %115, %116 : vector<32x16xf32>
    %118 = arith.mulf %112, %117 : vector<32x16xf32>
    %119 = arith.truncf %118 : vector<32x16xf32> to vector<32x16xbf16>
    %c0_99 = arith.constant 0 : index
    %c0_100 = arith.constant 0 : index
    %120 = vector.load %arg22[%c0_99, %c0_100] : memref<32x16xf32, #tpu.memory_space<vmem>>, vector<32x16xf32>
    %c1_101 = arith.constant 1 : index
    %c0_102 = arith.constant 0 : index
    %c0_103 = arith.constant 0 : index
    %121 = vector.load %arg12[%c1_101, %c0_102, %c0_103] : memref<3x16x16xbf16, #tpu.memory_space<vmem>>, vector<1x16x16xbf16>
    %122 = vector.shape_cast %121 : vector<1x16x16xbf16> to vector<16x16xbf16>
    %cst_104 = arith.constant dense<0.000000e+00> : vector<32x16xf32>
    %123 = tpu.matmul %119, %122, %cst_104 {dimension_numbers = #tpu.dot_dimension_numbers<[1], [0], [0], [1], [0, 0, 1, 1], [], []>} : vector<32x16xbf16>, vector<16x16xbf16>, vector<32x16xf32> -> vector<32x16xf32>
    %c1_105 = arith.constant 1 : index
    %c0_106 = arith.constant 0 : index
    %c0_107 = arith.constant 0 : index
    %124 = vector.load %arg13[%c1_105, %c0_106, %c0_107] : memref<3x1x16xf32, #tpu.memory_space<vmem>>, vector<1x1x16xf32>
    %125 = vector.shape_cast %124 : vector<1x1x16xf32> to vector<1x16xf32>
    %126 = vector.broadcast %125 : vector<1x16xf32> to vector<32x16xf32>
    %127 = arith.addf %123, %126 : vector<32x16xf32>
    %128 = arith.addf %120, %127 : vector<32x16xf32>
    %c0_108 = arith.constant 0 : index
    %c0_109 = arith.constant 0 : index
    %129 = vector.load %arg22[%c0_108, %c0_109] : memref<32x16xf32, #tpu.memory_space<vmem>>, vector<32x16xf32>
    tpu.vector_store %arg22[%c0_108, %c0_109], %128 {strides = array<i32>} : memref<32x16xf32, #tpu.memory_space<vmem>>, vector<32x16xf32>,
    %c1_110 = arith.constant 1 : index
    %c0_111 = arith.constant 0 : index
    %c0_112 = arith.constant 0 : index
    %130 = vector.load %arg10[%c1_110, %c0_111, %c0_112] : memref<2x16x16xbf16, #tpu.memory_space<vmem>>, vector<1x16x16xbf16>
    %131 = vector.shape_cast %130 : vector<1x16x16xbf16> to vector<16x16xbf16>
    %cst_113 = arith.constant dense<0.000000e+00> : vector<32x16xf32>
    %132 = tpu.matmul %119, %131, %cst_113 {dimension_numbers = #tpu.dot_dimension_numbers<[1], [0], [0], [1], [0, 0, 1, 1], [], []>} : vector<32x16xbf16>, vector<16x16xbf16>, vector<32x16xf32> -> vector<32x16xf32>
    %c1_114 = arith.constant 1 : index
    %c0_115 = arith.constant 0 : index
    %c0_116 = arith.constant 0 : index
    %133 = vector.load %arg11[%c1_114, %c0_115, %c0_116] : memref<2x1x16xf32, #tpu.memory_space<vmem>>, vector<1x1x16xf32>
    %134 = vector.shape_cast %133 : vector<1x1x16xf32> to vector<1x16xf32>
    %135 = vector.broadcast %134 : vector<1x16xf32> to vector<32x16xf32>
    %136 = arith.addf %132, %135 : vector<32x16xf32>
    %c8_117 = arith.constant 8 : index
    %c0_118 = arith.constant 0 : index
    %137 = vector.load %arg21[%c8_117, %c0_118] : memref<48x16xf32, #tpu.memory_space<vmem>>, vector<32x16xf32>
    %138 = arith.addf %137, %136 : vector<32x16xf32>
    %139 = vector.broadcast %6 : vector<32x1xf32> to vector<32x16xf32>
    %140 = arith.mulf %138, %139 : vector<32x16xf32>
    %c8_119 = arith.constant 8 : index
    %c0_120 = arith.constant 0 : index
    %141 = vector.load %arg21[%c8_119, %c0_120] : memref<48x16xf32, #tpu.memory_space<vmem>>, vector<32x16xf32>
    tpu.vector_store %arg21[%c8_119, %c0_120], %140 {strides = array<i32>} : memref<48x16xf32, #tpu.memory_space<vmem>>, vector<32x16xf32>,
    %c2 = arith.constant 2 : index
    %c0_121 = arith.constant 0 : index
    %c0_122 = arith.constant 0 : index
    %142 = vector.load %arg6[%c2, %c0_121, %c0_122] : memref<3x80x16xbf16, #tpu.memory_space<vmem>>, vector<1x80x16xbf16>
    %143 = vector.shape_cast %142 : vector<1x80x16xbf16> to vector<80x16xbf16>
    %c2_123 = arith.constant 2 : index
    %c0_124 = arith.constant 0 : index
    %c0_125 = arith.constant 0 : index
    %144 = vector.load %arg7[%c2_123, %c0_124, %c0_125] : memref<3x80x16xbf16, #tpu.memory_space<vmem>>, vector<1x80x16xbf16>
    %145 = vector.shape_cast %144 : vector<1x80x16xbf16> to vector<80x16xbf16>
    %c0_126 = arith.constant 0 : index
    %c0_127 = arith.constant 0 : index
    %146 = vector.load %arg21[%c0_126, %c0_127] : memref<48x16xf32, #tpu.memory_space<vmem>>, vector<32x16xf32>
    %147 = arith.truncf %146 : vector<32x16xf32> to vector<32x16xbf16>
    %c0_128 = arith.constant 0 : index
    %c0_129 = arith.constant 0 : index
    %148 = vector.load %arg23[%c0_128, %c0_129] : memref<32x80xbf16, #tpu.memory_space<vmem>>, vector<32x16xbf16>
    tpu.vector_store %arg23[%c0_128, %c0_129], %147 {strides = array<i32>} : memref<32x80xbf16, #tpu.memory_space<vmem>>, vector<32x16xbf16>,
    %c4_130 = arith.constant 4 : index
    %c0_131 = arith.constant 0 : index
    %149 = vector.load %arg21[%c4_130, %c0_131] : memref<48x16xf32, #tpu.memory_space<vmem>>, vector<32x16xf32>
    %150 = arith.truncf %149 : vector<32x16xf32> to vector<32x16xbf16>
    %c0_132 = arith.constant 0 : index
    %c16_133 = arith.constant 16 : index
    %151 = vector.load %arg23[%c0_132, %c16_133] : memref<32x80xbf16, #tpu.memory_space<vmem>>, vector<32x16xbf16>
    tpu.vector_store %arg23[%c0_132, %c16_133], %150 {strides = array<i32>} : memref<32x80xbf16, #tpu.memory_space<vmem>>, vector<32x16xbf16>,
    %c8_134 = arith.constant 8 : index
    %c0_135 = arith.constant 0 : index
    %152 = vector.load %arg21[%c8_134, %c0_135] : memref<48x16xf32, #tpu.memory_space<vmem>>, vector<32x16xf32>
    %153 = arith.truncf %152 : vector<32x16xf32> to vector<32x16xbf16>
    %c0_136 = arith.constant 0 : index
    %c32_137 = arith.constant 32 : index
    %154 = vector.load %arg23[%c0_136, %c32_137] : memref<32x80xbf16, #tpu.memory_space<vmem>>, vector<32x16xbf16>
    tpu.vector_store %arg23[%c0_136, %c32_137], %153 {strides = array<i32>} : memref<32x80xbf16, #tpu.memory_space<vmem>>, vector<32x16xbf16>,
    %c12_138 = arith.constant 12 : index
    %c0_139 = arith.constant 0 : index
    %155 = vector.load %arg21[%c12_138, %c0_139] : memref<48x16xf32, #tpu.memory_space<vmem>>, vector<32x16xf32>
    %156 = arith.truncf %155 : vector<32x16xf32> to vector<32x16xbf16>
    %c0_140 = arith.constant 0 : index
    %c48_141 = arith.constant 48 : index
    %157 = vector.load %arg23[%c0_140, %c48_141] : memref<32x80xbf16, #tpu.memory_space<vmem>>, vector<32x16xbf16>
    tpu.vector_store %arg23[%c0_140, %c48_141], %156 {strides = array<i32>} : memref<32x80xbf16, #tpu.memory_space<vmem>>, vector<32x16xbf16>,
    %c16_142 = arith.constant 16 : index
    %c0_143 = arith.constant 0 : index
    %158 = vector.load %arg21[%c16_142, %c0_143] : memref<48x16xf32, #tpu.memory_space<vmem>>, vector<32x16xf32>
    %159 = arith.truncf %158 : vector<32x16xf32> to vector<32x16xbf16>
    %c0_144 = arith.constant 0 : index
    %c64_145 = arith.constant 64 : index
    %160 = vector.load %arg23[%c0_144, %c64_145] : memref<32x80xbf16, #tpu.memory_space<vmem>>, vector<32x16xbf16>
    tpu.vector_store %arg23[%c0_144, %c64_145], %159 {strides = array<i32>} : memref<32x80xbf16, #tpu.memory_space<vmem>>, vector<32x16xbf16>,
    %c0_146 = arith.constant 0 : index
    %c0_147 = arith.constant 0 : index
    %161 = vector.load %arg23[%c0_146, %c0_147] : memref<32x80xbf16, #tpu.memory_space<vmem>>, vector<32x80xbf16>
    %cst_148 = arith.constant dense<0.000000e+00> : vector<32x16xf32>
    %162 = tpu.matmul %161, %143, %cst_148 {dimension_numbers = #tpu.dot_dimension_numbers<[1], [0], [0], [1], [0, 0, 1, 1], [], []>} : vector<32x80xbf16>, vector<80x16xbf16>, vector<32x16xf32> -> vector<32x16xf32>
    %cst_149 = arith.constant dense<0.000000e+00> : vector<32x16xf32>
    %163 = tpu.matmul %161, %145, %cst_149 {dimension_numbers = #tpu.dot_dimension_numbers<[1], [0], [0], [1], [0, 0, 1, 1], [], []>} : vector<32x80xbf16>, vector<80x16xbf16>, vector<32x16xf32> -> vector<32x16xf32>
    %c2_150 = arith.constant 2 : index
    %c0_151 = arith.constant 0 : index
    %c0_152 = arith.constant 0 : index
    %164 = vector.load %arg8[%c2_150, %c0_151, %c0_152] : memref<3x1x16xf32, #tpu.memory_space<vmem>>, vector<1x1x16xf32>
    %165 = vector.shape_cast %164 : vector<1x1x16xf32> to vector<1x16xf32>
    %166 = vector.broadcast %165 : vector<1x16xf32> to vector<32x16xf32>
    %167 = arith.addf %162, %166 : vector<32x16xf32>
    %c2_153 = arith.constant 2 : index
    %c0_154 = arith.constant 0 : index
    %c0_155 = arith.constant 0 : index
    %168 = vector.load %arg9[%c2_153, %c0_154, %c0_155] : memref<3x1x16xf32, #tpu.memory_space<vmem>>, vector<1x1x16xf32>
    %169 = vector.shape_cast %168 : vector<1x1x16xf32> to vector<1x16xf32>
    %170 = vector.broadcast %169 : vector<1x16xf32> to vector<32x16xf32>
    %171 = arith.addf %163, %170 : vector<32x16xf32>
    %172 = math.tanh %167 : vector<32x16xf32>
    %173 = arith.negf %171 : vector<32x16xf32>
    %174 = math.exp %173 : vector<32x16xf32>
    %cst_156 = arith.constant 1.000000e+00 : f32
    %175 = vector.broadcast %cst_156 : f32 to vector<32x16xf32>
    %176 = arith.addf %175, %174 : vector<32x16xf32>
    %177 = arith.divf %175, %176 : vector<32x16xf32>
    %178 = arith.mulf %172, %177 : vector<32x16xf32>
    %179 = arith.truncf %178 : vector<32x16xf32> to vector<32x16xbf16>
    %c0_157 = arith.constant 0 : index
    %c0_158 = arith.constant 0 : index
    %180 = vector.load %arg22[%c0_157, %c0_158] : memref<32x16xf32, #tpu.memory_space<vmem>>, vector<32x16xf32>
    %c2_159 = arith.constant 2 : index
    %c0_160 = arith.constant 0 : index
    %c0_161 = arith.constant 0 : index
    %181 = vector.load %arg12[%c2_159, %c0_160, %c0_161] : memref<3x16x16xbf16, #tpu.memory_space<vmem>>, vector<1x16x16xbf16>
    %182 = vector.shape_cast %181 : vector<1x16x16xbf16> to vector<16x16xbf16>
    %cst_162 = arith.constant dense<0.000000e+00> : vector<32x16xf32>
    %183 = tpu.matmul %179, %182, %cst_162 {dimension_numbers = #tpu.dot_dimension_numbers<[1], [0], [0], [1], [0, 0, 1, 1], [], []>} : vector<32x16xbf16>, vector<16x16xbf16>, vector<32x16xf32> -> vector<32x16xf32>
    %c2_163 = arith.constant 2 : index
    %c0_164 = arith.constant 0 : index
    %c0_165 = arith.constant 0 : index
    %184 = vector.load %arg13[%c2_163, %c0_164, %c0_165] : memref<3x1x16xf32, #tpu.memory_space<vmem>>, vector<1x1x16xf32>
    %185 = vector.shape_cast %184 : vector<1x1x16xf32> to vector<1x16xf32>
    %186 = vector.broadcast %185 : vector<1x16xf32> to vector<32x16xf32>
    %187 = arith.addf %183, %186 : vector<32x16xf32>
    %188 = arith.addf %180, %187 : vector<32x16xf32>
    %c0_166 = arith.constant 0 : index
    %c0_167 = arith.constant 0 : index
    %189 = vector.load %arg22[%c0_166, %c0_167] : memref<32x16xf32, #tpu.memory_space<vmem>>, vector<32x16xf32>
    tpu.vector_store %arg22[%c0_166, %c0_167], %188 {strides = array<i32>} : memref<32x16xf32, #tpu.memory_space<vmem>>, vector<32x16xf32>,
    %c0_168 = arith.constant 0 : index
    %c0_169 = arith.constant 0 : index
    %190 = vector.load %arg22[%c0_168, %c0_169] : memref<32x16xf32, #tpu.memory_space<vmem>>, vector<32x16xf32>
    %191 = vector.broadcast %6 : vector<32x1xf32> to vector<32x16xf32>
    %192 = arith.mulf %190, %191 : vector<32x16xf32>
    %193 = arith.truncf %192 : vector<32x16xf32> to vector<32x16xbf16>
    %c0_170 = arith.constant 0 : index
    %c0_171 = arith.constant 0 : index
    %194 = vector.load %arg14[%c0_170, %c0_171] : memref<16x128xbf16, #tpu.memory_space<vmem>>, vector<16x128xbf16>
    %cst_172 = arith.constant dense<0.000000e+00> : vector<32x128xf32>
    %195 = tpu.matmul %193, %194, %cst_172 {dimension_numbers = #tpu.dot_dimension_numbers<[1], [0], [0], [1], [0, 0, 1, 1], [], []>} : vector<32x16xbf16>, vector<16x128xbf16>, vector<32x128xf32> -> vector<32x128xf32>
    %c0_173 = arith.constant 0 : index
    %c0_174 = arith.constant 0 : index
    %196 = vector.load %arg15[%c0_173, %c0_174] : memref<1x128xf32, #tpu.memory_space<vmem>>, vector<1x128xf32>
    %197 = vector.broadcast %196 : vector<1x128xf32> to vector<32x128xf32>
    %198 = arith.addf %195, %197 : vector<32x128xf32>
    %199 = vector.broadcast %6 : vector<32x1xf32> to vector<32x128xf32>
    %200 = arith.mulf %198, %199 : vector<32x128xf32>
    %c0_175 = arith.constant 0 : index
    %c0_176 = arith.constant 0 : index
    %201 = vector.load %arg16[%c0_175, %c0_176] : memref<16x128xbf16, #tpu.memory_space<vmem>>, vector<16x128xbf16>
    %cst_177 = arith.constant dense<0.000000e+00> : vector<32x128xf32>
    %202 = tpu.matmul %193, %201, %cst_177 {dimension_numbers = #tpu.dot_dimension_numbers<[1], [0], [0], [1], [0, 0, 1, 1], [], []>} : vector<32x16xbf16>, vector<16x128xbf16>, vector<32x128xf32> -> vector<32x128xf32>
    %c0_178 = arith.constant 0 : index
    %c0_179 = arith.constant 0 : index
    %203 = vector.load %arg17[%c0_178, %c0_179] : memref<1x128xf32, #tpu.memory_space<vmem>>, vector<1x128xf32>
    %204 = vector.broadcast %203 : vector<1x128xf32> to vector<32x128xf32>
    %205 = arith.addf %202, %204 : vector<32x128xf32>
    %206 = vector.broadcast %6 : vector<32x1xf32> to vector<32x128xf32>
    %207 = arith.mulf %205, %206 : vector<32x128xf32>
    %c0_180 = arith.constant 0 : index
    %c0_181 = arith.constant 0 : index
    %c0_182 = arith.constant 0 : index
    %208 = vector.load %arg3[%c0_180, %c0_181, %c0_182] : memref<1x32x128xf32, #tpu.memory_space<vmem>>, vector<1x32x128xf32>
    %209 = vector.shape_cast %208 : vector<1x32x128xf32> to vector<32x128xf32>
    %210 = math.exp %207 : vector<32x128xf32>
    %cst_183 = arith.constant 1.000000e+00 : f32
    %211 = vector.broadcast %cst_183 : f32 to vector<32x128xf32>
    %212 = arith.mulf %211, %210 : vector<32x128xf32>
    %213 = arith.mulf %209, %212 : vector<32x128xf32>
    %214 = arith.addf %200, %213 : vector<32x128xf32>
    %215 = vector.broadcast %6 : vector<32x1xf32> to vector<32x128xf32>
    %216 = arith.mulf %214, %215 : vector<32x128xf32>
    %c0_184 = arith.constant 0 : index
    %c0_185 = arith.constant 0 : index
    %c0_186 = arith.constant 0 : index
    %217 = vector.load %arg18[%c0_184, %c0_185, %c0_186] : memref<1x32x128xf32, #tpu.memory_space<vmem>>, vector<1x32x128xf32>
    %218 = vector.shape_cast %217 : vector<1x32x128xf32> to vector<32x128xf32>
    %219 = vector.shape_cast %216 : vector<32x128xf32> to vector<1x32x128xf32>
    tpu.vector_store %arg18[%c0_184, %c0_185, %c0_186], %219 {strides = array<i32>} : memref<1x32x128xf32, #tpu.memory_space<vmem>>, vector<1x32x128xf32>,
    %c0_187 = arith.constant 0 : index
    %c0_188 = arith.constant 0 : index
    %c0_189 = arith.constant 0 : index
    %220 = vector.load %arg19[%c0_187, %c0_188, %c0_189] : memref<1x32x128xf32, #tpu.memory_space<vmem>>, vector<1x32x128xf32>
    %221 = vector.shape_cast %220 : vector<1x32x128xf32> to vector<32x128xf32>
    %222 = vector.shape_cast %200 : vector<32x128xf32> to vector<1x32x128xf32>
    tpu.vector_store %arg19[%c0_187, %c0_188, %c0_189], %222 {strides = array<i32>} : memref<1x32x128xf32, #tpu.memory_space<vmem>>, vector<1x32x128xf32>,
    %c0_190 = arith.constant 0 : index
    %c0_191 = arith.constant 0 : index
    %c0_192 = arith.constant 0 : index
    %223 = vector.load %arg20[%c0_190, %c0_191, %c0_192] : memref<1x32x128xf32, #tpu.memory_space<vmem>>, vector<1x32x128xf32>
    %224 = vector.shape_cast %223 : vector<1x32x128xf32> to vector<32x128xf32>
    %225 = vector.shape_cast %207 : vector<32x128xf32> to vector<1x32x128xf32>
    tpu.vector_store %arg20[%c0_190, %c0_191, %c0_192], %225 {strides = array<i32>} : memref<1x32x128xf32, #tpu.memory_space<vmem>>, vector<1x32x128xf32>,
    return
  }
  func.func @transform_0(%arg0: i32, %arg1: memref<2xi32, #tpu.memory_space<smem>>) -> (i32, i32, i32) {
    %c0_i32 = arith.constant 0 : i32
    %c0_i32_0 = arith.constant 0 : i32
    %c0_i32_1 = arith.constant 0 : i32
    return %arg0, %c0_i32, %c0_i32_0 : i32, i32, i32
  }
  func.func @transform_1(%arg0: i32, %arg1: memref<2xi32, #tpu.memory_space<smem>>) -> (i32, i32, i32) {
    %c0_i32 = arith.constant 0 : i32
    %c0_i32_0 = arith.constant 0 : i32
    %c0_i32_1 = arith.constant 0 : i32
    return %arg0, %c0_i32, %c0_i32_0 : i32, i32, i32
  }
  func.func @transform_2(%arg0: i32, %arg1: memref<2xi32, #tpu.memory_space<smem>>) -> (i32, i32) {
    %c0_i32 = arith.constant 0 : i32
    %c0_i32_0 = arith.constant 0 : i32
    %c0_i32_1 = arith.constant 0 : i32
    return %c0_i32, %c0_i32_0 : i32, i32
  }
  func.func @transform_3(%arg0: i32, %arg1: memref<2xi32, #tpu.memory_space<smem>>) -> (i32, i32) {
    %c0_i32 = arith.constant 0 : i32
    %c0_i32_0 = arith.constant 0 : i32
    %c0_i32_1 = arith.constant 0 : i32
    return %c0_i32, %c0_i32_0 : i32, i32
  }
  func.func @transform_4(%arg0: i32, %arg1: memref<2xi32, #tpu.memory_space<smem>>) -> (i32, i32, i32) {
    %c0_i32 = arith.constant 0 : i32
    %c0_i32_0 = arith.constant 0 : i32
    %c0_i32_1 = arith.constant 0 : i32
    %c0_i32_2 = arith.constant 0 : i32
    return %c0_i32, %c0_i32_0, %c0_i32_1 : i32, i32, i32
  }
  func.func @transform_5(%arg0: i32, %arg1: memref<2xi32, #tpu.memory_space<smem>>) -> (i32, i32, i32) {
    %c0_i32 = arith.constant 0 : i32
    %c0_i32_0 = arith.constant 0 : i32
    %c0_i32_1 = arith.constant 0 : i32
    %c0_i32_2 = arith.constant 0 : i32
    return %c0_i32, %c0_i32_0, %c0_i32_1 : i32, i32, i32
  }
  func.func @transform_6(%arg0: i32, %arg1: memref<2xi32, #tpu.memory_space<smem>>) -> (i32, i32, i32) {
    %c0_i32 = arith.constant 0 : i32
    %c0_i32_0 = arith.constant 0 : i32
    %c0_i32_1 = arith.constant 0 : i32
    %c0_i32_2 = arith.constant 0 : i32
    return %c0_i32, %c0_i32_0, %c0_i32_1 : i32, i32, i32
  }
  func.func @transform_7(%arg0: i32, %arg1: memref<2xi32, #tpu.memory_space<smem>>) -> (i32, i32, i32) {
    %c0_i32 = arith.constant 0 : i32
    %c0_i32_0 = arith.constant 0 : i32
    %c0_i32_1 = arith.constant 0 : i32
    %c0_i32_2 = arith.constant 0 : i32
    return %c0_i32, %c0_i32_0, %c0_i32_1 : i32, i32, i32
  }
  func.func @transform_8(%arg0: i32, %arg1: memref<2xi32, #tpu.memory_space<smem>>) -> (i32, i32, i32) {
    %c0_i32 = arith.constant 0 : i32
    %c0_i32_0 = arith.constant 0 : i32
    %c0_i32_1 = arith.constant 0 : i32
    %c0_i32_2 = arith.constant 0 : i32
    return %c0_i32, %c0_i32_0, %c0_i32_1 : i32, i32, i32
  }
  func.func @transform_9(%arg0: i32, %arg1: memref<2xi32, #tpu.memory_space<smem>>) -> (i32, i32, i32) {
    %c0_i32 = arith.constant 0 : i32
    %c0_i32_0 = arith.constant 0 : i32
    %c0_i32_1 = arith.constant 0 : i32
    %c0_i32_2 = arith.constant 0 : i32
    return %c0_i32, %c0_i32_0, %c0_i32_1 : i32, i32, i32
  }
  func.func @transform_10(%arg0: i32, %arg1: memref<2xi32, #tpu.memory_space<smem>>) -> (i32, i32, i32) {
    %c0_i32 = arith.constant 0 : i32
    %c0_i32_0 = arith.constant 0 : i32
    %c0_i32_1 = arith.constant 0 : i32
    %c0_i32_2 = arith.constant 0 : i32
    return %c0_i32, %c0_i32_0, %c0_i32_1 : i32, i32, i32
  }
  func.func @transform_11(%arg0: i32, %arg1: memref<2xi32, #tpu.memory_space<smem>>) -> (i32, i32, i32) {
    %c0_i32 = arith.constant 0 : i32
    %c0_i32_0 = arith.constant 0 : i32
    %c0_i32_1 = arith.constant 0 : i32
    %c0_i32_2 = arith.constant 0 : i32
    return %c0_i32, %c0_i32_0, %c0_i32_1 : i32, i32, i32
  }
  func.func @transform_12(%arg0: i32, %arg1: memref<2xi32, #tpu.memory_space<smem>>) -> (i32, i32) {
    %c0_i32 = arith.constant 0 : i32
    %c0_i32_0 = arith.constant 0 : i32
    %c0_i32_1 = arith.constant 0 : i32
    return %c0_i32, %c0_i32_0 : i32, i32
  }
  func.func @transform_13(%arg0: i32, %arg1: memref<2xi32, #tpu.memory_space<smem>>) -> (i32, i32) {
    %c0_i32 = arith.constant 0 : i32
    %c0_i32_0 = arith.constant 0 : i32
    %c0_i32_1 = arith.constant 0 : i32
    return %c0_i32, %c0_i32_0 : i32, i32
  }
  func.func @transform_14(%arg0: i32, %arg1: memref<2xi32, #tpu.memory_space<smem>>) -> (i32, i32) {
    %c0_i32 = arith.constant 0 : i32
    %c0_i32_0 = arith.constant 0 : i32
    %c0_i32_1 = arith.constant 0 : i32
    return %c0_i32, %c0_i32_0 : i32, i32
  }
  func.func @transform_15(%arg0: i32, %arg1: memref<2xi32, #tpu.memory_space<smem>>) -> (i32, i32) {
    %c0_i32 = arith.constant 0 : i32
    %c0_i32_0 = arith.constant 0 : i32
    %c0_i32_1 = arith.constant 0 : i32
    return %c0_i32, %c0_i32_0 : i32, i32
  }
  func.func @transform_16(%arg0: i32, %arg1: memref<2xi32, #tpu.memory_space<smem>>) -> (i32, i32, i32) {
    %c0_i32 = arith.constant 0 : i32
    %c0_i32_0 = arith.constant 0 : i32
    %c0_i32_1 = arith.constant 0 : i32
    return %arg0, %c0_i32, %c0_i32_0 : i32, i32, i32
  }
  func.func @transform_17(%arg0: i32, %arg1: memref<2xi32, #tpu.memory_space<smem>>) -> (i32, i32, i32) {
    %c0_i32 = arith.constant 0 : i32
    %c0_i32_0 = arith.constant 0 : i32
    %c0_i32_1 = arith.constant 0 : i32
    return %arg0, %c0_i32, %c0_i32_0 : i32, i32, i32
  }
  func.func @transform_18(%arg0: i32, %arg1: memref<2xi32, #tpu.memory_space<smem>>) -> (i32, i32, i32) {
    %c0_i32 = arith.constant 0 : i32
    %c0_i32_0 = arith.constant 0 : i32
    %c0_i32_1 = arith.constant 0 : i32
    return %arg0, %c0_i32, %c0_i32_0 : i32, i32, i32
  }
}

</mosaic_0001>

<llo_original>
// kernel: tpu_custom_call.1
$region0: #{tpu_custom_call.1}
  #allocation0 [shape = 'u32[]', space=smem, size = 0x4, offset = 0x4, fixed_abs, tag = 'smem constant byte address 0x4 - core index']
  #allocation1 [shape = 'u32[72,128]{1,0:T(1,128)}', space=vmem, size = 0x9000, scoped, tag = 'internal scratch']
  #allocation2 [shape = 'f32[48,16]{1,0:T(8,128)}', space=vmem, size = 0x6000, scoped, tag = 'scratch operand']
  #allocation3 [shape = 'f32[32,16]{1,0:T(8,128)}', space=vmem, size = 0x4000, scoped, tag = 'scratch operand']
  #allocation4 [shape = 'bf16[32,80]{1,0:T(8,128)(2,1)}', space=vmem, size = 0x2000, scoped, tag = 'scratch operand']
  #allocation5 [shape = 's32[1]{0}', space=sflag, size = 0x4, scoped, tag = 'scoped memory for tpu_custom_call.1']
  #allocation6 [shape = 'u8[512]{0}', space=smem, size = 0x200, scoped, tag = 'prefetched SMEM operand 0']
  %s0 = inlined_call_operand.vmem [shape: s32[2], index: 0, kind: input, shape index: {}]
  %s1 = inlined_call_operand.vmem [shape: bf16[2,32,8], index: 1, kind: input, shape index: {}]
  %s2 = inlined_call_operand.vmem [shape: f32[2,32,128], index: 2, kind: input, shape index: {}]
  %s3 = inlined_call_operand.vmem [shape: bf16[8,16], index: 3, kind: input, shape index: {}]
  %s4 = inlined_call_operand.vmem [shape: f32[1,16], index: 4, kind: input, shape index: {}]
  %s5 = inlined_call_operand.vmem [shape: bf16[3,80,16], index: 5, kind: input, shape index: {}]
  %s6 = inlined_call_operand.vmem [shape: bf16[3,80,16], index: 6, kind: input, shape index: {}]
  %s7 = inlined_call_operand.vmem [shape: f32[3,1,16], index: 7, kind: input, shape index: {}]
  %s8 = inlined_call_operand.vmem [shape: f32[3,1,16], index: 8, kind: input, shape index: {}]
  %s9 = inlined_call_operand.vmem [shape: bf16[2,16,16], index: 9, kind: input, shape index: {}]
  %s10 = inlined_call_operand.vmem [shape: f32[2,1,16], index: 10, kind: input, shape index: {}]
  %s11 = inlined_call_operand.vmem [shape: bf16[3,16,16], index: 11, kind: input, shape index: {}]
  %s12 = inlined_call_operand.vmem [shape: f32[3,1,16], index: 12, kind: input, shape index: {}]
  %s13 = inlined_call_operand.vmem [shape: bf16[16,128], index: 13, kind: input, shape index: {}]
  %s14 = inlined_call_operand.vmem [shape: f32[1,128], index: 14, kind: input, shape index: {}]
  %s15 = inlined_call_operand.vmem [shape: bf16[16,128], index: 15, kind: input, shape index: {}]
  %s16 = inlined_call_operand.vmem [shape: f32[1,128], index: 16, kind: input, shape index: {}]
  %s17 = inlined_call_operand.hbm [shape: f32[2,32,128], index: 17, kind: output, shape index: {0}]
  %s18 = inlined_call_operand.hbm [shape: f32[2,32,128], index: 18, kind: output, shape index: {1}]
  %s19 = inlined_call_operand.hbm [shape: f32[2,32,128], index: 19, kind: output, shape index: {2}]
  %20 = xla_tuple %s17, %s18, %s19
  %s21 = sld [smem:[#allocation0]]
  $region113: #{tpu_custom_call.1} parent=0
    _
  %s23 = ssub.s32 1, %s21
  %s24 = scalar_select 0, %s23, %s21
  %s26 = sshll.u32 %s0, 4
  %s27 = int_to_ptr.vmem [resolvable:$true] %s26
  %29 = dma.vmem_to_smem %s27, 16, [#allocation6], [#allocation5]
  %31 = dma.done [#allocation5], 16
  %32 = sfence
  $region1: #{tpu_custom_call.1} parent=0
    #allocation7 [shape = 'u8[32768]{0}', space=vmem, size = 0x8000, scoped, tag = 'output window, operand 0']
    #allocation8 [shape = 's32[2]{0}', space=sflag, size = 0x8, scoped, tag = 'scoped memory for tpu_custom_call.1']
    #allocation9 [shape = 'u8[32768]{0}', space=vmem, size = 0x8000, scoped, tag = 'output window, operand 1']
    #allocation10 [shape = 's32[2]{0}', space=sflag, size = 0x8, scoped, tag = 'scoped memory for tpu_custom_call.1']
    #allocation11 [shape = 'u8[32768]{0}', space=vmem, size = 0x8000, scoped, tag = 'output window, operand 2']
    %33 = vsyncpa [#allocation8], 0
    %s34 = scalar_lea.sflag [#allocation8], 1
    %35 = vsyncpa %s34, 0
    %36 = vsyncpa [#allocation10], 0
    %s37 = scalar_lea.sflag [#allocation10], 1
    %38 = vsyncpa %s37, 0
    loop: start=0, step=1, limit=4
    $region2: #{tpu_custom_call.1} parent=1 // loop_pre_header
      _
    $region3: #{tpu_custom_call.1} parent=1 // loop_header
      %s40 = sphi 0, %s44
      %p41 = scmp.ge.s32.totalorder %s40, 4
      %s50 = sphi 0, %s52
      %s53 = sphi 0, %s50
      %s54 = sphi 0, %s53
      %s70 = sphi 0, %s54
      %s76 = sphi 0, %s78
      %s79 = sphi 0, %s76
      %s80 = sphi 0, %s79
      %s96 = sphi 0, %s80
      %s100 = sphi 0, %s100
      %s102 = sphi 0, %s100
      %s103 = sphi 0, %s102
      %s117 = sphi 0, %s103
      %s121 = sphi 0, %s121
      %s123 = sphi 0, %s121
      %s124 = sphi 0, %s123
      %s138 = sphi 0, %s124
      %s142 = sphi 0, %s142
      %s144 = sphi 0, %s142
      %s145 = sphi 0, %s144
      %s159 = sphi 0, %s145
      %s163 = sphi 0, %s163
      %s165 = sphi 0, %s163
      %s166 = sphi 0, %s165
      %s180 = sphi 0, %s166
      %s184 = sphi 0, %s184
      %s186 = sphi 0, %s184
      %s187 = sphi 0, %s186
      %s201 = sphi 0, %s187
      %s205 = sphi 0, %s205
      %s207 = sphi 0, %s205
      %s208 = sphi 0, %s207
      %s222 = sphi 0, %s208
      %s226 = sphi 0, %s226
      %s228 = sphi 0, %s226
      %s229 = sphi 0, %s228
      %s243 = sphi 0, %s229
      %s247 = sphi 0, %s247
      %s249 = sphi 0, %s247
      %s250 = sphi 0, %s249
      %s264 = sphi 0, %s250
      %s268 = sphi 0, %s268
      %s270 = sphi 0, %s268
      %s271 = sphi 0, %s270
      %s285 = sphi 0, %s271
      %s289 = sphi 0, %s289
      %s291 = sphi 0, %s289
      %s292 = sphi 0, %s291
      %s306 = sphi 0, %s292
      %s310 = sphi 0, %s310
      %s312 = sphi 0, %s310
      %s313 = sphi 0, %s312
      %s327 = sphi 0, %s313
      %s331 = sphi 0, %s331
      %s333 = sphi 0, %s331
      %s334 = sphi 0, %s333
      %s348 = sphi 0, %s334
      %s352 = sphi 0, %s352
      %s354 = sphi 0, %s352
      %s355 = sphi 0, %s354
      %s369 = sphi 0, %s355
      %s373 = sphi 0, %s373
      %s375 = sphi 0, %s373
      %s376 = sphi 0, %s375
      %s390 = sphi 0, %s376
      %s396 = sphi 0, %s398
      %s399 = sphi 0, %s396
      %s400 = sphi 0, %s399
      %s416 = sphi 0, %s400
      %s422 = sphi 0, %s424
      %s425 = sphi 0, %s422
      %s426 = sphi 0, %s425
      %s442 = sphi 0, %s426
      %s448 = sphi 0, %s450
      %s451 = sphi 0, %s448
      %s452 = sphi 0, %s451
      %s468 = sphi 0, %s452
    $region4: #{tpu_custom_call.1} parent=1 // loop_header_branch
      %43 = sbr.rel (%p41) target = $region8
    $region5: #{tpu_custom_call.1} parent=1 // loop_body
      %s45 = ssub.s32 %s40, 1
      %s46 = ssub.s32 %s40, 2
      %s47 = sadd.s32 %s40, 1
      %s48 = ssub.s32 %s40, %s47
      %p49 = scmp.eq.s32.totalorder %s48, 0
      %s51 = sadd.s32 %s50, 1
      %s52 = scalar_select %p49, %s50, %s51
      %p55 = pneg %p49
      %p56 = scmp.eq.s32.totalorder %s40, 1
      %p57 = por %p55, %p56
      %p58 = scmp.ne.s32.totalorder %s50, %s53
      %p59 = scmp.eq.s32.totalorder %s40, 0
      %p60 = por %p58, %p59
      %p61 = scmp.ne.s32.totalorder %s50, %s53
      %p62 = scmp.eq.s32.totalorder %s45, 1
      %p63 = por %p61, %p62
      %p64 = scmp.ne.s32.totalorder %s53, %s54
      %p65 = scmp.eq.s32.totalorder %s45, 0
      %p66 = por %p64, %p65
      %p67 = scmp.ne.s32.totalorder %s53, %s54
      %p68 = scmp.eq.s32.totalorder %s46, 1
      %p69 = por %p67, %p68
      %p71 = scmp.ne.s32.totalorder %s54, %s70
      %p72 = scmp.eq.s32.totalorder %s46, 0
      %p73 = por %p71, %p72
      %s74 = ssub.s32 %s40, %s47
      %p75 = scmp.eq.s32.totalorder %s74, 0
      %s77 = sadd.s32 %s76, 1
      %s78 = scalar_select %p75, %s76, %s77
      %p81 = pneg %p75
      %p82 = scmp.eq.s32.totalorder %s40, 1
      %p83 = por %p81, %p82
      %p84 = scmp.ne.s32.totalorder %s76, %s79
      %p85 = scmp.eq.s32.totalorder %s40, 0
      %p86 = por %p84, %p85
      %p87 = scmp.ne.s32.totalorder %s76, %s79
      %p88 = scmp.eq.s32.totalorder %s45, 1
      %p89 = por %p87, %p88
      %p90 = scmp.ne.s32.totalorder %s79, %s80
      %p91 = scmp.eq.s32.totalorder %s45, 0
      %p92 = por %p90, %p91
      %p93 = scmp.ne.s32.totalorder %s79, %s80
      %p94 = scmp.eq.s32.totalorder %s46, 1
      %p95 = por %p93, %p94
      %p97 = scmp.ne.s32.totalorder %s80, %s96
      %p98 = scmp.eq.s32.totalorder %s46, 0
      %p99 = por %p97, %p98
      %s101 = sadd.s32 %s100, 1
      %p104 = scmp.eq.s32.totalorder %s40, 1
      %p105 = scmp.ne.s32.totalorder %s100, %s102
      %p106 = scmp.eq.s32.totalorder %s40, 0
      %p107 = por %p105, %p106
      %p108 = scmp.ne.s32.totalorder %s100, %s102
      %p109 = scmp.eq.s32.totalorder %s45, 1
      %p110 = por %p108, %p109
      %p111 = scmp.ne.s32.totalorder %s102, %s103
      %p112 = scmp.eq.s32.totalorder %s45, 0
      %p113 = por %p111, %p112
      %p114 = scmp.ne.s32.totalorder %s102, %s103
      %p115 = scmp.eq.s32.totalorder %s46, 1
      %p116 = por %p114, %p115
      %p118 = scmp.ne.s32.totalorder %s103, %s117
      %p119 = scmp.eq.s32.totalorder %s46, 0
      %p120 = por %p118, %p119
      %s122 = sadd.s32 %s121, 1
      %p125 = scmp.eq.s32.totalorder %s40, 1
      %p126 = scmp.ne.s32.totalorder %s121, %s123
      %p127 = scmp.eq.s32.totalorder %s40, 0
      %p128 = por %p126, %p127
      %p129 = scmp.ne.s32.totalorder %s121, %s123
      %p130 = scmp.eq.s32.totalorder %s45, 1
      %p131 = por %p129, %p130
      %p132 = scmp.ne.s32.totalorder %s123, %s124
      %p133 = scmp.eq.s32.totalorder %s45, 0
      %p134 = por %p132, %p133
      %p135 = scmp.ne.s32.totalorder %s123, %s124
      %p136 = scmp.eq.s32.totalorder %s46, 1
      %p137 = por %p135, %p136
      %p139 = scmp.ne.s32.totalorder %s124, %s138
      %p140 = scmp.eq.s32.totalorder %s46, 0
      %p141 = por %p139, %p140
      %s143 = sadd.s32 %s142, 1
      %p146 = scmp.eq.s32.totalorder %s40, 1
      %p147 = scmp.ne.s32.totalorder %s142, %s144
      %p148 = scmp.eq.s32.totalorder %s40, 0
      %p149 = por %p147, %p148
      %p150 = scmp.ne.s32.totalorder %s142, %s144
      %p151 = scmp.eq.s32.totalorder %s45, 1
      %p152 = por %p150, %p151
      %p153 = scmp.ne.s32.totalorder %s144, %s145
      %p154 = scmp.eq.s32.totalorder %s45, 0
      %p155 = por %p153, %p154
      %p156 = scmp.ne.s32.totalorder %s144, %s145
      %p157 = scmp.eq.s32.totalorder %s46, 1
      %p158 = por %p156, %p157
      %p160 = scmp.ne.s32.totalorder %s145, %s159
      %p161 = scmp.eq.s32.totalorder %s46, 0
      %p162 = por %p160, %p161
      %s164 = sadd.s32 %s163, 1
      %p167 = scmp.eq.s32.totalorder %s40, 1
      %p168 = scmp.ne.s32.totalorder %s163, %s165
      %p169 = scmp.eq.s32.totalorder %s40, 0
      %p170 = por %p168, %p169
      %p171 = scmp.ne.s32.totalorder %s163, %s165
      %p172 = scmp.eq.s32.totalorder %s45, 1
      %p173 = por %p171, %p172
      %p174 = scmp.ne.s32.totalorder %s165, %s166
      %p175 = scmp.eq.s32.totalorder %s45, 0
      %p176 = por %p174, %p175
      %p177 = scmp.ne.s32.totalorder %s165, %s166
      %p178 = scmp.eq.s32.totalorder %s46, 1
      %p179 = por %p177, %p178
      %p181 = scmp.ne.s32.totalorder %s166, %s180
      %p182 = scmp.eq.s32.totalorder %s46, 0
      %p183 = por %p181, %p182
      %s185 = sadd.s32 %s184, 1
      %p188 = scmp.eq.s32.totalorder %s40, 1
      %p189 = scmp.ne.s32.totalorder %s184, %s186
      %p190 = scmp.eq.s32.totalorder %s40, 0
      %p191 = por %p189, %p190
      %p192 = scmp.ne.s32.totalorder %s184, %s186
      %p193 = scmp.eq.s32.totalorder %s45, 1
      %p194 = por %p192, %p193
      %p195 = scmp.ne.s32.totalorder %s186, %s187
      %p196 = scmp.eq.s32.totalorder %s45, 0
      %p197 = por %p195, %p196
      %p198 = scmp.ne.s32.totalorder %s186, %s187
      %p199 = scmp.eq.s32.totalorder %s46, 1
      %p200 = por %p198, %p199
      %p202 = scmp.ne.s32.totalorder %s187, %s201
      %p203 = scmp.eq.s32.totalorder %s46, 0
      %p204 = por %p202, %p203
      %s206 = sadd.s32 %s205, 1
      %p209 = scmp.eq.s32.totalorder %s40, 1
      %p210 = scmp.ne.s32.totalorder %s205, %s207
      %p211 = scmp.eq.s32.totalorder %s40, 0
      %p212 = por %p210, %p211
      %p213 = scmp.ne.s32.totalorder %s205, %s207
      %p214 = scmp.eq.s32.totalorder %s45, 1
      %p215 = por %p213, %p214
      %p216 = scmp.ne.s32.totalorder %s207, %s208
      %p217 = scmp.eq.s32.totalorder %s45, 0
      %p218 = por %p216, %p217
      %p219 = scmp.ne.s32.totalorder %s207, %s208
      %p220 = scmp.eq.s32.totalorder %s46, 1
      %p221 = por %p219, %p220
      %p223 = scmp.ne.s32.totalorder %s208, %s222
      %p224 = scmp.eq.s32.totalorder %s46, 0
      %p225 = por %p223, %p224
      %s227 = sadd.s32 %s226, 1
      %p230 = scmp.eq.s32.totalorder %s40, 1
      %p231 = scmp.ne.s32.totalorder %s226, %s228
      %p232 = scmp.eq.s32.totalorder %s40, 0
      %p233 = por %p231, %p232
      %p234 = scmp.ne.s32.totalorder %s226, %s228
      %p235 = scmp.eq.s32.totalorder %s45, 1
      %p236 = por %p234, %p235
      %p237 = scmp.ne.s32.totalorder %s228, %s229
      %p238 = scmp.eq.s32.totalorder %s45, 0
      %p239 = por %p237, %p238
      %p240 = scmp.ne.s32.totalorder %s228, %s229
      %p241 = scmp.eq.s32.totalorder %s46, 1
      %p242 = por %p240, %p241
      %p244 = scmp.ne.s32.totalorder %s229, %s243
      %p245 = scmp.eq.s32.totalorder %s46, 0
      %p246 = por %p244, %p245
      %s248 = sadd.s32 %s247, 1
      %p251 = scmp.eq.s32.totalorder %s40, 1
      %p252 = scmp.ne.s32.totalorder %s247, %s249
      %p253 = scmp.eq.s32.totalorder %s40, 0
      %p254 = por %p252, %p253
      %p255 = scmp.ne.s32.totalorder %s247, %s249
      %p256 = scmp.eq.s32.totalorder %s45, 1
      %p257 = por %p255, %p256
      %p258 = scmp.ne.s32.totalorder %s249, %s250
      %p259 = scmp.eq.s32.totalorder %s45, 0
      %p260 = por %p258, %p259
      %p261 = scmp.ne.s32.totalorder %s249, %s250
      %p262 = scmp.eq.s32.totalorder %s46, 1
      %p263 = por %p261, %p262
      %p265 = scmp.ne.s32.totalorder %s250, %s264
      %p266 = scmp.eq.s32.totalorder %s46, 0
      %p267 = por %p265, %p266
      %s269 = sadd.s32 %s268, 1
      %p272 = scmp.eq.s32.totalorder %s40, 1
      %p273 = scmp.ne.s32.totalorder %s268, %s270
      %p274 = scmp.eq.s32.totalorder %s40, 0
      %p275 = por %p273, %p274
      %p276 = scmp.ne.s32.totalorder %s268, %s270
      %p277 = scmp.eq.s32.totalorder %s45, 1
      %p278 = por %p276, %p277
      %p279 = scmp.ne.s32.totalorder %s270, %s271
      %p280 = scmp.eq.s32.totalorder %s45, 0
      %p281 = por %p279, %p280
      %p282 = scmp.ne.s32.totalorder %s270, %s271
      %p283 = scmp.eq.s32.totalorder %s46, 1
      %p284 = por %p282, %p283
      %p286 = scmp.ne.s32.totalorder %s271, %s285
      %p287 = scmp.eq.s32.totalorder %s46, 0
      %p288 = por %p286, %p287
      %s290 = sadd.s32 %s289, 1
      %p293 = scmp.eq.s32.totalorder %s40, 1
      %p294 = scmp.ne.s32.totalorder %s289, %s291
      %p295 = scmp.eq.s32.totalorder %s40, 0
      %p296 = por %p294, %p295
      %p297 = scmp.ne.s32.totalorder %s289, %s291
      %p298 = scmp.eq.s32.totalorder %s45, 1
      %p299 = por %p297, %p298
      %p300 = scmp.ne.s32.totalorder %s291, %s292
      %p301 = scmp.eq.s32.totalorder %s45, 0
      %p302 = por %p300, %p301
      %p303 = scmp.ne.s32.totalorder %s291, %s292
      %p304 = scmp.eq.s32.totalorder %s46, 1
      %p305 = por %p303, %p304
      %p307 = scmp.ne.s32.totalorder %s292, %s306
      %p308 = scmp.eq.s32.totalorder %s46, 0
      %p309 = por %p307, %p308
      %s311 = sadd.s32 %s310, 1
      %p314 = scmp.eq.s32.totalorder %s40, 1
      %p315 = scmp.ne.s32.totalorder %s310, %s312
      %p316 = scmp.eq.s32.totalorder %s40, 0
      %p317 = por %p315, %p316
      %p318 = scmp.ne.s32.totalorder %s310, %s312
      %p319 = scmp.eq.s32.totalorder %s45, 1
      %p320 = por %p318, %p319
      %p321 = scmp.ne.s32.totalorder %s312, %s313
      %p322 = scmp.eq.s32.totalorder %s45, 0
      %p323 = por %p321, %p322
      %p324 = scmp.ne.s32.totalorder %s312, %s313
      %p325 = scmp.eq.s32.totalorder %s46, 1
      %p326 = por %p324, %p325
      %p328 = scmp.ne.s32.totalorder %s313, %s327
      %p329 = scmp.eq.s32.totalorder %s46, 0
      %p330 = por %p328, %p329
      %s332 = sadd.s32 %s331, 1
      %p335 = scmp.eq.s32.totalorder %s40, 1
      %p336 = scmp.ne.s32.totalorder %s331, %s333
      %p337 = scmp.eq.s32.totalorder %s40, 0
      %p338 = por %p336, %p337
      %p339 = scmp.ne.s32.totalorder %s331, %s333
      %p340 = scmp.eq.s32.totalorder %s45, 1
      %p341 = por %p339, %p340
      %p342 = scmp.ne.s32.totalorder %s333, %s334
      %p343 = scmp.eq.s32.totalorder %s45, 0
      %p344 = por %p342, %p343
      %p345 = scmp.ne.s32.totalorder %s333, %s334
      %p346 = scmp.eq.s32.totalorder %s46, 1
      %p347 = por %p345, %p346
      %p349 = scmp.ne.s32.totalorder %s334, %s348
      %p350 = scmp.eq.s32.totalorder %s46, 0
      %p351 = por %p349, %p350
      %s353 = sadd.s32 %s352, 1
      %p356 = scmp.eq.s32.totalorder %s40, 1
      %p357 = scmp.ne.s32.totalorder %s352, %s354
      %p358 = scmp.eq.s32.totalorder %s40, 0
      %p359 = por %p357, %p358
      %p360 = scmp.ne.s32.totalorder %s352, %s354
      %p361 = scmp.eq.s32.totalorder %s45, 1
      %p362 = por %p360, %p361
      %p363 = scmp.ne.s32.totalorder %s354, %s355
      %p364 = scmp.eq.s32.totalorder %s45, 0
      %p365 = por %p363, %p364
      %p366 = scmp.ne.s32.totalorder %s354, %s355
      %p367 = scmp.eq.s32.totalorder %s46, 1
      %p368 = por %p366, %p367
      %p370 = scmp.ne.s32.totalorder %s355, %s369
      %p371 = scmp.eq.s32.totalorder %s46, 0
      %p372 = por %p370, %p371
      %s374 = sadd.s32 %s373, 1
      %p377 = scmp.eq.s32.totalorder %s40, 1
      %p378 = scmp.ne.s32.totalorder %s373, %s375
      %p379 = scmp.eq.s32.totalorder %s40, 0
      %p380 = por %p378, %p379
      %p381 = scmp.ne.s32.totalorder %s373, %s375
      %p382 = scmp.eq.s32.totalorder %s45, 1
      %p383 = por %p381, %p382
      %p384 = scmp.ne.s32.totalorder %s375, %s376
      %p385 = scmp.eq.s32.totalorder %s45, 0
      %p386 = por %p384, %p385
      %p387 = scmp.ne.s32.totalorder %s375, %s376
      %p388 = scmp.eq.s32.totalorder %s46, 1
      %p389 = por %p387, %p388
      %p391 = scmp.ne.s32.totalorder %s376, %s390
      %p392 = scmp.eq.s32.totalorder %s46, 0
      %p393 = por %p391, %p392
      %s394 = ssub.s32 %s40, %s47
      %p395 = scmp.eq.s32.totalorder %s394, 0
      %s397 = sadd.s32 %s396, 1
      %s398 = scalar_select %p395, %s396, %s397
      %p401 = pneg %p395
      %p402 = scmp.eq.s32.totalorder %s40, 1
      %p403 = por %p401, %p402
      %p404 = scmp.ne.s32.totalorder %s396, %s399
      %p405 = scmp.eq.s32.totalorder %s40, 0
      %p406 = por %p404, %p405
      %p407 = scmp.ne.s32.totalorder %s396, %s399
      %p408 = scmp.eq.s32.totalorder %s45, 1
      %p409 = por %p407, %p408
      %p410 = scmp.ne.s32.totalorder %s399, %s400
      %p411 = scmp.eq.s32.totalorder %s45, 0
      %p412 = por %p410, %p411
      %p413 = scmp.ne.s32.totalorder %s399, %s400
      %p414 = scmp.eq.s32.totalorder %s46, 1
      %p415 = por %p413, %p414
      %p417 = scmp.ne.s32.totalorder %s400, %s416
      %p418 = scmp.eq.s32.totalorder %s46, 0
      %p419 = por %p417, %p418
      %s420 = ssub.s32 %s40, %s47
      %p421 = scmp.eq.s32.totalorder %s420, 0
      %s423 = sadd.s32 %s422, 1
      %s424 = scalar_select %p421, %s422, %s423
      %p427 = pneg %p421
      %p428 = scmp.eq.s32.totalorder %s40, 1
      %p429 = por %p427, %p428
      %p430 = scmp.ne.s32.totalorder %s422, %s425
      %p431 = scmp.eq.s32.totalorder %s40, 0
      %p432 = por %p430, %p431
      %p433 = scmp.ne.s32.totalorder %s422, %s425
      %p434 = scmp.eq.s32.totalorder %s45, 1
      %p435 = por %p433, %p434
      %p436 = scmp.ne.s32.totalorder %s425, %s426
      %p437 = scmp.eq.s32.totalorder %s45, 0
      %p438 = por %p436, %p437
      %p439 = scmp.ne.s32.totalorder %s425, %s426
      %p440 = scmp.eq.s32.totalorder %s46, 1
      %p441 = por %p439, %p440
      %p443 = scmp.ne.s32.totalorder %s426, %s442
      %p444 = scmp.eq.s32.totalorder %s46, 0
      %p445 = por %p443, %p444
      %s446 = ssub.s32 %s40, %s47
      %p447 = scmp.eq.s32.totalorder %s446, 0
      %s449 = sadd.s32 %s448, 1
      %s450 = scalar_select %p447, %s448, %s449
      %p453 = pneg %p447
      %p454 = scmp.eq.s32.totalorder %s40, 1
      %p455 = por %p453, %p454
      %p456 = scmp.ne.s32.totalorder %s448, %s451
      %p457 = scmp.eq.s32.totalorder %s40, 0
      %p458 = por %p456, %p457
      %p459 = scmp.ne.s32.totalorder %s448, %s451
      %p460 = scmp.eq.s32.totalorder %s45, 1
      %p461 = por %p459, %p460
      %p462 = scmp.ne.s32.totalorder %s451, %s452
      %p463 = scmp.eq.s32.totalorder %s45, 0
      %p464 = por %p462, %p463
      %p465 = scmp.ne.s32.totalorder %s451, %s452
      %p466 = scmp.eq.s32.totalorder %s46, 1
      %p467 = por %p465, %p466
      %p469 = scmp.ne.s32.totalorder %s452, %s468
      %p470 = scmp.eq.s32.totalorder %s46, 0
      %p471 = por %p469, %p470
      %p472 = scmp.le.s32.totalorder 1, %s40
      %p473 = scmp.lt.s32.totalorder %s40, 3
      %p474 = pnand %p472, %p473
      %p475 = pneg %p474
      // Predicated region
      $region9: #{tpu_custom_call.1} parent=5 // pred_check
        _
      $region10: #{tpu_custom_call.1} parent=5 // pred_check_branch
        %477 = sbr.rel (%p474) target = $region12
      $region11: #{tpu_custom_call.1} parent=5 // pred_region
        %s478 = ssub.s32 %s40, 1
        // Predicated region
        $region13: #{tpu_custom_call.1} parent=11 // pred_check
          %p479 = pneg %p113
        $region14: #{tpu_custom_call.1} parent=11 // pred_check_branch
          %481 = sbr.rel (%p479) target = $region16
        $region15: #{tpu_custom_call.1} parent=11 // pred_region
          _
        $region16: #{tpu_custom_call.1} parent=11 // pred_fallthru
          _
        // Predicated region
        $region17: #{tpu_custom_call.1} parent=11 // pred_check
          %p482 = pneg %p134
        $region18: #{tpu_custom_call.1} parent=11 // pred_check_branch
          %484 = sbr.rel (%p482) target = $region20
        $region19: #{tpu_custom_call.1} parent=11 // pred_region
          _
        $region20: #{tpu_custom_call.1} parent=11 // pred_fallthru
          _
        // Predicated region
        $region21: #{tpu_custom_call.1} parent=11 // pred_check
          %p485 = pneg %p155
        $region22: #{tpu_custom_call.1} parent=11 // pred_check_branch
          %487 = sbr.rel (%p485) target = $region24
        $region23: #{tpu_custom_call.1} parent=11 // pred_region
          _
        $region24: #{tpu_custom_call.1} parent=11 // pred_fallthru
          _
        // Predicated region
        $region25: #{tpu_custom_call.1} parent=11 // pred_check
          %p488 = pneg %p176
        $region26: #{tpu_custom_call.1} parent=11 // pred_check_branch
          %490 = sbr.rel (%p488) target = $region28
        $region27: #{tpu_custom_call.1} parent=11 // pred_region
          _
        $region28: #{tpu_custom_call.1} parent=11 // pred_fallthru
          _
        // Predicated region
        $region29: #{tpu_custom_call.1} parent=11 // pred_check
          %p491 = pneg %p197
        $region30: #{tpu_custom_call.1} parent=11 // pred_check_branch
          %493 = sbr.rel (%p491) target = $region32
        $region31: #{tpu_custom_call.1} parent=11 // pred_region
          _
        $region32: #{tpu_custom_call.1} parent=11 // pred_fallthru
          _
        // Predicated region
        $region33: #{tpu_custom_call.1} parent=11 // pred_check
          %p494 = pneg %p218
        $region34: #{tpu_custom_call.1} parent=11 // pred_check_branch
          %496 = sbr.rel (%p494) target = $region36
        $region35: #{tpu_custom_call.1} parent=11 // pred_region
          _
        $region36: #{tpu_custom_call.1} parent=11 // pred_fallthru
          _
        // Predicated region
        $region37: #{tpu_custom_call.1} parent=11 // pred_check
          %p497 = pneg %p239
        $region38: #{tpu_custom_call.1} parent=11 // pred_check_branch
          %499 = sbr.rel (%p497) target = $region40
        $region39: #{tpu_custom_call.1} parent=11 // pred_region
          _
        $region40: #{tpu_custom_call.1} parent=11 // pred_fallthru
          _
        // Predicated region
        $region41: #{tpu_custom_call.1} parent=11 // pred_check
          %p500 = pneg %p260
        $region42: #{tpu_custom_call.1} parent=11 // pred_check_branch
          %502 = sbr.rel (%p500) target = $region44
        $region43: #{tpu_custom_call.1} parent=11 // pred_region
          _
        $region44: #{tpu_custom_call.1} parent=11 // pred_fallthru
          _
        // Predicated region
        $region45: #{tpu_custom_call.1} parent=11 // pred_check
          %p503 = pneg %p281
        $region46: #{tpu_custom_call.1} parent=11 // pred_check_branch
          %505 = sbr.rel (%p503) target = $region48
        $region47: #{tpu_custom_call.1} parent=11 // pred_region
          _
        $region48: #{tpu_custom_call.1} parent=11 // pred_fallthru
          _
        // Predicated region
        $region49: #{tpu_custom_call.1} parent=11 // pred_check
          %p506 = pneg %p302
        $region50: #{tpu_custom_call.1} parent=11 // pred_check_branch
          %508 = sbr.rel (%p506) target = $region52
        $region51: #{tpu_custom_call.1} parent=11 // pred_region
          _
        $region52: #{tpu_custom_call.1} parent=11 // pred_fallthru
          _
        // Predicated region
        $region53: #{tpu_custom_call.1} parent=11 // pred_check
          %p509 = pneg %p323
        $region54: #{tpu_custom_call.1} parent=11 // pred_check_branch
          %511 = sbr.rel (%p509) target = $region56
        $region55: #{tpu_custom_call.1} parent=11 // pred_region
          _
        $region56: #{tpu_custom_call.1} parent=11 // pred_fallthru
          _
        // Predicated region
        $region57: #{tpu_custom_call.1} parent=11 // pred_check
          %p512 = pneg %p344
        $region58: #{tpu_custom_call.1} parent=11 // pred_check_branch
          %514 = sbr.rel (%p512) target = $region60
        $region59: #{tpu_custom_call.1} parent=11 // pred_region
          _
        $region60: #{tpu_custom_call.1} parent=11 // pred_fallthru
          _
        // Predicated region
        $region61: #{tpu_custom_call.1} parent=11 // pred_check
          %p515 = pneg %p365
        $region62: #{tpu_custom_call.1} parent=11 // pred_check_branch
          %517 = sbr.rel (%p515) target = $region64
        $region63: #{tpu_custom_call.1} parent=11 // pred_region
          _
        $region64: #{tpu_custom_call.1} parent=11 // pred_fallthru
          _
        // Predicated region
        $region65: #{tpu_custom_call.1} parent=11 // pred_check
          %p518 = pneg %p386
        $region66: #{tpu_custom_call.1} parent=11 // pred_check_branch
          %520 = sbr.rel (%p518) target = $region68
        $region67: #{tpu_custom_call.1} parent=11 // pred_region
          _
        $region68: #{tpu_custom_call.1} parent=11 // pred_fallthru
          _
      $region12: #{tpu_custom_call.1} parent=5 // pred_fallthru
        _
      %p521 = scmp.lt.s32.totalorder %s40, 2
      // Predicated region
      $region69: #{tpu_custom_call.1} parent=5 // pred_check
        %p522 = pneg %p521
      $region70: #{tpu_custom_call.1} parent=5 // pred_check_branch
        %524 = sbr.rel (%p522) target = $region72
      $region71: #{tpu_custom_call.1} parent=5 // pred_region
        // Predicated region
        $region73: #{tpu_custom_call.1} parent=71 // pred_check
          %p525 = pneg %p60
        $region74: #{tpu_custom_call.1} parent=71 // pred_check_branch
          %527 = sbr.rel (%p525) target = $region76
        $region75: #{tpu_custom_call.1} parent=71 // pred_region
          %p528 = scmp.lt.s32.totalorder %s40, 1
          %s529 = scalar_select %p528, %s40, 1
          %s530 = smul.addr %s529, 4
          %s531 = smul.addr %s530, 4
          %s532 = scalar_lea.vmem %s1, %s531
        $region76: #{tpu_custom_call.1} parent=71 // pred_fallthru
          _
        // Predicated region
        $region77: #{tpu_custom_call.1} parent=71 // pred_check
          %p533 = pneg %p86
        $region78: #{tpu_custom_call.1} parent=71 // pred_check_branch
          %535 = sbr.rel (%p533) target = $region80
        $region79: #{tpu_custom_call.1} parent=71 // pred_region
          %p536 = scmp.lt.s32.totalorder %s40, 1
          %s537 = scalar_select %p536, %s40, 1
          %s538 = smul.addr %s537, 4
          %s539 = smul.addr %s538, 8
          %s540 = scalar_lea.vmem %s2, %s539
        $region80: #{tpu_custom_call.1} parent=71 // pred_fallthru
          _
      $region72: #{tpu_custom_call.1} parent=5 // pred_fallthru
        _
      %p541 = scmp.le.s32.totalorder 1, %s40
      %p542 = scmp.lt.s32.totalorder %s40, 3
      %p543 = pnand %p541, %p542
      %p544 = pneg %p543
      // Predicated region
      $region81: #{tpu_custom_call.1} parent=5 // pred_check
        _
      $region82: #{tpu_custom_call.1} parent=5 // pred_check_branch
        %546 = sbr.rel (%p543) target = $region84
      $region83: #{tpu_custom_call.1} parent=5 // pred_region
        %s547 = ssub.s32 %s40, 1
        %p548 = scmp.lt.s32.totalorder %s45, 1
        %s549 = scalar_select %p548, %s45, 1
        %s550 = smul.addr %s549, 4
        %s551 = smul.addr %s550, 4
        %s552 = scalar_lea.vmem %s1, %s551
        %p553 = pneg %p66
        %p554 = pneg %p63
        %p555 = scmp.lt.s32.totalorder %s45, 1
        %s556 = scalar_select %p555, %s45, 1
        %s557 = smul.addr %s556, 4
        %s558 = smul.addr %s557, 8
        %s559 = scalar_lea.vmem %s2, %s558
        %p560 = pneg %p92
        %p561 = pneg %p89
        %p562 = pneg %p113
        %p563 = pneg %p110
        %p564 = pneg %p134
        %p565 = pneg %p131
        %p566 = pneg %p155
        %p567 = pneg %p152
        %p568 = pneg %p176
        %p569 = pneg %p173
        %p570 = pneg %p197
        %p571 = pneg %p194
        %p572 = pneg %p218
        %p573 = pneg %p215
        %p574 = pneg %p239
        %p575 = pneg %p236
        %p576 = pneg %p260
        %p577 = pneg %p257
        %p578 = pneg %p281
        %p579 = pneg %p278
        %p580 = pneg %p302
        %p581 = pneg %p299
        %p582 = pneg %p323
        %p583 = pneg %p320
        %p584 = pneg %p344
        %p585 = pneg %p341
        %p586 = pneg %p365
        %p587 = pneg %p362
        %p588 = pneg %p386
        %p589 = pneg %p383
        %p590 = pneg %p412
        %p591 = pneg %p409
        %s592 = sand.u32 %s399, 1
        %s593 = scalar_lea.sflag [#allocation8], %s592
        %s594 = sand.u32 %s399, 1
        %s595 = smul.addr %s594, 32
        %s596 = scalar_lea.vmem [#allocation7], %s595
        %p597 = pneg %p438
        %p598 = pneg %p435
        %s599 = sand.u32 %s45, 1
        %s600 = scalar_lea.sflag [#allocation10], %s599
        %s601 = sand.u32 %s425, 1
        %s602 = smul.addr %s601, 32
        %s603 = scalar_lea.vmem [#allocation9], %s602
        %p604 = pneg %p464
        %p605 = pneg %p461
        %s606 = sand.u32 %s45, 1
        %s607 = scalar_lea.sflag [#allocation10], %s606
        %s608 = sand.u32 %s451, 1
        %s609 = smul.addr %s608, 32
        %s610 = scalar_lea.vmem [#allocation11], %s609
        %p611 = scmp.lt.s32.totalorder %s45, 1
        %s612 = scalar_select %p611, %s45, 1
        %s613 = smul.addr %s612, 4
        %s614 = smul.addr %s613, 4
        %s615 = scalar_lea.vmem %s1, %s614
        %p616 = scmp.lt.s32.totalorder %s45, 1
        %s617 = scalar_select %p616, %s45, 1
        %s618 = smul.addr %s617, 4
        %s619 = smul.addr %s618, 8
        %s620 = scalar_lea.vmem %s2, %s619
        %v622 = vlaneseq
        %v623 = vshrl.u32 %v622, 7
        %v624 = vadd.s32 %v623, 8
        %v625 = vadd.s32 %v623, 16
        %v626 = vadd.s32 %v623, 24
        %s627 = sld [smem:[#allocation6 + %s45]]
        %v628 = vstv %s627
        %vm629 = vcmp.lt.s32.totalorder %v623, %v628
        %vm630 = vcmp.lt.s32.totalorder %v624, %v628
        %vm631 = vcmp.lt.s32.totalorder %v625, %v628
        %vm632 = vcmp.lt.s32.totalorder %v626, %v628
        %v633 = vsel %vm629, 1, 0
        %v634 = vsel %vm630, 1, 0
        %v635 = vsel %vm631, 1, 0
        %v636 = vsel %vm632, 1, 0
        %v637 = vcvt.s32.f32 %v633
        %v638 = vcvt.s32.f32 %v634
        %v639 = vcvt.s32.f32 %v635
        %v640 = vcvt.s32.f32 %v636
        %v641 = vld [vmem:[%s615] sm:$0xf]
        %v642 = vld [vmem:[%s615 + $0x4] sm:$0xf]
        %v643 = vld [vmem:[%s615 + $0x8] sm:$0xf]
        %v644 = vld [vmem:[%s615 + $0xc] sm:$0xf]
        %v645 = vld [vmem:[%s3] sm:$0xf]
        %v646 = vld [vmem:[%s4] sm:$0x1]
        %v648 = vperm.slane %v646, 0
        %v654 = vunpack.c.l.b16 %v641
        %v655 = vunpack.c.l.b16 %v642
        %v656 = vunpack.c.l.b16 %v643
        %v657 = vunpack.c.l.b16 %v644
        %v658 = vpack.c.b16 %v655, %v654
        %v659 = vpack.c.b16 %v657, %v656
        %vm660 = vcmask 64512
        %v662 = vsel %vm660, %v658, 0
        %v665 = vsel %vm660, %v659, 0
        %vm667 = vcmask 1043456
        %v669 = vsel %vm667, %v645, 0
        %671 = vmatpush.bf16.msra.mxu0 0
        %672 = vmatpush.bf16.msra.mxu0 0
        %673 = vmatpush.bf16.msra.mxu0 0
        %674 = vmatpush.bf16.msra.mxu0 0
        %675 = vmatpush.bf16.msra.mxu0 0
        %676 = vmatpush.bf16.msra.mxu0 0
        %677 = vmatpush.bf16.msra.mxu0 0
        %678 = vmatpush.bf16.msra.mxu0 %v669
        %679 = vmatmul.bf16.gmra.mxu0 %v662
        %v680 = vpop.f32.mrf.mxu0
        %v681 = vadd.f32 %v648, %v680
        %v682 = vpop.f32.mrf.mxu0
        %v683 = vadd.f32 %v648, %v682
        %684 = vmatmul.bf16.gmra.mxu0 %v665
        %v685 = vpop.f32.mrf.mxu0
        %v686 = vadd.f32 %v648, %v685
        %v687 = vpop.f32.mrf.mxu0
        %v688 = vadd.f32 %v648, %v687
        %689 = vdwg.mxu0
        %v690 = vmul.f32 %v681, %v637
        %v691 = vmul.f32 %v683, %v638
        %v692 = vmul.f32 %v686, %v639
        %v693 = vmul.f32 %v688, %v640
        %vm694 = vcmask 130048
        %695 = vst.msk [vmem:[#allocation2] sm:$0xff] %vm694, 0.0
        %696 = vst.msk [vmem:[#allocation2 + $0x28] sm:$0xff] %vm694, 0.0
        %697 = vst.msk [vmem:[#allocation2 + $0x8] sm:$0xff] %vm694, %v690
        %698 = vst.msk [vmem:[#allocation2 + $0x10] sm:$0xff] %vm694, %v691
        %699 = vst.msk [vmem:[#allocation2 + $0x18] sm:$0xff] %vm694, %v692
        %700 = vst.msk [vmem:[#allocation2 + $0x20] sm:$0xff] %vm694, %v693
        %701 = vst.msk [vmem:[#allocation3] sm:$0xff] %vm694, 0.0
        %702 = vst.msk [vmem:[#allocation3 + $0x8] sm:$0xff] %vm694, 0.0
        %703 = vst.msk [vmem:[#allocation3 + $0x10] sm:$0xff] %vm694, 0.0
        %704 = vst.msk [vmem:[#allocation3 + $0x18] sm:$0xff] %vm694, 0.0
        %v705 = vld [vmem:[%s5] sm:$0xf]
        %v706 = vld [vmem:[%s5 + $0x4] sm:$0xf]
        %v707 = vld [vmem:[%s5 + $0x8] sm:$0xf]
        %v708 = vld [vmem:[%s5 + $0xc] sm:$0xf]
        %v709 = vld [vmem:[%s5 + $0x10] sm:$0xf]
        %v710 = vld [vmem:[%s5 + $0x14] sm:$0xf]
        %v711 = vld [vmem:[%s5 + $0x18] sm:$0xf]
        %v712 = vld [vmem:[%s5 + $0x1c] sm:$0xf]
        %v713 = vld [vmem:[%s5 + $0x20] sm:$0xf]
        %v714 = vld [vmem:[%s5 + $0x24] sm:$0xf]
        %v715 = vld [vmem:[%s6] sm:$0xf]
        %v716 = vld [vmem:[%s6 + $0x4] sm:$0xf]
        %v717 = vld [vmem:[%s6 + $0x8] sm:$0xf]
        %v718 = vld [vmem:[%s6 + $0xc] sm:$0xf]
        %v719 = vld [vmem:[%s6 + $0x10] sm:$0xf]
        %v720 = vld [vmem:[%s6 + $0x14] sm:$0xf]
        %v721 = vld [vmem:[%s6 + $0x18] sm:$0xf]
        %v722 = vld [vmem:[%s6 + $0x1c] sm:$0xf]
        %v723 = vld [vmem:[%s6 + $0x20] sm:$0xf]
        %v724 = vld [vmem:[%s6 + $0x24] sm:$0xf]
        %v725 = vld [vmem:[#allocation2 + $0x6] sm:$0xff]
        %v726 = vld [vmem:[#allocation2 + $0xe] sm:$0xff]
        %v727 = vld [vmem:[#allocation2 + $0x16] sm:$0xff]
        %v728 = vld [vmem:[#allocation2 + $0x1e] sm:$0xff]
        %v729 = vpack.c.bf16 %v725, %v725
        %v730 = vpack.c.bf16 %v726, %v726
        %v731 = vpack.c.bf16 %v727, %v727
        %v732 = vpack.c.bf16 %v728, %v728
        %vm733 = vcmask 125952
        %734 = vst.msk [vmem:[#allocation4] sm:$0xf] %vm733, %v729
        %735 = vst.msk [vmem:[#allocation4 + $0x4] sm:$0xf] %vm733, %v730
        %736 = vst.msk [vmem:[#allocation4 + $0x8] sm:$0xf] %vm733, %v731
        %737 = vst.msk [vmem:[#allocation4 + $0xc] sm:$0xf] %vm733, %v732
        %v738 = vld [vmem:[#allocation2 + $0x7] sm:$0xff]
        %v739 = vld [vmem:[#allocation2 + $0xf] sm:$0xff]
        %v740 = vld [vmem:[#allocation2 + $0x17] sm:$0xff]
        %v741 = vld [vmem:[#allocation2 + $0x1f] sm:$0xff]
        %v742 = vpack.c.bf16 %v738, %v738
        %v743 = vpack.c.bf16 %v739, %v739
        %v744 = vpack.c.bf16 %v740, %v740
        %v745 = vpack.c.bf16 %v741, %v741
        %750 = vrot.lane.b32.xlu0 %v742, 16
        %v751 = vpop.permute.xlu0 %750
        %752 = vrot.lane.b32.xlu0 %v743, 16
        %v753 = vpop.permute.xlu0 %752
        %754 = vrot.lane.b32.xlu0 %v744, 16
        %v755 = vpop.permute.xlu0 %754
        %756 = vrot.lane.b32.xlu0 %v745, 16
        %v757 = vpop.permute.xlu0 %756
        %vm762 = vcmask 257152
        %763 = vst.msk [vmem:[#allocation4] sm:$0xf] %vm762, %v751
        %764 = vst.msk [vmem:[#allocation4 + $0x4] sm:$0xf] %vm762, %v753
        %765 = vst.msk [vmem:[#allocation4 + $0x8] sm:$0xf] %vm762, %v755
        %766 = vst.msk [vmem:[#allocation4 + $0xc] sm:$0xf] %vm762, %v757
        %v767 = vld [vmem:[#allocation2 + $0x8] sm:$0xff]
        %v768 = vld [vmem:[#allocation2 + $0x10] sm:$0xff]
        %v769 = vld [vmem:[#allocation2 + $0x18] sm:$0xff]
        %v770 = vld [vmem:[#allocation2 + $0x20] sm:$0xff]
        %v771 = vpack.c.bf16 %v767, %v767
        %v772 = vpack.c.bf16 %v768, %v768
        %v773 = vpack.c.bf16 %v769, %v769
        %v774 = vpack.c.bf16 %v770, %v770
        %779 = vrot.lane.b32.xlu0 %v771, 32
        %v780 = vpop.permute.xlu0 %779
        %781 = vrot.lane.b32.xlu0 %v772, 32
        %v782 = vpop.permute.xlu0 %781
        %783 = vrot.lane.b32.xlu0 %v773, 32
        %v784 = vpop.permute.xlu0 %783
        %785 = vrot.lane.b32.xlu0 %v774, 32
        %v786 = vpop.permute.xlu0 %785
        %vm791 = vcmask 388352
        %792 = vst.msk [vmem:[#allocation4] sm:$0xf] %vm791, %v780
        %793 = vst.msk [vmem:[#allocation4 + $0x4] sm:$0xf] %vm791, %v782
        %794 = vst.msk [vmem:[#allocation4 + $0x8] sm:$0xf] %vm791, %v784
        %795 = vst.msk [vmem:[#allocation4 + $0xc] sm:$0xf] %vm791, %v786
        %v796 = vld [vmem:[#allocation2 + $0x9] sm:$0xff]
        %v797 = vld [vmem:[#allocation2 + $0x11] sm:$0xff]
        %v798 = vld [vmem:[#allocation2 + $0x19] sm:$0xff]
        %v799 = vld [vmem:[#allocation2 + $0x21] sm:$0xff]
        %v800 = vpack.c.bf16 %v796, %v796
        %v801 = vpack.c.bf16 %v797, %v797
        %v802 = vpack.c.bf16 %v798, %v798
        %v803 = vpack.c.bf16 %v799, %v799
        %808 = vrot.lane.b32.xlu0 %v800, 48
        %v809 = vpop.permute.xlu0 %808
        %810 = vrot.lane.b32.xlu0 %v801, 48
        %v811 = vpop.permute.xlu0 %810
        %812 = vrot.lane.b32.xlu0 %v802, 48
        %v813 = vpop.permute.xlu0 %812
        %814 = vrot.lane.b32.xlu0 %v803, 48
        %v815 = vpop.permute.xlu0 %814
        %vm820 = vcmask 519552
        %821 = vst.msk [vmem:[#allocation4] sm:$0xf] %vm820, %v809
        %822 = vst.msk [vmem:[#allocation4 + $0x4] sm:$0xf] %vm820, %v811
        %823 = vst.msk [vmem:[#allocation4 + $0x8] sm:$0xf] %vm820, %v813
        %824 = vst.msk [vmem:[#allocation4 + $0xc] sm:$0xf] %vm820, %v815
        %v825 = vld [vmem:[#allocation2 + $0xa] sm:$0xff]
        %v826 = vld [vmem:[#allocation2 + $0x12] sm:$0xff]
        %v827 = vld [vmem:[#allocation2 + $0x1a] sm:$0xff]
        %v828 = vld [vmem:[#allocation2 + $0x22] sm:$0xff]
        %v829 = vpack.c.bf16 %v825, %v825
        %v830 = vpack.c.bf16 %v826, %v826
        %v831 = vpack.c.bf16 %v827, %v827
        %v832 = vpack.c.bf16 %v828, %v828
        %837 = vrot.lane.b32.xlu0 %v829, 64
        %v838 = vpop.permute.xlu0 %837
        %839 = vrot.lane.b32.xlu0 %v830, 64
        %v840 = vpop.permute.xlu0 %839
        %841 = vrot.lane.b32.xlu0 %v831, 64
        %v842 = vpop.permute.xlu0 %841
        %843 = vrot.lane.b32.xlu0 %v832, 64
        %v844 = vpop.permute.xlu0 %843
        %vm849 = vcmask 650752
        %850 = vst.msk [vmem:[#allocation4] sm:$0xf] %vm849, %v838
        %851 = vst.msk [vmem:[#allocation4 + $0x4] sm:$0xf] %vm849, %v840
        %852 = vst.msk [vmem:[#allocation4 + $0x8] sm:$0xf] %vm849, %v842
        %853 = vst.msk [vmem:[#allocation4 + $0xc] sm:$0xf] %vm849, %v844
        %v854 = vld [vmem:[#allocation4] sm:$0xf]
        %v855 = vld [vmem:[#allocation4 + $0x4] sm:$0xf]
        %v856 = vld [vmem:[#allocation4 + $0x8] sm:$0xf]
        %v857 = vld [vmem:[#allocation4 + $0xc] sm:$0xf]
        %v858 = vld [vmem:[%s7] sm:$0x1]
        %v860 = vperm.slane %v858, 0
        %v866 = vunpack.c.l.b16 %v854
        %v867 = vunpack.c.l.b16 %v855
        %v868 = vunpack.c.l.b16 %v856
        %v869 = vunpack.c.l.b16 %v857
        %v870 = vpack.c.b16 %v867, %v866
        %v871 = vpack.c.b16 %v869, %v868
        %v882 = vunpack.c.l.b16 %v705
        %v883 = vunpack.c.l.b16 %v706
        %v884 = vunpack.c.l.b16 %v707
        %v885 = vunpack.c.l.b16 %v708
        %v886 = vunpack.c.l.b16 %v709
        %v887 = vunpack.c.l.b16 %v710
        %v888 = vunpack.c.l.b16 %v711
        %v889 = vunpack.c.l.b16 %v712
        %v890 = vunpack.c.l.b16 %v713
        %v891 = vunpack.c.l.b16 %v714
        %v892 = vpack.c.b16 %v883, %v882
        %v893 = vpack.c.b16 %v885, %v884
        %v894 = vpack.c.b16 %v887, %v886
        %v895 = vpack.c.b16 %v889, %v888
        %v896 = vpack.c.b16 %v891, %v890
        %vm902 = vcmask 654336
        %v904 = vsel %vm902, %v870, 0
        %v907 = vsel %vm902, %v871, 0
        %909 = vmatpush.bf16.msra.mxu0 0
        %910 = vmatpush.bf16.msra.mxu0 0
        %911 = vmatpush.bf16.msra.mxu0 0
        %912 = vmatpush.bf16.msra.mxu0 %v896
        %913 = vmatpush.bf16.msra.mxu0 %v895
        %914 = vmatpush.bf16.msra.mxu0 %v894
        %915 = vmatpush.bf16.msra.mxu0 %v893
        %916 = vmatpush.bf16.msra.mxu0 %v892
        %917 = vmatmul.bf16.gmra.mxu0 %v904
        %v918 = vpop.f32.mrf.mxu0
        %v919 = vadd.f32 %v860, %v918
        %v920 = vpop.f32.mrf.mxu0
        %v921 = vadd.f32 %v860, %v920
        %922 = vmatmul.bf16.gmra.mxu0 %v907
        %v923 = vpop.f32.mrf.mxu0
        %v924 = vadd.f32 %v860, %v923
        %v925 = vpop.f32.mrf.mxu0
        %v926 = vadd.f32 %v860, %v925
        %927 = vdwg.mxu0
        %v928 = vld [vmem:[%s8] sm:$0x1]
        %v930 = vperm.slane %v928, 0
        %v942 = vunpack.c.l.b16 %v715
        %v943 = vunpack.c.l.b16 %v716
        %v944 = vunpack.c.l.b16 %v717
        %v945 = vunpack.c.l.b16 %v718
        %v946 = vunpack.c.l.b16 %v719
        %v947 = vunpack.c.l.b16 %v720
        %v948 = vunpack.c.l.b16 %v721
        %v949 = vunpack.c.l.b16 %v722
        %v950 = vunpack.c.l.b16 %v723
        %v951 = vunpack.c.l.b16 %v724
        %v952 = vpack.c.b16 %v943, %v942
        %v953 = vpack.c.b16 %v945, %v944
        %v954 = vpack.c.b16 %v947, %v946
        %v955 = vpack.c.b16 %v949, %v948
        %v956 = vpack.c.b16 %v951, %v950
        %962 = vmatpush.bf16.msra.mxu0 0
        %963 = vmatpush.bf16.msra.mxu0 0
        %964 = vmatpush.bf16.msra.mxu0 0
        %965 = vmatpush.bf16.msra.mxu0 %v956
        %966 = vmatpush.bf16.msra.mxu0 %v955
        %967 = vmatpush.bf16.msra.mxu0 %v954
        %968 = vmatpush.bf16.msra.mxu0 %v953
        %969 = vmatpush.bf16.msra.mxu0 %v952
        %970 = vmatmul.bf16.gmra.mxu0 %v904
        %v971 = vpop.f32.mrf.mxu0
        %v972 = vadd.f32 %v930, %v971
        %v973 = vpop.f32.mrf.mxu0
        %v974 = vadd.f32 %v930, %v973
        %975 = vmatmul.bf16.gmra.mxu0 %v907
        %v976 = vpop.f32.mrf.mxu0
        %v977 = vadd.f32 %v930, %v976
        %v978 = vpop.f32.mrf.mxu0
        %v979 = vadd.f32 %v930, %v978
        %980 = vdwg.mxu0
        %v981 = vtanh.pop %v919
        %v982 = vtanh.pop %v921
        %v983 = vtanh.pop %v924
        %v984 = vtanh.pop %v926
        %v985 = vxor.u32 %v972, 2147483648
        %v986 = vxor.u32 %v974, 2147483648
        %v987 = vxor.u32 %v977, 2147483648
        %v988 = vxor.u32 %v979, 2147483648
        %v989 = vmul.f32 %v985, 1.442695
        %v990 = vpow.pop %v989
        %v991 = vmul.f32 %v986, 1.442695
        %v992 = vpow.pop %v991
        %v993 = vmul.f32 %v987, 1.442695
        %v994 = vpow.pop %v993
        %v995 = vmul.f32 %v988, 1.442695
        %v996 = vpow.pop %v995
        %v997 = vadd.f32 %v990, 1.0
        %v998 = vadd.f32 %v992, 1.0
        %v999 = vadd.f32 %v994, 1.0
        %v1000 = vadd.f32 %v996, 1.0
        %v1001 = vrcp.pop %v997
        %v1002 = vmul.f32 %v997, %v1001
        %v1003 = vsub.f32 1.0, %v1002
        %v1004 = vmul.f32 %v1001, %v1003
        %v1005 = vadd.f32 %v1001, %v1004
        %vm1006 = vweird.f32 %v997
        %vm1007 = vweird.f32 %v1001
        %vm1008 = vmor %vm1006, %vm1007
        %v1009 = vsel %vm1008, %v1001, %v1005
        %v1010 = vand.u32 2147483647, %v997
        %vm1011 = vcmp.eq.f32.partialorder %v1010, 8.507059e+37
        %v1012 = vand.u32 %v997, 2147483648
        %v1013 = vor.u32 1.1754944e-38, %v1012
        %v1014 = vsel %vm1011, %v1013, %v1009
        %v1015 = vmul.f32 1.0, %v1014
        %v1016 = vrcp.pop %v998
        %v1017 = vmul.f32 %v998, %v1016
        %v1018 = vsub.f32 1.0, %v1017
        %v1019 = vmul.f32 %v1016, %v1018
        %v1020 = vadd.f32 %v1016, %v1019
        %vm1021 = vweird.f32 %v998
        %vm1022 = vweird.f32 %v1016
        %vm1023 = vmor %vm1021, %vm1022
        %v1024 = vsel %vm1023, %v1016, %v1020
        %v1025 = vand.u32 2147483647, %v998
        %vm1026 = vcmp.eq.f32.partialorder %v1025, 8.507059e+37
        %v1027 = vand.u32 %v998, 2147483648
        %v1028 = vor.u32 1.1754944e-38, %v1027
        %v1029 = vsel %vm1026, %v1028, %v1024
        %v1030 = vmul.f32 1.0, %v1029
        %v1031 = vrcp.pop %v999
        %v1032 = vmul.f32 %v999, %v1031
        %v1033 = vsub.f32 1.0, %v1032
        %v1034 = vmul.f32 %v1031, %v1033
        %v1035 = vadd.f32 %v1031, %v1034
        %vm1036 = vweird.f32 %v999
        %vm1037 = vweird.f32 %v1031
        %vm1038 = vmor %vm1036, %vm1037
        %v1039 = vsel %vm1038, %v1031, %v1035
        %v1040 = vand.u32 2147483647, %v999
        %vm1041 = vcmp.eq.f32.partialorder %v1040, 8.507059e+37
        %v1042 = vand.u32 %v999, 2147483648
        %v1043 = vor.u32 1.1754944e-38, %v1042
        %v1044 = vsel %vm1041, %v1043, %v1039
        %v1045 = vmul.f32 1.0, %v1044
        %v1046 = vrcp.pop %v1000
        %v1047 = vmul.f32 %v1000, %v1046
        %v1048 = vsub.f32 1.0, %v1047
        %v1049 = vmul.f32 %v1046, %v1048
        %v1050 = vadd.f32 %v1046, %v1049
        %vm1051 = vweird.f32 %v1000
        %vm1052 = vweird.f32 %v1046
        %vm1053 = vmor %vm1051, %vm1052
        %v1054 = vsel %vm1053, %v1046, %v1050
        %v1055 = vand.u32 2147483647, %v1000
        %vm1056 = vcmp.eq.f32.partialorder %v1055, 8.507059e+37
        %v1057 = vand.u32 %v1000, 2147483648
        %v1058 = vor.u32 1.1754944e-38, %v1057
        %v1059 = vsel %vm1056, %v1058, %v1054
        %v1060 = vmul.f32 1.0, %v1059
        %v1061 = vmul.f32 %v981, %v1015
        %v1062 = vmul.f32 %v982, %v1030
        %v1063 = vmul.f32 %v983, %v1045
        %v1064 = vmul.f32 %v984, %v1060
        %v1065 = vpack.c.bf16 %v1062, %v1061
        %v1066 = vpack.c.bf16 %v1064, %v1063
        %v1067 = vld [vmem:[#allocation3] sm:$0xff]
        %v1068 = vld [vmem:[#allocation3 + $0x8] sm:$0xff]
        %v1069 = vld [vmem:[#allocation3 + $0x10] sm:$0xff]
        %v1070 = vld [vmem:[#allocation3 + $0x18] sm:$0xff]
        %v1071 = vld [vmem:[%s11] sm:$0xf]
        %v1072 = vld [vmem:[%s11 + $0x4] sm:$0xf]
        %v1073 = vld [vmem:[%s12] sm:$0x1]
        %v1075 = vperm.slane %v1073, 0
        %v1079 = vunpack.c.l.b16 %v1071
        %v1080 = vunpack.c.l.b16 %v1072
        %v1081 = vpack.c.b16 %v1080, %v1079
        %v1084 = vsel %vm694, %v1065, 0
        %v1087 = vsel %vm694, %v1066, 0
        %1089 = vmatpush.bf16.msra.mxu0 0
        %1090 = vmatpush.bf16.msra.mxu0 0
        %1091 = vmatpush.bf16.msra.mxu0 0
        %1092 = vmatpush.bf16.msra.mxu0 0
        %1093 = vmatpush.bf16.msra.mxu0 0
        %1094 = vmatpush.bf16.msra.mxu0 0
        %1095 = vmatpush.bf16.msra.mxu0 0
        %1096 = vmatpush.bf16.msra.mxu0 %v1081
        %1097 = vmatmul.bf16.gmra.mxu0 %v1084
        %v1098 = vpop.f32.mrf.mxu0
        %v1099 = vadd.f32 %v1075, %v1098
        %v1100 = vpop.f32.mrf.mxu0
        %v1101 = vadd.f32 %v1075, %v1100
        %1102 = vmatmul.bf16.gmra.mxu0 %v1087
        %v1103 = vpop.f32.mrf.mxu0
        %v1104 = vadd.f32 %v1075, %v1103
        %v1105 = vpop.f32.mrf.mxu0
        %v1106 = vadd.f32 %v1075, %v1105
        %1107 = vdwg.mxu0
        %v1108 = vadd.f32 %v1067, %v1099
        %v1109 = vadd.f32 %v1068, %v1101
        %v1110 = vadd.f32 %v1069, %v1104
        %v1111 = vadd.f32 %v1070, %v1106
        %1112 = vst.msk [vmem:[#allocation3] sm:$0xff] %vm694, %v1108
        %1113 = vst.msk [vmem:[#allocation3 + $0x8] sm:$0xff] %vm694, %v1109
        %1114 = vst.msk [vmem:[#allocation3 + $0x10] sm:$0xff] %vm694, %v1110
        %1115 = vst.msk [vmem:[#allocation3 + $0x18] sm:$0xff] %vm694, %v1111
        %v1116 = vld [vmem:[%s9] sm:$0xf]
        %v1117 = vld [vmem:[%s9 + $0x4] sm:$0xf]
        %v1118 = vld [vmem:[%s10] sm:$0x1]
        %v1120 = vperm.slane %v1118, 0
        %v1124 = vunpack.c.l.b16 %v1116
        %v1125 = vunpack.c.l.b16 %v1117
        %v1126 = vpack.c.b16 %v1125, %v1124
        %1128 = vmatpush.bf16.msra.mxu0 0
        %1129 = vmatpush.bf16.msra.mxu0 0
        %1130 = vmatpush.bf16.msra.mxu0 0
        %1131 = vmatpush.bf16.msra.mxu0 0
        %1132 = vmatpush.bf16.msra.mxu0 0
        %1133 = vmatpush.bf16.msra.mxu0 0
        %1134 = vmatpush.bf16.msra.mxu0 0
        %1135 = vmatpush.bf16.msra.mxu0 %v1126
        %1136 = vmatmul.bf16.gmra.mxu0 %v1084
        %v1137 = vpop.f32.mrf.mxu0
        %v1138 = vadd.f32 %v1120, %v1137
        %v1139 = vpop.f32.mrf.mxu0
        %v1140 = vadd.f32 %v1120, %v1139
        %1141 = vmatmul.bf16.gmra.mxu0 %v1087
        %v1142 = vpop.f32.mrf.mxu0
        %v1143 = vadd.f32 %v1120, %v1142
        %v1144 = vpop.f32.mrf.mxu0
        %v1145 = vadd.f32 %v1120, %v1144
        %1146 = vdwg.mxu0
        %v1147 = vld [vmem:[#allocation2 + $0x8] sm:$0xff]
        %v1148 = vld [vmem:[#allocation2 + $0x10] sm:$0xff]
        %v1149 = vld [vmem:[#allocation2 + $0x18] sm:$0xff]
        %v1150 = vld [vmem:[#allocation2 + $0x20] sm:$0xff]
        %v1151 = vadd.f32 %v1147, %v1138
        %v1152 = vadd.f32 %v1148, %v1140
        %v1153 = vadd.f32 %v1149, %v1143
        %v1154 = vadd.f32 %v1150, %v1145
        %v1155 = vmul.f32 %v1151, %v637
        %v1156 = vmul.f32 %v1152, %v638
        %v1157 = vmul.f32 %v1153, %v639
        %v1158 = vmul.f32 %v1154, %v640
        %1159 = vst.msk [vmem:[#allocation2 + $0x8] sm:$0xff] %vm694, %v1155
        %1160 = vst.msk [vmem:[#allocation2 + $0x10] sm:$0xff] %vm694, %v1156
        %1161 = vst.msk [vmem:[#allocation2 + $0x18] sm:$0xff] %vm694, %v1157
        %1162 = vst.msk [vmem:[#allocation2 + $0x20] sm:$0xff] %vm694, %v1158
        %s1163 = scalar_lea.vmem %s5, 40
        %v1164 = vld [vmem:[%s1163] sm:$0xf]
        %v1165 = vld [vmem:[%s1163 + $0x4] sm:$0xf]
        %v1166 = vld [vmem:[%s1163 + $0x8] sm:$0xf]
        %v1167 = vld [vmem:[%s1163 + $0xc] sm:$0xf]
        %v1168 = vld [vmem:[%s1163 + $0x10] sm:$0xf]
        %v1169 = vld [vmem:[%s1163 + $0x14] sm:$0xf]
        %v1170 = vld [vmem:[%s1163 + $0x18] sm:$0xf]
        %v1171 = vld [vmem:[%s1163 + $0x1c] sm:$0xf]
        %v1172 = vld [vmem:[%s1163 + $0x20] sm:$0xf]
        %v1173 = vld [vmem:[%s1163 + $0x24] sm:$0xf]
        %s1174 = scalar_lea.vmem %s6, 40
        %v1175 = vld [vmem:[%s1174] sm:$0xf]
        %v1176 = vld [vmem:[%s1174 + $0x4] sm:$0xf]
        %v1177 = vld [vmem:[%s1174 + $0x8] sm:$0xf]
        %v1178 = vld [vmem:[%s1174 + $0xc] sm:$0xf]
        %v1179 = vld [vmem:[%s1174 + $0x10] sm:$0xf]
        %v1180 = vld [vmem:[%s1174 + $0x14] sm:$0xf]
        %v1181 = vld [vmem:[%s1174 + $0x18] sm:$0xf]
        %v1182 = vld [vmem:[%s1174 + $0x1c] sm:$0xf]
        %v1183 = vld [vmem:[%s1174 + $0x20] sm:$0xf]
        %v1184 = vld [vmem:[%s1174 + $0x24] sm:$0xf]
        %v1185 = vld [vmem:[#allocation2 + $0x4] sm:$0xff]
        %v1186 = vld [vmem:[#allocation2 + $0xc] sm:$0xff]
        %v1187 = vld [vmem:[#allocation2 + $0x14] sm:$0xff]
        %v1188 = vld [vmem:[#allocation2 + $0x1c] sm:$0xff]
        %v1189 = vpack.c.bf16 %v1185, %v1185
        %v1190 = vpack.c.bf16 %v1186, %v1186
        %v1191 = vpack.c.bf16 %v1187, %v1187
        %v1192 = vpack.c.bf16 %v1188, %v1188
        %1193 = vst.msk [vmem:[#allocation4] sm:$0xf] %vm733, %v1189
        %1194 = vst.msk [vmem:[#allocation4 + $0x4] sm:$0xf] %vm733, %v1190
        %1195 = vst.msk [vmem:[#allocation4 + $0x8] sm:$0xf] %vm733, %v1191
        %1196 = vst.msk [vmem:[#allocation4 + $0xc] sm:$0xf] %vm733, %v1192
        %v1197 = vld [vmem:[#allocation2 + $0x6] sm:$0xff]
        %v1198 = vld [vmem:[#allocation2 + $0xe] sm:$0xff]
        %v1199 = vld [vmem:[#allocation2 + $0x16] sm:$0xff]
        %v1200 = vld [vmem:[#allocation2 + $0x1e] sm:$0xff]
        %v1201 = vpack.c.bf16 %v1197, %v1197
        %v1202 = vpack.c.bf16 %v1198, %v1198
        %v1203 = vpack.c.bf16 %v1199, %v1199
        %v1204 = vpack.c.bf16 %v1200, %v1200
        %1209 = vrot.lane.b32.xlu0 %v1201, 16
        %v1210 = vpop.permute.xlu0 %1209
        %1211 = vrot.lane.b32.xlu0 %v1202, 16
        %v1212 = vpop.permute.xlu0 %1211
        %1213 = vrot.lane.b32.xlu0 %v1203, 16
        %v1214 = vpop.permute.xlu0 %1213
        %1215 = vrot.lane.b32.xlu0 %v1204, 16
        %v1216 = vpop.permute.xlu0 %1215
        %1221 = vst.msk [vmem:[#allocation4] sm:$0xf] %vm762, %v1210
        %1222 = vst.msk [vmem:[#allocation4 + $0x4] sm:$0xf] %vm762, %v1212
        %1223 = vst.msk [vmem:[#allocation4 + $0x8] sm:$0xf] %vm762, %v1214
        %1224 = vst.msk [vmem:[#allocation4 + $0xc] sm:$0xf] %vm762, %v1216
        %v1225 = vld [vmem:[#allocation2 + $0x8] sm:$0xff]
        %v1226 = vld [vmem:[#allocation2 + $0x10] sm:$0xff]
        %v1227 = vld [vmem:[#allocation2 + $0x18] sm:$0xff]
        %v1228 = vld [vmem:[#allocation2 + $0x20] sm:$0xff]
        %v1229 = vpack.c.bf16 %v1225, %v1225
        %v1230 = vpack.c.bf16 %v1226, %v1226
        %v1231 = vpack.c.bf16 %v1227, %v1227
        %v1232 = vpack.c.bf16 %v1228, %v1228
        %1237 = vrot.lane.b32.xlu0 %v1229, 32
        %v1238 = vpop.permute.xlu0 %1237
        %1239 = vrot.lane.b32.xlu0 %v1230, 32
        %v1240 = vpop.permute.xlu0 %1239
        %1241 = vrot.lane.b32.xlu0 %v1231, 32
        %v1242 = vpop.permute.xlu0 %1241
        %1243 = vrot.lane.b32.xlu0 %v1232, 32
        %v1244 = vpop.permute.xlu0 %1243
        %1249 = vst.msk [vmem:[#allocation4] sm:$0xf] %vm791, %v1238
        %1250 = vst.msk [vmem:[#allocation4 + $0x4] sm:$0xf] %vm791, %v1240
        %1251 = vst.msk [vmem:[#allocation4 + $0x8] sm:$0xf] %vm791, %v1242
        %1252 = vst.msk [vmem:[#allocation4 + $0xc] sm:$0xf] %vm791, %v1244
        %v1253 = vld [vmem:[#allocation2 + $0xa] sm:$0xff]
        %v1254 = vld [vmem:[#allocation2 + $0x12] sm:$0xff]
        %v1255 = vld [vmem:[#allocation2 + $0x1a] sm:$0xff]
        %v1256 = vld [vmem:[#allocation2 + $0x22] sm:$0xff]
        %v1257 = vpack.c.bf16 %v1253, %v1253
        %v1258 = vpack.c.bf16 %v1254, %v1254
        %v1259 = vpack.c.bf16 %v1255, %v1255
        %v1260 = vpack.c.bf16 %v1256, %v1256
        %1265 = vrot.lane.b32.xlu0 %v1257, 48
        %v1266 = vpop.permute.xlu0 %1265
        %1267 = vrot.lane.b32.xlu0 %v1258, 48
        %v1268 = vpop.permute.xlu0 %1267
        %1269 = vrot.lane.b32.xlu0 %v1259, 48
        %v1270 = vpop.permute.xlu0 %1269
        %1271 = vrot.lane.b32.xlu0 %v1260, 48
        %v1272 = vpop.permute.xlu0 %1271
        %1277 = vst.msk [vmem:[#allocation4] sm:$0xf] %vm820, %v1266
        %1278 = vst.msk [vmem:[#allocation4 + $0x4] sm:$0xf] %vm820, %v1268
        %1279 = vst.msk [vmem:[#allocation4 + $0x8] sm:$0xf] %vm820, %v1270
        %1280 = vst.msk [vmem:[#allocation4 + $0xc] sm:$0xf] %vm820, %v1272
        %v1281 = vld [vmem:[#allocation2 + $0xc] sm:$0xff]
        %v1282 = vld [vmem:[#allocation2 + $0x14] sm:$0xff]
        %v1283 = vld [vmem:[#allocation2 + $0x1c] sm:$0xff]
        %v1284 = vld [vmem:[#allocation2 + $0x24] sm:$0xff]
        %v1285 = vpack.c.bf16 %v1281, %v1281
        %v1286 = vpack.c.bf16 %v1282, %v1282
        %v1287 = vpack.c.bf16 %v1283, %v1283
        %v1288 = vpack.c.bf16 %v1284, %v1284
        %1293 = vrot.lane.b32.xlu0 %v1285, 64
        %v1294 = vpop.permute.xlu0 %1293
        %1295 = vrot.lane.b32.xlu0 %v1286, 64
        %v1296 = vpop.permute.xlu0 %1295
        %1297 = vrot.lane.b32.xlu0 %v1287, 64
        %v1298 = vpop.permute.xlu0 %1297
        %1299 = vrot.lane.b32.xlu0 %v1288, 64
        %v1300 = vpop.permute.xlu0 %1299
        %1305 = vst.msk [vmem:[#allocation4] sm:$0xf] %vm849, %v1294
        %1306 = vst.msk [vmem:[#allocation4 + $0x4] sm:$0xf] %vm849, %v1296
        %1307 = vst.msk [vmem:[#allocation4 + $0x8] sm:$0xf] %vm849, %v1298
        %1308 = vst.msk [vmem:[#allocation4 + $0xc] sm:$0xf] %vm849, %v1300
        %v1309 = vld [vmem:[#allocation4] sm:$0xf]
        %v1310 = vld [vmem:[#allocation4 + $0x4] sm:$0xf]
        %v1311 = vld [vmem:[#allocation4 + $0x8] sm:$0xf]
        %v1312 = vld [vmem:[#allocation4 + $0xc] sm:$0xf]
        %s1313 = scalar_lea.vmem %s7, 1
        %v1314 = vld [vmem:[%s1313] sm:$0x1]
        %v1316 = vperm.slane %v1314, 0
        %v1322 = vunpack.c.l.b16 %v1309
        %v1323 = vunpack.c.l.b16 %v1310
        %v1324 = vunpack.c.l.b16 %v1311
        %v1325 = vunpack.c.l.b16 %v1312
        %v1326 = vpack.c.b16 %v1323, %v1322
        %v1327 = vpack.c.b16 %v1325, %v1324
        %v1338 = vunpack.c.l.b16 %v1164
        %v1339 = vunpack.c.l.b16 %v1165
        %v1340 = vunpack.c.l.b16 %v1166
        %v1341 = vunpack.c.l.b16 %v1167
        %v1342 = vunpack.c.l.b16 %v1168
        %v1343 = vunpack.c.l.b16 %v1169
        %v1344 = vunpack.c.l.b16 %v1170
        %v1345 = vunpack.c.l.b16 %v1171
        %v1346 = vunpack.c.l.b16 %v1172
        %v1347 = vunpack.c.l.b16 %v1173
        %v1348 = vpack.c.b16 %v1339, %v1338
        %v1349 = vpack.c.b16 %v1341, %v1340
        %v1350 = vpack.c.b16 %v1343, %v1342
        %v1351 = vpack.c.b16 %v1345, %v1344
        %v1352 = vpack.c.b16 %v1347, %v1346
        %v1359 = vsel %vm902, %v1326, 0
        %v1362 = vsel %vm902, %v1327, 0
        %1364 = vmatpush.bf16.msra.mxu0 0
        %1365 = vmatpush.bf16.msra.mxu0 0
        %1366 = vmatpush.bf16.msra.mxu0 0
        %1367 = vmatpush.bf16.msra.mxu0 %v1352
        %1368 = vmatpush.bf16.msra.mxu0 %v1351
        %1369 = vmatpush.bf16.msra.mxu0 %v1350
        %1370 = vmatpush.bf16.msra.mxu0 %v1349
        %1371 = vmatpush.bf16.msra.mxu0 %v1348
        %1372 = vmatmul.bf16.gmra.mxu0 %v1359
        %v1373 = vpop.f32.mrf.mxu0
        %v1374 = vadd.f32 %v1316, %v1373
        %v1375 = vpop.f32.mrf.mxu0
        %v1376 = vadd.f32 %v1316, %v1375
        %1377 = vmatmul.bf16.gmra.mxu0 %v1362
        %v1378 = vpop.f32.mrf.mxu0
        %v1379 = vadd.f32 %v1316, %v1378
        %v1380 = vpop.f32.mrf.mxu0
        %v1381 = vadd.f32 %v1316, %v1380
        %1382 = vdwg.mxu0
        %s1383 = scalar_lea.vmem %s8, 1
        %v1384 = vld [vmem:[%s1383] sm:$0x1]
        %v1386 = vperm.slane %v1384, 0
        %v1398 = vunpack.c.l.b16 %v1175
        %v1399 = vunpack.c.l.b16 %v1176
        %v1400 = vunpack.c.l.b16 %v1177
        %v1401 = vunpack.c.l.b16 %v1178
        %v1402 = vunpack.c.l.b16 %v1179
        %v1403 = vunpack.c.l.b16 %v1180
        %v1404 = vunpack.c.l.b16 %v1181
        %v1405 = vunpack.c.l.b16 %v1182
        %v1406 = vunpack.c.l.b16 %v1183
        %v1407 = vunpack.c.l.b16 %v1184
        %v1408 = vpack.c.b16 %v1399, %v1398
        %v1409 = vpack.c.b16 %v1401, %v1400
        %v1410 = vpack.c.b16 %v1403, %v1402
        %v1411 = vpack.c.b16 %v1405, %v1404
        %v1412 = vpack.c.b16 %v1407, %v1406
        %1418 = vmatpush.bf16.msra.mxu0 0
        %1419 = vmatpush.bf16.msra.mxu0 0
        %1420 = vmatpush.bf16.msra.mxu0 0
        %1421 = vmatpush.bf16.msra.mxu0 %v1412
        %1422 = vmatpush.bf16.msra.mxu0 %v1411
        %1423 = vmatpush.bf16.msra.mxu0 %v1410
        %1424 = vmatpush.bf16.msra.mxu0 %v1409
        %1425 = vmatpush.bf16.msra.mxu0 %v1408
        %1426 = vmatmul.bf16.gmra.mxu0 %v1359
        %v1427 = vpop.f32.mrf.mxu0
        %v1428 = vadd.f32 %v1386, %v1427
        %v1429 = vpop.f32.mrf.mxu0
        %v1430 = vadd.f32 %v1386, %v1429
        %1431 = vmatmul.bf16.gmra.mxu0 %v1362
        %v1432 = vpop.f32.mrf.mxu0
        %v1433 = vadd.f32 %v1386, %v1432
        %v1434 = vpop.f32.mrf.mxu0
        %v1435 = vadd.f32 %v1386, %v1434
        %1436 = vdwg.mxu0
        %v1437 = vtanh.pop %v1374
        %v1438 = vtanh.pop %v1376
        %v1439 = vtanh.pop %v1379
        %v1440 = vtanh.pop %v1381
        %v1441 = vxor.u32 %v1428, 2147483648
        %v1442 = vxor.u32 %v1430, 2147483648
        %v1443 = vxor.u32 %v1433, 2147483648
        %v1444 = vxor.u32 %v1435, 2147483648
        %v1445 = vmul.f32 %v1441, 1.442695
        %v1446 = vpow.pop %v1445
        %v1447 = vmul.f32 %v1442, 1.442695
        %v1448 = vpow.pop %v1447
        %v1449 = vmul.f32 %v1443, 1.442695
        %v1450 = vpow.pop %v1449
        %v1451 = vmul.f32 %v1444, 1.442695
        %v1452 = vpow.pop %v1451
        %v1453 = vadd.f32 %v1446, 1.0
        %v1454 = vadd.f32 %v1448, 1.0
        %v1455 = vadd.f32 %v1450, 1.0
        %v1456 = vadd.f32 %v1452, 1.0
        %v1457 = vrcp.pop %v1453
        %v1458 = vmul.f32 %v1453, %v1457
        %v1459 = vsub.f32 1.0, %v1458
        %v1460 = vmul.f32 %v1457, %v1459
        %v1461 = vadd.f32 %v1457, %v1460
        %vm1462 = vweird.f32 %v1453
        %vm1463 = vweird.f32 %v1457
        %vm1464 = vmor %vm1462, %vm1463
        %v1465 = vsel %vm1464, %v1457, %v1461
        %v1466 = vand.u32 2147483647, %v1453
        %vm1467 = vcmp.eq.f32.partialorder %v1466, 8.507059e+37
        %v1468 = vand.u32 %v1453, 2147483648
        %v1469 = vor.u32 1.1754944e-38, %v1468
        %v1470 = vsel %vm1467, %v1469, %v1465
        %v1471 = vmul.f32 1.0, %v1470
        %v1472 = vrcp.pop %v1454
        %v1473 = vmul.f32 %v1454, %v1472
        %v1474 = vsub.f32 1.0, %v1473
        %v1475 = vmul.f32 %v1472, %v1474
        %v1476 = vadd.f32 %v1472, %v1475
        %vm1477 = vweird.f32 %v1454
        %vm1478 = vweird.f32 %v1472
        %vm1479 = vmor %vm1477, %vm1478
        %v1480 = vsel %vm1479, %v1472, %v1476
        %v1481 = vand.u32 2147483647, %v1454
        %vm1482 = vcmp.eq.f32.partialorder %v1481, 8.507059e+37
        %v1483 = vand.u32 %v1454, 2147483648
        %v1484 = vor.u32 1.1754944e-38, %v1483
        %v1485 = vsel %vm1482, %v1484, %v1480
        %v1486 = vmul.f32 1.0, %v1485
        %v1487 = vrcp.pop %v1455
        %v1488 = vmul.f32 %v1455, %v1487
        %v1489 = vsub.f32 1.0, %v1488
        %v1490 = vmul.f32 %v1487, %v1489
        %v1491 = vadd.f32 %v1487, %v1490
        %vm1492 = vweird.f32 %v1455
        %vm1493 = vweird.f32 %v1487
        %vm1494 = vmor %vm1492, %vm1493
        %v1495 = vsel %vm1494, %v1487, %v1491
        %v1496 = vand.u32 2147483647, %v1455
        %vm1497 = vcmp.eq.f32.partialorder %v1496, 8.507059e+37
        %v1498 = vand.u32 %v1455, 2147483648
        %v1499 = vor.u32 1.1754944e-38, %v1498
        %v1500 = vsel %vm1497, %v1499, %v1495
        %v1501 = vmul.f32 1.0, %v1500
        %v1502 = vrcp.pop %v1456
        %v1503 = vmul.f32 %v1456, %v1502
        %v1504 = vsub.f32 1.0, %v1503
        %v1505 = vmul.f32 %v1502, %v1504
        %v1506 = vadd.f32 %v1502, %v1505
        %vm1507 = vweird.f32 %v1456
        %vm1508 = vweird.f32 %v1502
        %vm1509 = vmor %vm1507, %vm1508
        %v1510 = vsel %vm1509, %v1502, %v1506
        %v1511 = vand.u32 2147483647, %v1456
        %vm1512 = vcmp.eq.f32.partialorder %v1511, 8.507059e+37
        %v1513 = vand.u32 %v1456, 2147483648
        %v1514 = vor.u32 1.1754944e-38, %v1513
        %v1515 = vsel %vm1512, %v1514, %v1510
        %v1516 = vmul.f32 1.0, %v1515
        %v1517 = vmul.f32 %v1437, %v1471
        %v1518 = vmul.f32 %v1438, %v1486
        %v1519 = vmul.f32 %v1439, %v1501
        %v1520 = vmul.f32 %v1440, %v1516
        %v1521 = vpack.c.bf16 %v1518, %v1517
        %v1522 = vpack.c.bf16 %v1520, %v1519
        %v1523 = vld [vmem:[#allocation3] sm:$0xff]
        %v1524 = vld [vmem:[#allocation3 + $0x8] sm:$0xff]
        %v1525 = vld [vmem:[#allocation3 + $0x10] sm:$0xff]
        %v1526 = vld [vmem:[#allocation3 + $0x18] sm:$0xff]
        %s1527 = scalar_lea.vmem %s11, 8
        %v1528 = vld [vmem:[%s1527] sm:$0xf]
        %v1529 = vld [vmem:[%s1527 + $0x4] sm:$0xf]
        %s1530 = scalar_lea.vmem %s12, 1
        %v1531 = vld [vmem:[%s1530] sm:$0x1]
        %v1533 = vperm.slane %v1531, 0
        %v1537 = vunpack.c.l.b16 %v1528
        %v1538 = vunpack.c.l.b16 %v1529
        %v1539 = vpack.c.b16 %v1538, %v1537
        %v1542 = vsel %vm694, %v1521, 0
        %v1545 = vsel %vm694, %v1522, 0
        %1547 = vmatpush.bf16.msra.mxu0 0
        %1548 = vmatpush.bf16.msra.mxu0 0
        %1549 = vmatpush.bf16.msra.mxu0 0
        %1550 = vmatpush.bf16.msra.mxu0 0
        %1551 = vmatpush.bf16.msra.mxu0 0
        %1552 = vmatpush.bf16.msra.mxu0 0
        %1553 = vmatpush.bf16.msra.mxu0 0
        %1554 = vmatpush.bf16.msra.mxu0 %v1539
        %1555 = vmatmul.bf16.gmra.mxu0 %v1542
        %v1556 = vpop.f32.mrf.mxu0
        %v1557 = vadd.f32 %v1533, %v1556
        %v1558 = vpop.f32.mrf.mxu0
        %v1559 = vadd.f32 %v1533, %v1558
        %1560 = vmatmul.bf16.gmra.mxu0 %v1545
        %v1561 = vpop.f32.mrf.mxu0
        %v1562 = vadd.f32 %v1533, %v1561
        %v1563 = vpop.f32.mrf.mxu0
        %v1564 = vadd.f32 %v1533, %v1563
        %1565 = vdwg.mxu0
        %v1566 = vadd.f32 %v1523, %v1557
        %v1567 = vadd.f32 %v1524, %v1559
        %v1568 = vadd.f32 %v1525, %v1562
        %v1569 = vadd.f32 %v1526, %v1564
        %1570 = vst.msk [vmem:[#allocation3] sm:$0xff] %vm694, %v1566
        %1571 = vst.msk [vmem:[#allocation3 + $0x8] sm:$0xff] %vm694, %v1567
        %1572 = vst.msk [vmem:[#allocation3 + $0x10] sm:$0xff] %vm694, %v1568
        %1573 = vst.msk [vmem:[#allocation3 + $0x18] sm:$0xff] %vm694, %v1569
        %s1574 = scalar_lea.vmem %s9, 8
        %v1575 = vld [vmem:[%s1574] sm:$0xf]
        %v1576 = vld [vmem:[%s1574 + $0x4] sm:$0xf]
        %s1577 = scalar_lea.vmem %s10, 1
        %v1578 = vld [vmem:[%s1577] sm:$0x1]
        %v1580 = vperm.slane %v1578, 0
        %v1584 = vunpack.c.l.b16 %v1575
        %v1585 = vunpack.c.l.b16 %v1576
        %v1586 = vpack.c.b16 %v1585, %v1584
        %1588 = vmatpush.bf16.msra.mxu0 0
        %1589 = vmatpush.bf16.msra.mxu0 0
        %1590 = vmatpush.bf16.msra.mxu0 0
        %1591 = vmatpush.bf16.msra.mxu0 0
        %1592 = vmatpush.bf16.msra.mxu0 0
        %1593 = vmatpush.bf16.msra.mxu0 0
        %1594 = vmatpush.bf16.msra.mxu0 0
        %1595 = vmatpush.bf16.msra.mxu0 %v1586
        %1596 = vmatmul.bf16.gmra.mxu0 %v1542
        %v1597 = vpop.f32.mrf.mxu0
        %v1598 = vadd.f32 %v1580, %v1597
        %v1599 = vpop.f32.mrf.mxu0
        %v1600 = vadd.f32 %v1580, %v1599
        %1601 = vmatmul.bf16.gmra.mxu0 %v1545
        %v1602 = vpop.f32.mrf.mxu0
        %v1603 = vadd.f32 %v1580, %v1602
        %v1604 = vpop.f32.mrf.mxu0
        %v1605 = vadd.f32 %v1580, %v1604
        %1606 = vdwg.mxu0
        %v1607 = vld [vmem:[#allocation2 + $0x8] sm:$0xff]
        %v1608 = vld [vmem:[#allocation2 + $0x10] sm:$0xff]
        %v1609 = vld [vmem:[#allocation2 + $0x18] sm:$0xff]
        %v1610 = vld [vmem:[#allocation2 + $0x20] sm:$0xff]
        %v1611 = vadd.f32 %v1607, %v1598
        %v1612 = vadd.f32 %v1608, %v1600
        %v1613 = vadd.f32 %v1609, %v1603
        %v1614 = vadd.f32 %v1610, %v1605
        %v1615 = vmul.f32 %v1611, %v637
        %v1616 = vmul.f32 %v1612, %v638
        %v1617 = vmul.f32 %v1613, %v639
        %v1618 = vmul.f32 %v1614, %v640
        %1619 = vst.msk [vmem:[#allocation2 + $0x8] sm:$0xff] %vm694, %v1615
        %1620 = vst.msk [vmem:[#allocation2 + $0x10] sm:$0xff] %vm694, %v1616
        %1621 = vst.msk [vmem:[#allocation2 + $0x18] sm:$0xff] %vm694, %v1617
        %1622 = vst.msk [vmem:[#allocation2 + $0x20] sm:$0xff] %vm694, %v1618
        %s1623 = scalar_lea.vmem %s5, 80
        %v1624 = vld [vmem:[%s1623] sm:$0xf]
        %v1625 = vld [vmem:[%s1623 + $0x4] sm:$0xf]
        %v1626 = vld [vmem:[%s1623 + $0x8] sm:$0xf]
        %v1627 = vld [vmem:[%s1623 + $0xc] sm:$0xf]
        %v1628 = vld [vmem:[%s1623 + $0x10] sm:$0xf]
        %v1629 = vld [vmem:[%s1623 + $0x14] sm:$0xf]
        %v1630 = vld [vmem:[%s1623 + $0x18] sm:$0xf]
        %v1631 = vld [vmem:[%s1623 + $0x1c] sm:$0xf]
        %v1632 = vld [vmem:[%s1623 + $0x20] sm:$0xf]
        %v1633 = vld [vmem:[%s1623 + $0x24] sm:$0xf]
        %s1634 = scalar_lea.vmem %s6, 80
        %v1635 = vld [vmem:[%s1634] sm:$0xf]
        %v1636 = vld [vmem:[%s1634 + $0x4] sm:$0xf]
        %v1637 = vld [vmem:[%s1634 + $0x8] sm:$0xf]
        %v1638 = vld [vmem:[%s1634 + $0xc] sm:$0xf]
        %v1639 = vld [vmem:[%s1634 + $0x10] sm:$0xf]
        %v1640 = vld [vmem:[%s1634 + $0x14] sm:$0xf]
        %v1641 = vld [vmem:[%s1634 + $0x18] sm:$0xf]
        %v1642 = vld [vmem:[%s1634 + $0x1c] sm:$0xf]
        %v1643 = vld [vmem:[%s1634 + $0x20] sm:$0xf]
        %v1644 = vld [vmem:[%s1634 + $0x24] sm:$0xf]
        %v1645 = vld [vmem:[#allocation2] sm:$0xff]
        %v1646 = vld [vmem:[#allocation2 + $0x8] sm:$0xff]
        %v1647 = vld [vmem:[#allocation2 + $0x10] sm:$0xff]
        %v1648 = vld [vmem:[#allocation2 + $0x18] sm:$0xff]
        %v1649 = vpack.c.bf16 %v1645, %v1645
        %v1650 = vpack.c.bf16 %v1646, %v1646
        %v1651 = vpack.c.bf16 %v1647, %v1647
        %v1652 = vpack.c.bf16 %v1648, %v1648
        %1653 = vst.msk [vmem:[#allocation4] sm:$0xf] %vm733, %v1649
        %1654 = vst.msk [vmem:[#allocation4 + $0x4] sm:$0xf] %vm733, %v1650
        %1655 = vst.msk [vmem:[#allocation4 + $0x8] sm:$0xf] %vm733, %v1651
        %1656 = vst.msk [vmem:[#allocation4 + $0xc] sm:$0xf] %vm733, %v1652
        %v1657 = vld [vmem:[#allocation2 + $0x4] sm:$0xff]
        %v1658 = vld [vmem:[#allocation2 + $0xc] sm:$0xff]
        %v1659 = vld [vmem:[#allocation2 + $0x14] sm:$0xff]
        %v1660 = vld [vmem:[#allocation2 + $0x1c] sm:$0xff]
        %v1661 = vpack.c.bf16 %v1657, %v1657
        %v1662 = vpack.c.bf16 %v1658, %v1658
        %v1663 = vpack.c.bf16 %v1659, %v1659
        %v1664 = vpack.c.bf16 %v1660, %v1660
        %1669 = vrot.lane.b32.xlu0 %v1661, 16
        %v1670 = vpop.permute.xlu0 %1669
        %1671 = vrot.lane.b32.xlu0 %v1662, 16
        %v1672 = vpop.permute.xlu0 %1671
        %1673 = vrot.lane.b32.xlu0 %v1663, 16
        %v1674 = vpop.permute.xlu0 %1673
        %1675 = vrot.lane.b32.xlu0 %v1664, 16
        %v1676 = vpop.permute.xlu0 %1675
        %1681 = vst.msk [vmem:[#allocation4] sm:$0xf] %vm762, %v1670
        %1682 = vst.msk [vmem:[#allocation4 + $0x4] sm:$0xf] %vm762, %v1672
        %1683 = vst.msk [vmem:[#allocation4 + $0x8] sm:$0xf] %vm762, %v1674
        %1684 = vst.msk [vmem:[#allocation4 + $0xc] sm:$0xf] %vm762, %v1676
        %v1685 = vld [vmem:[#allocation2 + $0x8] sm:$0xff]
        %v1686 = vld [vmem:[#allocation2 + $0x10] sm:$0xff]
        %v1687 = vld [vmem:[#allocation2 + $0x18] sm:$0xff]
        %v1688 = vld [vmem:[#allocation2 + $0x20] sm:$0xff]
        %v1689 = vpack.c.bf16 %v1685, %v1685
        %v1690 = vpack.c.bf16 %v1686, %v1686
        %v1691 = vpack.c.bf16 %v1687, %v1687
        %v1692 = vpack.c.bf16 %v1688, %v1688
        %1697 = vrot.lane.b32.xlu0 %v1689, 32
        %v1698 = vpop.permute.xlu0 %1697
        %1699 = vrot.lane.b32.xlu0 %v1690, 32
        %v1700 = vpop.permute.xlu0 %1699
        %1701 = vrot.lane.b32.xlu0 %v1691, 32
        %v1702 = vpop.permute.xlu0 %1701
        %1703 = vrot.lane.b32.xlu0 %v1692, 32
        %v1704 = vpop.permute.xlu0 %1703
        %1709 = vst.msk [vmem:[#allocation4] sm:$0xf] %vm791, %v1698
        %1710 = vst.msk [vmem:[#allocation4 + $0x4] sm:$0xf] %vm791, %v1700
        %1711 = vst.msk [vmem:[#allocation4 + $0x8] sm:$0xf] %vm791, %v1702
        %1712 = vst.msk [vmem:[#allocation4 + $0xc] sm:$0xf] %vm791, %v1704
        %v1713 = vld [vmem:[#allocation2 + $0xc] sm:$0xff]
        %v1714 = vld [vmem:[#allocation2 + $0x14] sm:$0xff]
        %v1715 = vld [vmem:[#allocation2 + $0x1c] sm:$0xff]
        %v1716 = vld [vmem:[#allocation2 + $0x24] sm:$0xff]
        %v1717 = vpack.c.bf16 %v1713, %v1713
        %v1718 = vpack.c.bf16 %v1714, %v1714
        %v1719 = vpack.c.bf16 %v1715, %v1715
        %v1720 = vpack.c.bf16 %v1716, %v1716
        %1725 = vrot.lane.b32.xlu0 %v1717, 48
        %v1726 = vpop.permute.xlu0 %1725
        %1727 = vrot.lane.b32.xlu0 %v1718, 48
        %v1728 = vpop.permute.xlu0 %1727
        %1729 = vrot.lane.b32.xlu0 %v1719, 48
        %v1730 = vpop.permute.xlu0 %1729
        %1731 = vrot.lane.b32.xlu0 %v1720, 48
        %v1732 = vpop.permute.xlu0 %1731
        %1737 = vst.msk [vmem:[#allocation4] sm:$0xf] %vm820, %v1726
        %1738 = vst.msk [vmem:[#allocation4 + $0x4] sm:$0xf] %vm820, %v1728
        %1739 = vst.msk [vmem:[#allocation4 + $0x8] sm:$0xf] %vm820, %v1730
        %1740 = vst.msk [vmem:[#allocation4 + $0xc] sm:$0xf] %vm820, %v1732
        %v1741 = vld [vmem:[#allocation2 + $0x10] sm:$0xff]
        %v1742 = vld [vmem:[#allocation2 + $0x18] sm:$0xff]
        %v1743 = vld [vmem:[#allocation2 + $0x20] sm:$0xff]
        %v1744 = vld [vmem:[#allocation2 + $0x28] sm:$0xff]
        %v1745 = vpack.c.bf16 %v1741, %v1741
        %v1746 = vpack.c.bf16 %v1742, %v1742
        %v1747 = vpack.c.bf16 %v1743, %v1743
        %v1748 = vpack.c.bf16 %v1744, %v1744
        %1753 = vrot.lane.b32.xlu0 %v1745, 64
        %v1754 = vpop.permute.xlu0 %1753
        %1755 = vrot.lane.b32.xlu0 %v1746, 64
        %v1756 = vpop.permute.xlu0 %1755
        %1757 = vrot.lane.b32.xlu0 %v1747, 64
        %v1758 = vpop.permute.xlu0 %1757
        %1759 = vrot.lane.b32.xlu0 %v1748, 64
        %v1760 = vpop.permute.xlu0 %1759
        %1765 = vst.msk [vmem:[#allocation4] sm:$0xf] %vm849, %v1754
        %1766 = vst.msk [vmem:[#allocation4 + $0x4] sm:$0xf] %vm849, %v1756
        %1767 = vst.msk [vmem:[#allocation4 + $0x8] sm:$0xf] %vm849, %v1758
        %1768 = vst.msk [vmem:[#allocation4 + $0xc] sm:$0xf] %vm849, %v1760
        %v1769 = vld [vmem:[#allocation4] sm:$0xf]
        %v1770 = vld [vmem:[#allocation4 + $0x4] sm:$0xf]
        %v1771 = vld [vmem:[#allocation4 + $0x8] sm:$0xf]
        %v1772 = vld [vmem:[#allocation4 + $0xc] sm:$0xf]
        %s1773 = scalar_lea.vmem %s7, 2
        %v1774 = vld [vmem:[%s1773] sm:$0x1]
        %v1776 = vperm.slane %v1774, 0
        %v1782 = vunpack.c.l.b16 %v1769
        %v1783 = vunpack.c.l.b16 %v1770
        %v1784 = vunpack.c.l.b16 %v1771
        %v1785 = vunpack.c.l.b16 %v1772
        %v1786 = vpack.c.b16 %v1783, %v1782
        %v1787 = vpack.c.b16 %v1785, %v1784
        %v1798 = vunpack.c.l.b16 %v1624
        %v1799 = vunpack.c.l.b16 %v1625
        %v1800 = vunpack.c.l.b16 %v1626
        %v1801 = vunpack.c.l.b16 %v1627
        %v1802 = vunpack.c.l.b16 %v1628
        %v1803 = vunpack.c.l.b16 %v1629
        %v1804 = vunpack.c.l.b16 %v1630
        %v1805 = vunpack.c.l.b16 %v1631
        %v1806 = vunpack.c.l.b16 %v1632
        %v1807 = vunpack.c.l.b16 %v1633
        %v1808 = vpack.c.b16 %v1799, %v1798
        %v1809 = vpack.c.b16 %v1801, %v1800
        %v1810 = vpack.c.b16 %v1803, %v1802
        %v1811 = vpack.c.b16 %v1805, %v1804
        %v1812 = vpack.c.b16 %v1807, %v1806
        %v1819 = vsel %vm902, %v1786, 0
        %v1822 = vsel %vm902, %v1787, 0
        %1824 = vmatpush.bf16.msra.mxu0 0
        %1825 = vmatpush.bf16.msra.mxu0 0
        %1826 = vmatpush.bf16.msra.mxu0 0
        %1827 = vmatpush.bf16.msra.mxu0 %v1812
        %1828 = vmatpush.bf16.msra.mxu0 %v1811
        %1829 = vmatpush.bf16.msra.mxu0 %v1810
        %1830 = vmatpush.bf16.msra.mxu0 %v1809
        %1831 = vmatpush.bf16.msra.mxu0 %v1808
        %1832 = vmatmul.bf16.gmra.mxu0 %v1819
        %v1833 = vpop.f32.mrf.mxu0
        %v1834 = vadd.f32 %v1776, %v1833
        %v1835 = vpop.f32.mrf.mxu0
        %v1836 = vadd.f32 %v1776, %v1835
        %1837 = vmatmul.bf16.gmra.mxu0 %v1822
        %v1838 = vpop.f32.mrf.mxu0
        %v1839 = vadd.f32 %v1776, %v1838
        %v1840 = vpop.f32.mrf.mxu0
        %v1841 = vadd.f32 %v1776, %v1840
        %1842 = vdwg.mxu0
        %s1843 = scalar_lea.vmem %s8, 2
        %v1844 = vld [vmem:[%s1843] sm:$0x1]
        %v1846 = vperm.slane %v1844, 0
        %v1858 = vunpack.c.l.b16 %v1635
        %v1859 = vunpack.c.l.b16 %v1636
        %v1860 = vunpack.c.l.b16 %v1637
        %v1861 = vunpack.c.l.b16 %v1638
        %v1862 = vunpack.c.l.b16 %v1639
        %v1863 = vunpack.c.l.b16 %v1640
        %v1864 = vunpack.c.l.b16 %v1641
        %v1865 = vunpack.c.l.b16 %v1642
        %v1866 = vunpack.c.l.b16 %v1643
        %v1867 = vunpack.c.l.b16 %v1644
        %v1868 = vpack.c.b16 %v1859, %v1858
        %v1869 = vpack.c.b16 %v1861, %v1860
        %v1870 = vpack.c.b16 %v1863, %v1862
        %v1871 = vpack.c.b16 %v1865, %v1864
        %v1872 = vpack.c.b16 %v1867, %v1866
        %1878 = vmatpush.bf16.msra.mxu0 0
        %1879 = vmatpush.bf16.msra.mxu0 0
        %1880 = vmatpush.bf16.msra.mxu0 0
        %1881 = vmatpush.bf16.msra.mxu0 %v1872
        %1882 = vmatpush.bf16.msra.mxu0 %v1871
        %1883 = vmatpush.bf16.msra.mxu0 %v1870
        %1884 = vmatpush.bf16.msra.mxu0 %v1869
        %1885 = vmatpush.bf16.msra.mxu0 %v1868
        %1886 = vmatmul.bf16.gmra.mxu0 %v1819
        %v1887 = vpop.f32.mrf.mxu0
        %v1888 = vadd.f32 %v1846, %v1887
        %v1889 = vpop.f32.mrf.mxu0
        %v1890 = vadd.f32 %v1846, %v1889
        %1891 = vmatmul.bf16.gmra.mxu0 %v1822
        %v1892 = vpop.f32.mrf.mxu0
        %v1893 = vadd.f32 %v1846, %v1892
        %v1894 = vpop.f32.mrf.mxu0
        %v1895 = vadd.f32 %v1846, %v1894
        %1896 = vdwg.mxu0
        %v1897 = vtanh.pop %v1834
        %v1898 = vtanh.pop %v1836
        %v1899 = vtanh.pop %v1839
        %v1900 = vtanh.pop %v1841
        %v1901 = vxor.u32 %v1888, 2147483648
        %v1902 = vxor.u32 %v1890, 2147483648
        %v1903 = vxor.u32 %v1893, 2147483648
        %v1904 = vxor.u32 %v1895, 2147483648
        %v1905 = vmul.f32 %v1901, 1.442695
        %v1906 = vpow.pop %v1905
        %v1907 = vmul.f32 %v1902, 1.442695
        %v1908 = vpow.pop %v1907
        %v1909 = vmul.f32 %v1903, 1.442695
        %v1910 = vpow.pop %v1909
        %v1911 = vmul.f32 %v1904, 1.442695
        %v1912 = vpow.pop %v1911
        %v1913 = vadd.f32 %v1906, 1.0
        %v1914 = vadd.f32 %v1908, 1.0
        %v1915 = vadd.f32 %v1910, 1.0
        %v1916 = vadd.f32 %v1912, 1.0
        %v1917 = vrcp.pop %v1913
        %v1918 = vmul.f32 %v1913, %v1917
        %v1919 = vsub.f32 1.0, %v1918
        %v1920 = vmul.f32 %v1917, %v1919
        %v1921 = vadd.f32 %v1917, %v1920
        %vm1922 = vweird.f32 %v1913
        %vm1923 = vweird.f32 %v1917
        %vm1924 = vmor %vm1922, %vm1923
        %v1925 = vsel %vm1924, %v1917, %v1921
        %v1926 = vand.u32 2147483647, %v1913
        %vm1927 = vcmp.eq.f32.partialorder %v1926, 8.507059e+37
        %v1928 = vand.u32 %v1913, 2147483648
        %v1929 = vor.u32 1.1754944e-38, %v1928
        %v1930 = vsel %vm1927, %v1929, %v1925
        %v1931 = vmul.f32 1.0, %v1930
        %v1932 = vrcp.pop %v1914
        %v1933 = vmul.f32 %v1914, %v1932
        %v1934 = vsub.f32 1.0, %v1933
        %v1935 = vmul.f32 %v1932, %v1934
        %v1936 = vadd.f32 %v1932, %v1935
        %vm1937 = vweird.f32 %v1914
        %vm1938 = vweird.f32 %v1932
        %vm1939 = vmor %vm1937, %vm1938
        %v1940 = vsel %vm1939, %v1932, %v1936
        %v1941 = vand.u32 2147483647, %v1914
        %vm1942 = vcmp.eq.f32.partialorder %v1941, 8.507059e+37
        %v1943 = vand.u32 %v1914, 2147483648
        %v1944 = vor.u32 1.1754944e-38, %v1943
        %v1945 = vsel %vm1942, %v1944, %v1940
        %v1946 = vmul.f32 1.0, %v1945
        %v1947 = vrcp.pop %v1915
        %v1948 = vmul.f32 %v1915, %v1947
        %v1949 = vsub.f32 1.0, %v1948
        %v1950 = vmul.f32 %v1947, %v1949
        %v1951 = vadd.f32 %v1947, %v1950
        %vm1952 = vweird.f32 %v1915
        %vm1953 = vweird.f32 %v1947
        %vm1954 = vmor %vm1952, %vm1953
        %v1955 = vsel %vm1954, %v1947, %v1951
        %v1956 = vand.u32 2147483647, %v1915
        %vm1957 = vcmp.eq.f32.partialorder %v1956, 8.507059e+37
        %v1958 = vand.u32 %v1915, 2147483648
        %v1959 = vor.u32 1.1754944e-38, %v1958
        %v1960 = vsel %vm1957, %v1959, %v1955
        %v1961 = vmul.f32 1.0, %v1960
        %v1962 = vrcp.pop %v1916
        %v1963 = vmul.f32 %v1916, %v1962
        %v1964 = vsub.f32 1.0, %v1963
        %v1965 = vmul.f32 %v1962, %v1964
        %v1966 = vadd.f32 %v1962, %v1965
        %vm1967 = vweird.f32 %v1916
        %vm1968 = vweird.f32 %v1962
        %vm1969 = vmor %vm1967, %vm1968
        %v1970 = vsel %vm1969, %v1962, %v1966
        %v1971 = vand.u32 2147483647, %v1916
        %vm1972 = vcmp.eq.f32.partialorder %v1971, 8.507059e+37
        %v1973 = vand.u32 %v1916, 2147483648
        %v1974 = vor.u32 1.1754944e-38, %v1973
        %v1975 = vsel %vm1972, %v1974, %v1970
        %v1976 = vmul.f32 1.0, %v1975
        %v1977 = vmul.f32 %v1897, %v1931
        %v1978 = vmul.f32 %v1898, %v1946
        %v1979 = vmul.f32 %v1899, %v1961
        %v1980 = vmul.f32 %v1900, %v1976
        %v1981 = vpack.c.bf16 %v1978, %v1977
        %v1982 = vpack.c.bf16 %v1980, %v1979
        %v1983 = vld [vmem:[#allocation3] sm:$0xff]
        %v1984 = vld [vmem:[#allocation3 + $0x8] sm:$0xff]
        %v1985 = vld [vmem:[#allocation3 + $0x10] sm:$0xff]
        %v1986 = vld [vmem:[#allocation3 + $0x18] sm:$0xff]
        %s1987 = scalar_lea.vmem %s11, 16
        %v1988 = vld [vmem:[%s1987] sm:$0xf]
        %v1989 = vld [vmem:[%s1987 + $0x4] sm:$0xf]
        %s1990 = scalar_lea.vmem %s12, 2
        %v1991 = vld [vmem:[%s1990] sm:$0x1]
        %v1993 = vperm.slane %v1991, 0
        %v1997 = vunpack.c.l.b16 %v1988
        %v1998 = vunpack.c.l.b16 %v1989
        %v1999 = vpack.c.b16 %v1998, %v1997
        %v2002 = vsel %vm694, %v1981, 0
        %v2005 = vsel %vm694, %v1982, 0
        %2007 = vmatpush.bf16.msra.mxu0 0
        %2008 = vmatpush.bf16.msra.mxu0 0
        %2009 = vmatpush.bf16.msra.mxu0 0
        %2010 = vmatpush.bf16.msra.mxu0 0
        %2011 = vmatpush.bf16.msra.mxu0 0
        %2012 = vmatpush.bf16.msra.mxu0 0
        %2013 = vmatpush.bf16.msra.mxu0 0
        %2014 = vmatpush.bf16.msra.mxu0 %v1999
        %2015 = vmatmul.bf16.gmra.mxu0 %v2002
        %v2016 = vpop.f32.mrf.mxu0
        %v2017 = vadd.f32 %v1993, %v2016
        %v2018 = vpop.f32.mrf.mxu0
        %v2019 = vadd.f32 %v1993, %v2018
        %2020 = vmatmul.bf16.gmra.mxu0 %v2005
        %v2021 = vpop.f32.mrf.mxu0
        %v2022 = vadd.f32 %v1993, %v2021
        %v2023 = vpop.f32.mrf.mxu0
        %v2024 = vadd.f32 %v1993, %v2023
        %2025 = vdwg.mxu0
        %v2026 = vadd.f32 %v1983, %v2017
        %v2027 = vadd.f32 %v1984, %v2019
        %v2028 = vadd.f32 %v1985, %v2022
        %v2029 = vadd.f32 %v1986, %v2024
        %2030 = vst.msk [vmem:[#allocation3] sm:$0xff] %vm694, %v2026
        %2031 = vst.msk [vmem:[#allocation3 + $0x8] sm:$0xff] %vm694, %v2027
        %2032 = vst.msk [vmem:[#allocation3 + $0x10] sm:$0xff] %vm694, %v2028
        %2033 = vst.msk [vmem:[#allocation3 + $0x18] sm:$0xff] %vm694, %v2029
        %v2034 = vld [vmem:[#allocation3] sm:$0xff]
        %v2035 = vld [vmem:[#allocation3 + $0x8] sm:$0xff]
        %v2036 = vld [vmem:[#allocation3 + $0x10] sm:$0xff]
        %v2037 = vld [vmem:[#allocation3 + $0x18] sm:$0xff]
        %v2038 = vmul.f32 %v2034, %v637
        %v2039 = vmul.f32 %v2035, %v638
        %v2040 = vmul.f32 %v2036, %v639
        %v2041 = vmul.f32 %v2037, %v640
        %v2042 = vpack.c.bf16 %v2039, %v2038
        %v2043 = vpack.c.bf16 %v2041, %v2040
        %v2044 = vld [vmem:[%s13] sm:$0xf]
        %v2045 = vld [vmem:[%s13 + $0x4] sm:$0xf]
        %v2046 = vld [vmem:[%s14] sm:$0x1]
        %v2048 = vperm.slane %v2046, 0
        %v2052 = vunpack.c.l.b16 %v2044
        %v2053 = vunpack.c.l.b16 %v2045
        %v2054 = vpack.c.b16 %v2053, %v2052
        %v2057 = vsel %vm694, %v2042, 0
        %v2060 = vsel %vm694, %v2043, 0
        %2062 = vmatpush.bf16.msra.mxu0 0
        %2063 = vmatpush.bf16.msra.mxu0 0
        %2064 = vmatpush.bf16.msra.mxu0 0
        %2065 = vmatpush.bf16.msra.mxu0 0
        %2066 = vmatpush.bf16.msra.mxu0 0
        %2067 = vmatpush.bf16.msra.mxu0 0
        %2068 = vmatpush.bf16.msra.mxu0 0
        %2069 = vmatpush.bf16.msra.mxu0 %v2054
        %2070 = vmatmul.bf16.gmra.mxu0 %v2057
        %v2071 = vpop.f32.mrf.mxu0
        %v2072 = vadd.f32 %v2048, %v2071
        %v2073 = vpop.f32.mrf.mxu0
        %v2074 = vadd.f32 %v2048, %v2073
        %2075 = vmatmul.bf16.gmra.mxu0 %v2060
        %v2076 = vpop.f32.mrf.mxu0
        %v2077 = vadd.f32 %v2048, %v2076
        %v2078 = vpop.f32.mrf.mxu0
        %v2079 = vadd.f32 %v2048, %v2078
        %2080 = vdwg.mxu0
        %v2081 = vmul.f32 %v2072, %v637
        %v2082 = vmul.f32 %v2074, %v638
        %v2083 = vmul.f32 %v2077, %v639
        %v2084 = vmul.f32 %v2079, %v640
        %v2085 = vld [vmem:[%s15] sm:$0xf]
        %v2086 = vld [vmem:[%s15 + $0x4] sm:$0xf]
        %v2087 = vld [vmem:[%s16] sm:$0x1]
        %v2089 = vperm.slane %v2087, 0
        %v2093 = vunpack.c.l.b16 %v2085
        %v2094 = vunpack.c.l.b16 %v2086
        %v2095 = vpack.c.b16 %v2094, %v2093
        %2097 = vmatpush.bf16.msra.mxu0 0
        %2098 = vmatpush.bf16.msra.mxu0 0
        %2099 = vmatpush.bf16.msra.mxu0 0
        %2100 = vmatpush.bf16.msra.mxu0 0
        %2101 = vmatpush.bf16.msra.mxu0 0
        %2102 = vmatpush.bf16.msra.mxu0 0
        %2103 = vmatpush.bf16.msra.mxu0 0
        %2104 = vmatpush.bf16.msra.mxu0 %v2095
        %2105 = vmatmul.bf16.gmra.mxu0 %v2057
        %v2106 = vpop.f32.mrf.mxu0
        %v2107 = vadd.f32 %v2089, %v2106
        %v2108 = vpop.f32.mrf.mxu0
        %v2109 = vadd.f32 %v2089, %v2108
        %2110 = vmatmul.bf16.gmra.mxu0 %v2060
        %v2111 = vpop.f32.mrf.mxu0
        %v2112 = vadd.f32 %v2089, %v2111
        %v2113 = vpop.f32.mrf.mxu0
        %v2114 = vadd.f32 %v2089, %v2113
        %2115 = vdwg.mxu0
        %v2116 = vmul.f32 %v2107, %v637
        %v2117 = vmul.f32 %v2109, %v638
        %v2118 = vmul.f32 %v2112, %v639
        %v2119 = vmul.f32 %v2114, %v640
        %v2120 = vld [vmem:[%s620] sm:$0xff]
        %v2121 = vld [vmem:[%s620 + $0x8] sm:$0xff]
        %v2122 = vld [vmem:[%s620 + $0x10] sm:$0xff]
        %v2123 = vld [vmem:[%s620 + $0x18] sm:$0xff]
        %v2124 = vmul.f32 %v2116, 1.442695
        %v2125 = vpow.pop %v2124
        %v2126 = vmul.f32 %v2117, 1.442695
        %v2127 = vpow.pop %v2126
        %v2128 = vmul.f32 %v2118, 1.442695
        %v2129 = vpow.pop %v2128
        %v2130 = vmul.f32 %v2119, 1.442695
        %v2131 = vpow.pop %v2130
        %v2132 = vmul.f32 %v2120, %v2125
        %v2133 = vmul.f32 %v2121, %v2127
        %v2134 = vmul.f32 %v2122, %v2129
        %v2135 = vmul.f32 %v2123, %v2131
        %v2136 = vadd.f32 %v2081, %v2132
        %v2137 = vadd.f32 %v2082, %v2133
        %v2138 = vadd.f32 %v2083, %v2134
        %v2139 = vadd.f32 %v2084, %v2135
        %v2140 = vmul.f32 %v2136, %v637
        %v2141 = vmul.f32 %v2137, %v638
        %v2142 = vmul.f32 %v2138, %v639
        %v2143 = vmul.f32 %v2139, %v640
        %2144 = vst [vmem:[%s596] sm:$0xff] %v2140
        %2145 = vst [vmem:[%s596 + $0x8] sm:$0xff] %v2141
        %2146 = vst [vmem:[%s596 + $0x10] sm:$0xff] %v2142
        %2147 = vst [vmem:[%s596 + $0x18] sm:$0xff] %v2143
        %2148 = vst [vmem:[%s603] sm:$0xff] %v2081
        %2149 = vst [vmem:[%s603 + $0x8] sm:$0xff] %v2082
        %2150 = vst [vmem:[%s603 + $0x10] sm:$0xff] %v2083
        %2151 = vst [vmem:[%s603 + $0x18] sm:$0xff] %v2084
        %2152 = vst [vmem:[%s610] sm:$0xff] %v2116
        %2153 = vst [vmem:[%s610 + $0x8] sm:$0xff] %v2117
        %2154 = vst [vmem:[%s610 + $0x10] sm:$0xff] %v2118
        %2155 = vst [vmem:[%s610 + $0x18] sm:$0xff] %v2119
        %s2156 = sand.u32 %s399, 1
        %s2157 = scalar_lea.sflag [#allocation8], %s2156
        %s2158 = sand.u32 %s399, 1
        %s2159 = smul.addr %s2158, 32
        %s2160 = scalar_lea.vmem [#allocation7], %s2159
        %s2161 = sand.u32 %s45, 1
        %s2162 = scalar_lea.sflag [#allocation10], %s2161
        %s2163 = sand.u32 %s425, 1
        %s2164 = smul.addr %s2163, 32
        %s2165 = scalar_lea.vmem [#allocation9], %s2164
        %s2166 = sand.u32 %s45, 1
        %s2167 = scalar_lea.sflag [#allocation10], %s2166
        %s2168 = sand.u32 %s451, 1
        %s2169 = smul.addr %s2168, 32
        %s2170 = scalar_lea.vmem [#allocation11], %s2169
        // Predicated region
        $region85: #{tpu_custom_call.1} parent=83 // pred_check
          %p2171 = pneg %p409
        $region86: #{tpu_custom_call.1} parent=83 // pred_check_branch
          %2173 = sbr.rel (%p2171) target = $region88
        $region87: #{tpu_custom_call.1} parent=83 // pred_region
          %2175 = vsyncadd %s2157, 0
          %s2176 = smul.addr %s45, 4
          %s2177 = smul.addr %s2176, 8
          %s2178 = scalar_lea.hbm %s17, %s2177
          %s2179 = sshll.u32 %s2160, 4
          %s2180 = int_to_ptr.vmem [resolvable:$true] %s2179
          %s2181 = sshll.u32 %s2178, 4
          %s2182 = int_to_ptr.hbm [resolvable:$true] %s2181
          %2187 = dma.vmem_to_hbm [thread:$0]  %s2180, 512, %s2182, %s2157, 128, 128, 8
        $region88: #{tpu_custom_call.1} parent=83 // pred_fallthru
          _
        // Predicated region
        $region89: #{tpu_custom_call.1} parent=83 // pred_check
          %p2188 = pneg %p435
        $region90: #{tpu_custom_call.1} parent=83 // pred_check_branch
          %2190 = sbr.rel (%p2188) target = $region92
        $region91: #{tpu_custom_call.1} parent=83 // pred_region
          %2192 = vsyncadd %s2162, 0
          %s2193 = smul.addr %s45, 4
          %s2194 = smul.addr %s2193, 8
          %s2195 = scalar_lea.hbm %s18, %s2194
          %s2196 = sshll.u32 %s2165, 4
          %s2197 = int_to_ptr.vmem [resolvable:$true] %s2196
          %s2198 = sshll.u32 %s2195, 4
          %s2199 = int_to_ptr.hbm [resolvable:$true] %s2198
          %2204 = dma.vmem_to_hbm [thread:$0]  %s2197, 512, %s2199, %s2162, 128, 128, 8
        $region92: #{tpu_custom_call.1} parent=83 // pred_fallthru
          _
        // Predicated region
        $region93: #{tpu_custom_call.1} parent=83 // pred_check
          %p2205 = pneg %p461
        $region94: #{tpu_custom_call.1} parent=83 // pred_check_branch
          %2207 = sbr.rel (%p2205) target = $region96
        $region95: #{tpu_custom_call.1} parent=83 // pred_region
          %2209 = vsyncadd %s2167, 0
          %s2210 = smul.addr %s45, 4
          %s2211 = smul.addr %s2210, 8
          %s2212 = scalar_lea.hbm %s19, %s2211
          %s2213 = sshll.u32 %s2170, 4
          %s2214 = int_to_ptr.vmem [resolvable:$true] %s2213
          %s2215 = sshll.u32 %s2212, 4
          %s2216 = int_to_ptr.hbm [resolvable:$true] %s2215
          %2221 = dma.vmem_to_hbm [thread:$0]  %s2214, 512, %s2216, %s2167, 128, 128, 8
        $region96: #{tpu_custom_call.1} parent=83 // pred_fallthru
          _
      $region84: #{tpu_custom_call.1} parent=5 // pred_fallthru
        _
      %p2222 = scmp.le.s32.totalorder 2, %s40
      // Predicated region
      $region97: #{tpu_custom_call.1} parent=5 // pred_check
        %p2223 = pneg %p2222
      $region98: #{tpu_custom_call.1} parent=5 // pred_check_branch
        %2225 = sbr.rel (%p2223) target = $region100
      $region99: #{tpu_custom_call.1} parent=5 // pred_region
        %s2226 = ssub.s32 %s40, 2
        // Predicated region
        $region101: #{tpu_custom_call.1} parent=99 // pred_check
          %p2227 = pneg %p415
        $region102: #{tpu_custom_call.1} parent=99 // pred_check_branch
          %2229 = sbr.rel (%p2227) target = $region104
        $region103: #{tpu_custom_call.1} parent=99 // pred_region
          %s2230 = sand.u32 %s400, 1
          %s2231 = scalar_lea.sflag [#allocation8], %s2230
          %s2232 = sand.u32 %s400, 1
          %s2233 = smul.addr %s2232, 32
          %s2234 = scalar_lea.vmem [#allocation7], %s2233
          %2236 = dma.done %s2231, 512
        $region104: #{tpu_custom_call.1} parent=99 // pred_fallthru
          _
        // Predicated region
        $region105: #{tpu_custom_call.1} parent=99 // pred_check
          %p2237 = pneg %p441
        $region106: #{tpu_custom_call.1} parent=99 // pred_check_branch
          %2239 = sbr.rel (%p2237) target = $region108
        $region107: #{tpu_custom_call.1} parent=99 // pred_region
          %s2240 = sand.u32 %s46, 1
          %s2241 = scalar_lea.sflag [#allocation10], %s2240
          %s2242 = sand.u32 %s426, 1
          %s2243 = smul.addr %s2242, 32
          %s2244 = scalar_lea.vmem [#allocation9], %s2243
          %2246 = dma.done %s2241, 512
        $region108: #{tpu_custom_call.1} parent=99 // pred_fallthru
          _
        // Predicated region
        $region109: #{tpu_custom_call.1} parent=99 // pred_check
          %p2247 = pneg %p467
        $region110: #{tpu_custom_call.1} parent=99 // pred_check_branch
          %2249 = sbr.rel (%p2247) target = $region112
        $region111: #{tpu_custom_call.1} parent=99 // pred_region
          %s2250 = sand.u32 %s46, 1
          %s2251 = scalar_lea.sflag [#allocation10], %s2250
          %s2252 = sand.u32 %s452, 1
          %s2253 = smul.addr %s2252, 32
          %s2254 = scalar_lea.vmem [#allocation11], %s2253
          %2256 = dma.done %s2251, 512
        $region112: #{tpu_custom_call.1} parent=99 // pred_fallthru
          _
      $region100: #{tpu_custom_call.1} parent=5 // pred_fallthru
        _
    $region6: #{tpu_custom_call.1} parent=1 // loop_footer
      %s44 = sadd.s32 1, %s40
    $region7: #{tpu_custom_call.1} parent=1 // loop_footer_branch
      %39 = sbr.rel target = $region3
    $region8: #{tpu_custom_call.1} parent=1 // loop_exit
      _
    %2257 = vsyncpa [#allocation8], 1
    %s2258 = scalar_lea.sflag [#allocation8], 1
    %2259 = vsyncpa %s2258, 1
    %2260 = vsyncpa [#allocation10], 1
    %s2261 = scalar_lea.sflag [#allocation10], 1
    %2262 = vsyncpa %s2261, 1

// kernel: tpu_custom_call.1
$region0: #{tpu_custom_call.1}
  #allocation0 [shape = 'u32[]', space=smem, size = 0x4, offset = 0x4, fixed_abs, tag = 'smem constant byte address 0x4 - core index']
  #allocation1 [shape = 'u32[72,128]{1,0:T(1,128)}', space=vmem, size = 0x9000, scoped, tag = 'internal scratch']
  #allocation2 [shape = 'f32[48,16]{1,0:T(8,128)}', space=vmem, size = 0x6000, scoped, tag = 'scratch operand']
  #allocation3 [shape = 'f32[32,16]{1,0:T(8,128)}', space=vmem, size = 0x4000, scoped, tag = 'scratch operand']
  #allocation4 [shape = 'bf16[32,80]{1,0:T(8,128)(2,1)}', space=vmem, size = 0x2000, scoped, tag = 'scratch operand']
  #allocation5 [shape = 's32[1]{0}', space=sflag, size = 0x4, scoped, tag = 'scoped memory for tpu_custom_call.1']
  #allocation6 [shape = 'u8[512]{0}', space=smem, size = 0x200, scoped, tag = 'prefetched SMEM operand 0']
  %s0 = inlined_call_operand.vmem [shape: s32[2], index: 0, kind: input, shape index: {}]
  %s1 = inlined_call_operand.vmem [shape: bf16[2,32,8], index: 1, kind: input, shape index: {}]
  %s2 = inlined_call_operand.vmem [shape: f32[2,32,128], index: 2, kind: input, shape index: {}]
  %s3 = inlined_call_operand.vmem [shape: bf16[8,16], index: 3, kind: input, shape index: {}]
  %s4 = inlined_call_operand.vmem [shape: f32[1,16], index: 4, kind: input, shape index: {}]
  %s5 = inlined_call_operand.vmem [shape: bf16[3,80,16], index: 5, kind: input, shape index: {}]
  %s6 = inlined_call_operand.vmem [shape: bf16[3,80,16], index: 6, kind: input, shape index: {}]
  %s7 = inlined_call_operand.vmem [shape: f32[3,1,16], index: 7, kind: input, shape index: {}]
  %s8 = inlined_call_operand.vmem [shape: f32[3,1,16], index: 8, kind: input, shape index: {}]
  %s9 = inlined_call_operand.vmem [shape: bf16[2,16,16], index: 9, kind: input, shape index: {}]
  %s10 = inlined_call_operand.vmem [shape: f32[2,1,16], index: 10, kind: input, shape index: {}]
  %s11 = inlined_call_operand.vmem [shape: bf16[3,16,16], index: 11, kind: input, shape index: {}]
  %s12 = inlined_call_operand.vmem [shape: f32[3,1,16], index: 12, kind: input, shape index: {}]
  %s13 = inlined_call_operand.vmem [shape: bf16[16,128], index: 13, kind: input, shape index: {}]
  %s14 = inlined_call_operand.vmem [shape: f32[1,128], index: 14, kind: input, shape index: {}]
  %s15 = inlined_call_operand.vmem [shape: bf16[16,128], index: 15, kind: input, shape index: {}]
  %s16 = inlined_call_operand.vmem [shape: f32[1,128], index: 16, kind: input, shape index: {}]
  %s17 = inlined_call_operand.hbm [shape: f32[2,32,128], index: 17, kind: output, shape index: {0}]
  %s18 = inlined_call_operand.hbm [shape: f32[2,32,128], index: 18, kind: output, shape index: {1}]
  %s19 = inlined_call_operand.hbm [shape: f32[2,32,128], index: 19, kind: output, shape index: {2}]
  %20 = xla_tuple %s17, %s18, %s19
  %s21 = sld [smem:[#allocation0]]
  $region113: #{tpu_custom_call.1} parent=0
    _
  %s23 = ssub.s32 1, %s21
  %s24 = scalar_select 0, %s23, %s21
  %s26 = sshll.u32 %s0, 4
  %s27 = int_to_ptr.vmem [resolvable:$true] %s26
  %29 = dma.vmem_to_smem %s27, 16, [#allocation6], [#allocation5]
  %31 = dma.done [#allocation5], 16
  %32 = sfence
  $region1: #{tpu_custom_call.1} parent=0
    #allocation7 [shape = 'u8[32768]{0}', space=vmem, size = 0x8000, scoped, tag = 'output window, operand 0']
    #allocation8 [shape = 's32[2]{0}', space=sflag, size = 0x8, scoped, tag = 'scoped memory for tpu_custom_call.1']
    #allocation9 [shape = 'u8[32768]{0}', space=vmem, size = 0x8000, scoped, tag = 'output window, operand 1']
    #allocation10 [shape = 's32[2]{0}', space=sflag, size = 0x8, scoped, tag = 'scoped memory for tpu_custom_call.1']
    #allocation11 [shape = 'u8[32768]{0}', space=vmem, size = 0x8000, scoped, tag = 'output window, operand 2']
    %33 = vsyncpa [#allocation8], 0
    %s34 = scalar_lea.sflag [#allocation8], 1
    %35 = vsyncpa %s34, 0
    %36 = vsyncpa [#allocation10], 0
    %s37 = scalar_lea.sflag [#allocation10], 1
    %38 = vsyncpa %s37, 0
    loop: start=0, step=1, limit=4
    $region2: #{tpu_custom_call.1} parent=1 // loop_pre_header
      _
    $region3: #{tpu_custom_call.1} parent=1 // loop_header
      %s40 = sphi 0, %s44
      %p41 = scmp.ge.s32.totalorder %s40, 4
      %s50 = sphi 0, %s52
      %s53 = sphi 0, %s50
      %s54 = sphi 0, %s53
      %s70 = sphi 0, %s54
      %s76 = sphi 0, %s78
      %s79 = sphi 0, %s76
      %s80 = sphi 0, %s79
      %s96 = sphi 0, %s80
      %s100 = sphi 0, %s100
      %s102 = sphi 0, %s100
      %s103 = sphi 0, %s102
      %s117 = sphi 0, %s103
      %s121 = sphi 0, %s121
      %s123 = sphi 0, %s121
      %s124 = sphi 0, %s123
      %s138 = sphi 0, %s124
      %s142 = sphi 0, %s142
      %s144 = sphi 0, %s142
      %s145 = sphi 0, %s144
      %s159 = sphi 0, %s145
      %s163 = sphi 0, %s163
      %s165 = sphi 0, %s163
      %s166 = sphi 0, %s165
      %s180 = sphi 0, %s166
      %s184 = sphi 0, %s184
      %s186 = sphi 0, %s184
      %s187 = sphi 0, %s186
      %s201 = sphi 0, %s187
      %s205 = sphi 0, %s205
      %s207 = sphi 0, %s205
      %s208 = sphi 0, %s207
      %s222 = sphi 0, %s208
      %s226 = sphi 0, %s226
      %s228 = sphi 0, %s226
      %s229 = sphi 0, %s228
      %s243 = sphi 0, %s229
      %s247 = sphi 0, %s247
      %s249 = sphi 0, %s247
      %s250 = sphi 0, %s249
      %s264 = sphi 0, %s250
      %s268 = sphi 0, %s268
      %s270 = sphi 0, %s268
      %s271 = sphi 0, %s270
      %s285 = sphi 0, %s271
      %s289 = sphi 0, %s289
      %s291 = sphi 0, %s289
      %s292 = sphi 0, %s291
      %s306 = sphi 0, %s292
      %s310 = sphi 0, %s310
      %s312 = sphi 0, %s310
      %s313 = sphi 0, %s312
      %s327 = sphi 0, %s313
      %s331 = sphi 0, %s331
      %s333 = sphi 0, %s331
      %s334 = sphi 0, %s333
      %s348 = sphi 0, %s334
      %s352 = sphi 0, %s352
      %s354 = sphi 0, %s352
      %s355 = sphi 0, %s354
      %s369 = sphi 0, %s355
      %s373 = sphi 0, %s373
      %s375 = sphi 0, %s373
      %s376 = sphi 0, %s375
      %s390 = sphi 0, %s376
      %s396 = sphi 0, %s398
      %s399 = sphi 0, %s396
      %s400 = sphi 0, %s399
      %s416 = sphi 0, %s400
      %s422 = sphi 0, %s424
      %s425 = sphi 0, %s422
      %s426 = sphi 0, %s425
      %s442 = sphi 0, %s426
      %s448 = sphi 0, %s450
      %s451 = sphi 0, %s448
      %s452 = sphi 0, %s451
      %s468 = sphi 0, %s452
    $region4: #{tpu_custom_call.1} parent=1 // loop_header_branch
      %43 = sbr.rel (%p41) target = $region8
    $region5: #{tpu_custom_call.1} parent=1 // loop_body
      %s45 = ssub.s32 %s40, 1
      %s46 = ssub.s32 %s40, 2
      %s47 = sadd.s32 %s40, 1
      %s48 = ssub.s32 %s40, %s47
      %p49 = scmp.eq.s32.totalorder %s48, 0
      %s51 = sadd.s32 %s50, 1
      %s52 = scalar_select %p49, %s50, %s51
      %p55 = pneg %p49
      %p56 = scmp.eq.s32.totalorder %s40, 1
      %p57 = por %p55, %p56
      %p58 = scmp.ne.s32.totalorder %s50, %s53
      %p59 = scmp.eq.s32.totalorder %s40, 0
      %p60 = por %p58, %p59
      %p61 = scmp.ne.s32.totalorder %s50, %s53
      %p62 = scmp.eq.s32.totalorder %s45, 1
      %p63 = por %p61, %p62
      %p64 = scmp.ne.s32.totalorder %s53, %s54
      %p65 = scmp.eq.s32.totalorder %s45, 0
      %p66 = por %p64, %p65
      %p67 = scmp.ne.s32.totalorder %s53, %s54
      %p68 = scmp.eq.s32.totalorder %s46, 1
      %p69 = por %p67, %p68
      %p71 = scmp.ne.s32.totalorder %s54, %s70
      %p72 = scmp.eq.s32.totalorder %s46, 0
      %p73 = por %p71, %p72
      %s74 = ssub.s32 %s40, %s47
      %p75 = scmp.eq.s32.totalorder %s74, 0
      %s77 = sadd.s32 %s76, 1
      %s78 = scalar_select %p75, %s76, %s77
      %p81 = pneg %p75
      %p82 = scmp.eq.s32.totalorder %s40, 1
      %p83 = por %p81, %p82
      %p84 = scmp.ne.s32.totalorder %s76, %s79
      %p85 = scmp.eq.s32.totalorder %s40, 0
      %p86 = por %p84, %p85
      %p87 = scmp.ne.s32.totalorder %s76, %s79
      %p88 = scmp.eq.s32.totalorder %s45, 1
      %p89 = por %p87, %p88
      %p90 = scmp.ne.s32.totalorder %s79, %s80
      %p91 = scmp.eq.s32.totalorder %s45, 0
      %p92 = por %p90, %p91
      %p93 = scmp.ne.s32.totalorder %s79, %s80
      %p94 = scmp.eq.s32.totalorder %s46, 1
      %p95 = por %p93, %p94
      %p97 = scmp.ne.s32.totalorder %s80, %s96
      %p98 = scmp.eq.s32.totalorder %s46, 0
      %p99 = por %p97, %p98
      %s101 = sadd.s32 %s100, 1
      %p104 = scmp.eq.s32.totalorder %s40, 1
      %p105 = scmp.ne.s32.totalorder %s100, %s102
      %p106 = scmp.eq.s32.totalorder %s40, 0
      %p107 = por %p105, %p106
      %p108 = scmp.ne.s32.totalorder %s100, %s102
      %p109 = scmp.eq.s32.totalorder %s45, 1
      %p110 = por %p108, %p109
      %p111 = scmp.ne.s32.totalorder %s102, %s103
      %p112 = scmp.eq.s32.totalorder %s45, 0
      %p113 = por %p111, %p112
      %p114 = scmp.ne.s32.totalorder %s102, %s103
      %p115 = scmp.eq.s32.totalorder %s46, 1
      %p116 = por %p114, %p115
      %p118 = scmp.ne.s32.totalorder %s103, %s117
      %p119 = scmp.eq.s32.totalorder %s46, 0
      %p120 = por %p118, %p119
      %s122 = sadd.s32 %s121, 1
      %p125 = scmp.eq.s32.totalorder %s40, 1
      %p126 = scmp.ne.s32.totalorder %s121, %s123
      %p127 = scmp.eq.s32.totalorder %s40, 0
      %p128 = por %p126, %p127
      %p129 = scmp.ne.s32.totalorder %s121, %s123
      %p130 = scmp.eq.s32.totalorder %s45, 1
      %p131 = por %p129, %p130
      %p132 = scmp.ne.s32.totalorder %s123, %s124
      %p133 = scmp.eq.s32.totalorder %s45, 0
      %p134 = por %p132, %p133
      %p135 = scmp.ne.s32.totalorder %s123, %s124
      %p136 = scmp.eq.s32.totalorder %s46, 1
      %p137 = por %p135, %p136
      %p139 = scmp.ne.s32.totalorder %s124, %s138
      %p140 = scmp.eq.s32.totalorder %s46, 0
      %p141 = por %p139, %p140
      %s143 = sadd.s32 %s142, 1
      %p146 = scmp.eq.s32.totalorder %s40, 1
      %p147 = scmp.ne.s32.totalorder %s142, %s144
      %p148 = scmp.eq.s32.totalorder %s40, 0
      %p149 = por %p147, %p148
      %p150 = scmp.ne.s32.totalorder %s142, %s144
      %p151 = scmp.eq.s32.totalorder %s45, 1
      %p152 = por %p150, %p151
      %p153 = scmp.ne.s32.totalorder %s144, %s145
      %p154 = scmp.eq.s32.totalorder %s45, 0
      %p155 = por %p153, %p154
      %p156 = scmp.ne.s32.totalorder %s144, %s145
      %p157 = scmp.eq.s32.totalorder %s46, 1
      %p158 = por %p156, %p157
      %p160 = scmp.ne.s32.totalorder %s145, %s159
      %p161 = scmp.eq.s32.totalorder %s46, 0
      %p162 = por %p160, %p161
      %s164 = sadd.s32 %s163, 1
      %p167 = scmp.eq.s32.totalorder %s40, 1
      %p168 = scmp.ne.s32.totalorder %s163, %s165
      %p169 = scmp.eq.s32.totalorder %s40, 0
      %p170 = por %p168, %p169
      %p171 = scmp.ne.s32.totalorder %s163, %s165
      %p172 = scmp.eq.s32.totalorder %s45, 1
      %p173 = por %p171, %p172
      %p174 = scmp.ne.s32.totalorder %s165, %s166
      %p175 = scmp.eq.s32.totalorder %s45, 0
      %p176 = por %p174, %p175
      %p177 = scmp.ne.s32.totalorder %s165, %s166
      %p178 = scmp.eq.s32.totalorder %s46, 1
      %p179 = por %p177, %p178
      %p181 = scmp.ne.s32.totalorder %s166, %s180
      %p182 = scmp.eq.s32.totalorder %s46, 0
      %p183 = por %p181, %p182
      %s185 = sadd.s32 %s184, 1
      %p188 = scmp.eq.s32.totalorder %s40, 1
      %p189 = scmp.ne.s32.totalorder %s184, %s186
      %p190 = scmp.eq.s32.totalorder %s40, 0
      %p191 = por %p189, %p190
      %p192 = scmp.ne.s32.totalorder %s184, %s186
      %p193 = scmp.eq.s32.totalorder %s45, 1
      %p194 = por %p192, %p193
      %p195 = scmp.ne.s32.totalorder %s186, %s187
      %p196 = scmp.eq.s32.totalorder %s45, 0
      %p197 = por %p195, %p196
      %p198 = scmp.ne.s32.totalorder %s186, %s187
      %p199 = scmp.eq.s32.totalorder %s46, 1
      %p200 = por %p198, %p199
      %p202 = scmp.ne.s32.totalorder %s187, %s201
      %p203 = scmp.eq.s32.totalorder %s46, 0
      %p204 = por %p202, %p203
      %s206 = sadd.s32 %s205, 1
      %p209 = scmp.eq.s32.totalorder %s40, 1
      %p210 = scmp.ne.s32.totalorder %s205, %s207
      %p211 = scmp.eq.s32.totalorder %s40, 0
      %p212 = por %p210, %p211
      %p213 = scmp.ne.s32.totalorder %s205, %s207
      %p214 = scmp.eq.s32.totalorder %s45, 1
      %p215 = por %p213, %p214
      %p216 = scmp.ne.s32.totalorder %s207, %s208
      %p217 = scmp.eq.s32.totalorder %s45, 0
      %p218 = por %p216, %p217
      %p219 = scmp.ne.s32.totalorder %s207, %s208
      %p220 = scmp.eq.s32.totalorder %s46, 1
      %p221 = por %p219, %p220
      %p223 = scmp.ne.s32.totalorder %s208, %s222
      %p224 = scmp.eq.s32.totalorder %s46, 0
      %p225 = por %p223, %p224
      %s227 = sadd.s32 %s226, 1
      %p230 = scmp.eq.s32.totalorder %s40, 1
      %p231 = scmp.ne.s32.totalorder %s226, %s228
      %p232 = scmp.eq.s32.totalorder %s40, 0
      %p233 = por %p231, %p232
      %p234 = scmp.ne.s32.totalorder %s226, %s228
      %p235 = scmp.eq.s32.totalorder %s45, 1
      %p236 = por %p234, %p235
      %p237 = scmp.ne.s32.totalorder %s228, %s229
      %p238 = scmp.eq.s32.totalorder %s45, 0
      %p239 = por %p237, %p238
      %p240 = scmp.ne.s32.totalorder %s228, %s229
      %p241 = scmp.eq.s32.totalorder %s46, 1
      %p242 = por %p240, %p241
      %p244 = scmp.ne.s32.totalorder %s229, %s243
      %p245 = scmp.eq.s32.totalorder %s46, 0
      %p246 = por %p244, %p245
      %s248 = sadd.s32 %s247, 1
      %p251 = scmp.eq.s32.totalorder %s40, 1
      %p252 = scmp.ne.s32.totalorder %s247, %s249
      %p253 = scmp.eq.s32.totalorder %s40, 0
      %p254 = por %p252, %p253
      %p255 = scmp.ne.s32.totalorder %s247, %s249
      %p256 = scmp.eq.s32.totalorder %s45, 1
      %p257 = por %p255, %p256
      %p258 = scmp.ne.s32.totalorder %s249, %s250
      %p259 = scmp.eq.s32.totalorder %s45, 0
      %p260 = por %p258, %p259
      %p261 = scmp.ne.s32.totalorder %s249, %s250
      %p262 = scmp.eq.s32.totalorder %s46, 1
      %p263 = por %p261, %p262
      %p265 = scmp.ne.s32.totalorder %s250, %s264
      %p266 = scmp.eq.s32.totalorder %s46, 0
      %p267 = por %p265, %p266
      %s269 = sadd.s32 %s268, 1
      %p272 = scmp.eq.s32.totalorder %s40, 1
      %p273 = scmp.ne.s32.totalorder %s268, %s270
      %p274 = scmp.eq.s32.totalorder %s40, 0
      %p275 = por %p273, %p274
      %p276 = scmp.ne.s32.totalorder %s268, %s270
      %p277 = scmp.eq.s32.totalorder %s45, 1
      %p278 = por %p276, %p277
      %p279 = scmp.ne.s32.totalorder %s270, %s271
      %p280 = scmp.eq.s32.totalorder %s45, 0
      %p281 = por %p279, %p280
      %p282 = scmp.ne.s32.totalorder %s270, %s271
      %p283 = scmp.eq.s32.totalorder %s46, 1
      %p284 = por %p282, %p283
      %p286 = scmp.ne.s32.totalorder %s271, %s285
      %p287 = scmp.eq.s32.totalorder %s46, 0
      %p288 = por %p286, %p287
      %s290 = sadd.s32 %s289, 1
      %p293 = scmp.eq.s32.totalorder %s40, 1
      %p294 = scmp.ne.s32.totalorder %s289, %s291
      %p295 = scmp.eq.s32.totalorder %s40, 0
      %p296 = por %p294, %p295
      %p297 = scmp.ne.s32.totalorder %s289, %s291
      %p298 = scmp.eq.s32.totalorder %s45, 1
      %p299 = por %p297, %p298
      %p300 = scmp.ne.s32.totalorder %s291, %s292
      %p301 = scmp.eq.s32.totalorder %s45, 0
      %p302 = por %p300, %p301
      %p303 = scmp.ne.s32.totalorder %s291, %s292
      %p304 = scmp.eq.s32.totalorder %s46, 1
      %p305 = por %p303, %p304
      %p307 = scmp.ne.s32.totalorder %s292, %s306
      %p308 = scmp.eq.s32.totalorder %s46, 0
      %p309 = por %p307, %p308
      %s311 = sadd.s32 %s310, 1
      %p314 = scmp.eq.s32.totalorder %s40, 1
      %p315 = scmp.ne.s32.totalorder %s310, %s312
      %p316 = scmp.eq.s32.totalorder %s40, 0
      %p317 = por %p315, %p316
      %p318 = scmp.ne.s32.totalorder %s310, %s312
      %p319 = scmp.eq.s32.totalorder %s45, 1
      %p320 = por %p318, %p319
      %p321 = scmp.ne.s32.totalorder %s312, %s313
      %p322 = scmp.eq.s32.totalorder %s45, 0
      %p323 = por %p321, %p322
      %p324 = scmp.ne.s32.totalorder %s312, %s313
      %p325 = scmp.eq.s32.totalorder %s46, 1
      %p326 = por %p324, %p325
      %p328 = scmp.ne.s32.totalorder %s313, %s327
      %p329 = scmp.eq.s32.totalorder %s46, 0
      %p330 = por %p328, %p329
      %s332 = sadd.s32 %s331, 1
      %p335 = scmp.eq.s32.totalorder %s40, 1
      %p336 = scmp.ne.s32.totalorder %s331, %s333
      %p337 = scmp.eq.s32.totalorder %s40, 0
      %p338 = por %p336, %p337
      %p339 = scmp.ne.s32.totalorder %s331, %s333
      %p340 = scmp.eq.s32.totalorder %s45, 1
      %p341 = por %p339, %p340
      %p342 = scmp.ne.s32.totalorder %s333, %s334
      %p343 = scmp.eq.s32.totalorder %s45, 0
      %p344 = por %p342, %p343
      %p345 = scmp.ne.s32.totalorder %s333, %s334
      %p346 = scmp.eq.s32.totalorder %s46, 1
      %p347 = por %p345, %p346
      %p349 = scmp.ne.s32.totalorder %s334, %s348
      %p350 = scmp.eq.s32.totalorder %s46, 0
      %p351 = por %p349, %p350
      %s353 = sadd.s32 %s352, 1
      %p356 = scmp.eq.s32.totalorder %s40, 1
      %p357 = scmp.ne.s32.totalorder %s352, %s354
      %p358 = scmp.eq.s32.totalorder %s40, 0
      %p359 = por %p357, %p358
      %p360 = scmp.ne.s32.totalorder %s352, %s354
      %p361 = scmp.eq.s32.totalorder %s45, 1
      %p362 = por %p360, %p361
      %p363 = scmp.ne.s32.totalorder %s354, %s355
      %p364 = scmp.eq.s32.totalorder %s45, 0
      %p365 = por %p363, %p364
      %p366 = scmp.ne.s32.totalorder %s354, %s355
      %p367 = scmp.eq.s32.totalorder %s46, 1
      %p368 = por %p366, %p367
      %p370 = scmp.ne.s32.totalorder %s355, %s369
      %p371 = scmp.eq.s32.totalorder %s46, 0
      %p372 = por %p370, %p371
      %s374 = sadd.s32 %s373, 1
      %p377 = scmp.eq.s32.totalorder %s40, 1
      %p378 = scmp.ne.s32.totalorder %s373, %s375
      %p379 = scmp.eq.s32.totalorder %s40, 0
      %p380 = por %p378, %p379
      %p381 = scmp.ne.s32.totalorder %s373, %s375
      %p382 = scmp.eq.s32.totalorder %s45, 1
      %p383 = por %p381, %p382
      %p384 = scmp.ne.s32.totalorder %s375, %s376
      %p385 = scmp.eq.s32.totalorder %s45, 0
      %p386 = por %p384, %p385
      %p387 = scmp.ne.s32.totalorder %s375, %s376
      %p388 = scmp.eq.s32.totalorder %s46, 1
      %p389 = por %p387, %p388
      %p391 = scmp.ne.s32.totalorder %s376, %s390
      %p392 = scmp.eq.s32.totalorder %s46, 0
      %p393 = por %p391, %p392
      %s394 = ssub.s32 %s40, %s47
      %p395 = scmp.eq.s32.totalorder %s394, 0
      %s397 = sadd.s32 %s396, 1
      %s398 = scalar_select %p395, %s396, %s397
      %p401 = pneg %p395
      %p402 = scmp.eq.s32.totalorder %s40, 1
      %p403 = por %p401, %p402
      %p404 = scmp.ne.s32.totalorder %s396, %s399
      %p405 = scmp.eq.s32.totalorder %s40, 0
      %p406 = por %p404, %p405
      %p407 = scmp.ne.s32.totalorder %s396, %s399
      %p408 = scmp.eq.s32.totalorder %s45, 1
      %p409 = por %p407, %p408
      %p410 = scmp.ne.s32.totalorder %s399, %s400
      %p411 = scmp.eq.s32.totalorder %s45, 0
      %p412 = por %p410, %p411
      %p413 = scmp.ne.s32.totalorder %s399, %s400
      %p414 = scmp.eq.s32.totalorder %s46, 1
      %p415 = por %p413, %p414
      %p417 = scmp.ne.s32.totalorder %s400, %s416
      %p418 = scmp.eq.s32.totalorder %s46, 0
      %p419 = por %p417, %p418
      %s420 = ssub.s32 %s40, %s47
      %p421 = scmp.eq.s32.totalorder %s420, 0
      %s423 = sadd.s32 %s422, 1
      %s424 = scalar_select %p421, %s422, %s423
      %p427 = pneg %p421
      %p428 = scmp.eq.s32.totalorder %s40, 1
      %p429 = por %p427, %p428
      %p430 = scmp.ne.s32.totalorder %s422, %s425
      %p431 = scmp.eq.s32.totalorder %s40, 0
      %p432 = por %p430, %p431
      %p433 = scmp.ne.s32.totalorder %s422, %s425
      %p434 = scmp.eq.s32.totalorder %s45, 1
      %p435 = por %p433, %p434
      %p436 = scmp.ne.s32.totalorder %s425, %s426
      %p437 = scmp.eq.s32.totalorder %s45, 0
      %p438 = por %p436, %p437
      %p439 = scmp.ne.s32.totalorder %s425, %s426
      %p440 = scmp.eq.s32.totalorder %s46, 1
      %p441 = por %p439, %p440
      %p443 = scmp.ne.s32.totalorder %s426, %s442
      %p444 = scmp.eq.s32.totalorder %s46, 0
      %p445 = por %p443, %p444
      %s446 = ssub.s32 %s40, %s47
      %p447 = scmp.eq.s32.totalorder %s446, 0
      %s449 = sadd.s32 %s448, 1
      %s450 = scalar_select %p447, %s448, %s449
      %p453 = pneg %p447
      %p454 = scmp.eq.s32.totalorder %s40, 1
      %p455 = por %p453, %p454
      %p456 = scmp.ne.s32.totalorder %s448, %s451
      %p457 = scmp.eq.s32.totalorder %s40, 0
      %p458 = por %p456, %p457
      %p459 = scmp.ne.s32.totalorder %s448, %s451
      %p460 = scmp.eq.s32.totalorder %s45, 1
      %p461 = por %p459, %p460
      %p462 = scmp.ne.s32.totalorder %s451, %s452
      %p463 = scmp.eq.s32.totalorder %s45, 0
      %p464 = por %p462, %p463
      %p465 = scmp.ne.s32.totalorder %s451, %s452
      %p466 = scmp.eq.s32.totalorder %s46, 1
      %p467 = por %p465, %p466
      %p469 = scmp.ne.s32.totalorder %s452, %s468
      %p470 = scmp.eq.s32.totalorder %s46, 0
      %p471 = por %p469, %p470
      %p472 = scmp.le.s32.totalorder 1, %s40
      %p473 = scmp.lt.s32.totalorder %s40, 3
      %p474 = pnand %p472, %p473
      %p475 = pneg %p474
      // Predicated region
      $region9: #{tpu_custom_call.1} parent=5 // pred_check
        _
      $region10: #{tpu_custom_call.1} parent=5 // pred_check_branch
        %477 = sbr.rel (%p474) target = $region12
      $region11: #{tpu_custom_call.1} parent=5 // pred_region
        %s478 = ssub.s32 %s40, 1
        // Predicated region
        $region13: #{tpu_custom_call.1} parent=11 // pred_check
          %p479 = pneg %p113
        $region14: #{tpu_custom_call.1} parent=11 // pred_check_branch
          %481 = sbr.rel (%p479) target = $region16
        $region15: #{tpu_custom_call.1} parent=11 // pred_region
          _
        $region16: #{tpu_custom_call.1} parent=11 // pred_fallthru
          _
        // Predicated region
        $region17: #{tpu_custom_call.1} parent=11 // pred_check
          %p482 = pneg %p134
        $region18: #{tpu_custom_call.1} parent=11 // pred_check_branch
          %484 = sbr.rel (%p482) target = $region20
        $region19: #{tpu_custom_call.1} parent=11 // pred_region
          _
        $region20: #{tpu_custom_call.1} parent=11 // pred_fallthru
          _
        // Predicated region
        $region21: #{tpu_custom_call.1} parent=11 // pred_check
          %p485 = pneg %p155
        $region22: #{tpu_custom_call.1} parent=11 // pred_check_branch
          %487 = sbr.rel (%p485) target = $region24
        $region23: #{tpu_custom_call.1} parent=11 // pred_region
          _
        $region24: #{tpu_custom_call.1} parent=11 // pred_fallthru
          _
        // Predicated region
        $region25: #{tpu_custom_call.1} parent=11 // pred_check
          %p488 = pneg %p176
        $region26: #{tpu_custom_call.1} parent=11 // pred_check_branch
          %490 = sbr.rel (%p488) target = $region28
        $region27: #{tpu_custom_call.1} parent=11 // pred_region
          _
        $region28: #{tpu_custom_call.1} parent=11 // pred_fallthru
          _
        // Predicated region
        $region29: #{tpu_custom_call.1} parent=11 // pred_check
          %p491 = pneg %p197
        $region30: #{tpu_custom_call.1} parent=11 // pred_check_branch
          %493 = sbr.rel (%p491) target = $region32
        $region31: #{tpu_custom_call.1} parent=11 // pred_region
          _
        $region32: #{tpu_custom_call.1} parent=11 // pred_fallthru
          _
        // Predicated region
        $region33: #{tpu_custom_call.1} parent=11 // pred_check
          %p494 = pneg %p218
        $region34: #{tpu_custom_call.1} parent=11 // pred_check_branch
          %496 = sbr.rel (%p494) target = $region36
        $region35: #{tpu_custom_call.1} parent=11 // pred_region
          _
        $region36: #{tpu_custom_call.1} parent=11 // pred_fallthru
          _
        // Predicated region
        $region37: #{tpu_custom_call.1} parent=11 // pred_check
          %p497 = pneg %p239
        $region38: #{tpu_custom_call.1} parent=11 // pred_check_branch
          %499 = sbr.rel (%p497) target = $region40
        $region39: #{tpu_custom_call.1} parent=11 // pred_region
          _
        $region40: #{tpu_custom_call.1} parent=11 // pred_fallthru
          _
        // Predicated region
        $region41: #{tpu_custom_call.1} parent=11 // pred_check
          %p500 = pneg %p260
        $region42: #{tpu_custom_call.1} parent=11 // pred_check_branch
          %502 = sbr.rel (%p500) target = $region44
        $region43: #{tpu_custom_call.1} parent=11 // pred_region
          _
        $region44: #{tpu_custom_call.1} parent=11 // pred_fallthru
          _
        // Predicated region
        $region45: #{tpu_custom_call.1} parent=11 // pred_check
          %p503 = pneg %p281
        $region46: #{tpu_custom_call.1} parent=11 // pred_check_branch
          %505 = sbr.rel (%p503) target = $region48
        $region47: #{tpu_custom_call.1} parent=11 // pred_region
          _
        $region48: #{tpu_custom_call.1} parent=11 // pred_fallthru
          _
        // Predicated region
        $region49: #{tpu_custom_call.1} parent=11 // pred_check
          %p506 = pneg %p302
        $region50: #{tpu_custom_call.1} parent=11 // pred_check_branch
          %508 = sbr.rel (%p506) target = $region52
        $region51: #{tpu_custom_call.1} parent=11 // pred_region
          _
        $region52: #{tpu_custom_call.1} parent=11 // pred_fallthru
          _
        // Predicated region
        $region53: #{tpu_custom_call.1} parent=11 // pred_check
          %p509 = pneg %p323
        $region54: #{tpu_custom_call.1} parent=11 // pred_check_branch
          %511 = sbr.rel (%p509) target = $region56
        $region55: #{tpu_custom_call.1} parent=11 // pred_region
          _
        $region56: #{tpu_custom_call.1} parent=11 // pred_fallthru
          _
        // Predicated region
        $region57: #{tpu_custom_call.1} parent=11 // pred_check
          %p512 = pneg %p344
        $region58: #{tpu_custom_call.1} parent=11 // pred_check_branch
          %514 = sbr.rel (%p512) target = $region60
        $region59: #{tpu_custom_call.1} parent=11 // pred_region
          _
        $region60: #{tpu_custom_call.1} parent=11 // pred_fallthru
          _
        // Predicated region
        $region61: #{tpu_custom_call.1} parent=11 // pred_check
          %p515 = pneg %p365
        $region62: #{tpu_custom_call.1} parent=11 // pred_check_branch
          %517 = sbr.rel (%p515) target = $region64
        $region63: #{tpu_custom_call.1} parent=11 // pred_region
          _
        $region64: #{tpu_custom_call.1} parent=11 // pred_fallthru
          _
        // Predicated region
        $region65: #{tpu_custom_call.1} parent=11 // pred_check
          %p518 = pneg %p386
        $region66: #{tpu_custom_call.1} parent=11 // pred_check_branch
          %520 = sbr.rel (%p518) target = $region68
        $region67: #{tpu_custom_call.1} parent=11 // pred_region
          _
        $region68: #{tpu_custom_call.1} parent=11 // pred_fallthru
          _
      $region12: #{tpu_custom_call.1} parent=5 // pred_fallthru
        _
      %p521 = scmp.lt.s32.totalorder %s40, 2
      // Predicated region
      $region69: #{tpu_custom_call.1} parent=5 // pred_check
        %p522 = pneg %p521
      $region70: #{tpu_custom_call.1} parent=5 // pred_check_branch
        %524 = sbr.rel (%p522) target = $region72
      $region71: #{tpu_custom_call.1} parent=5 // pred_region
        // Predicated region
        $region73: #{tpu_custom_call.1} parent=71 // pred_check
          %p525 = pneg %p60
        $region74: #{tpu_custom_call.1} parent=71 // pred_check_branch
          %527 = sbr.rel (%p525) target = $region76
        $region75: #{tpu_custom_call.1} parent=71 // pred_region
          %p528 = scmp.lt.s32.totalorder %s40, 1
          %s529 = scalar_select %p528, %s40, 1
          %s530 = smul.addr %s529, 4
          %s531 = smul.addr %s530, 4
          %s532 = scalar_lea.vmem %s1, %s531
        $region76: #{tpu_custom_call.1} parent=71 // pred_fallthru
          _
        // Predicated region
        $region77: #{tpu_custom_call.1} parent=71 // pred_check
          %p533 = pneg %p86
        $region78: #{tpu_custom_call.1} parent=71 // pred_check_branch
          %535 = sbr.rel (%p533) target = $region80
        $region79: #{tpu_custom_call.1} parent=71 // pred_region
          %p536 = scmp.lt.s32.totalorder %s40, 1
          %s537 = scalar_select %p536, %s40, 1
          %s538 = smul.addr %s537, 4
          %s539 = smul.addr %s538, 8
          %s540 = scalar_lea.vmem %s2, %s539
        $region80: #{tpu_custom_call.1} parent=71 // pred_fallthru
          _
      $region72: #{tpu_custom_call.1} parent=5 // pred_fallthru
        _
      %p541 = scmp.le.s32.totalorder 1, %s40
      %p542 = scmp.lt.s32.totalorder %s40, 3
      %p543 = pnand %p541, %p542
      %p544 = pneg %p543
      // Predicated region
      $region81: #{tpu_custom_call.1} parent=5 // pred_check
        _
      $region82: #{tpu_custom_call.1} parent=5 // pred_check_branch
        %546 = sbr.rel (%p543) target = $region84
      $region83: #{tpu_custom_call.1} parent=5 // pred_region
        %s547 = ssub.s32 %s40, 1
        %p548 = scmp.lt.s32.totalorder %s45, 1
        %s549 = scalar_select %p548, %s45, 1
        %s550 = smul.addr %s549, 4
        %s551 = smul.addr %s550, 4
        %s552 = scalar_lea.vmem %s1, %s551
        %p553 = pneg %p66
        %p554 = pneg %p63
        %p555 = scmp.lt.s32.totalorder %s45, 1
        %s556 = scalar_select %p555, %s45, 1
        %s557 = smul.addr %s556, 4
        %s558 = smul.addr %s557, 8
        %s559 = scalar_lea.vmem %s2, %s558
        %p560 = pneg %p92
        %p561 = pneg %p89
        %p562 = pneg %p113
        %p563 = pneg %p110
        %p564 = pneg %p134
        %p565 = pneg %p131
        %p566 = pneg %p155
        %p567 = pneg %p152
        %p568 = pneg %p176
        %p569 = pneg %p173
        %p570 = pneg %p197
        %p571 = pneg %p194
        %p572 = pneg %p218
        %p573 = pneg %p215
        %p574 = pneg %p239
        %p575 = pneg %p236
        %p576 = pneg %p260
        %p577 = pneg %p257
        %p578 = pneg %p281
        %p579 = pneg %p278
        %p580 = pneg %p302
        %p581 = pneg %p299
        %p582 = pneg %p323
        %p583 = pneg %p320
        %p584 = pneg %p344
        %p585 = pneg %p341
        %p586 = pneg %p365
        %p587 = pneg %p362
        %p588 = pneg %p386
        %p589 = pneg %p383
        %p590 = pneg %p412
        %p591 = pneg %p409
        %s592 = sand.u32 %s399, 1
        %s593 = scalar_lea.sflag [#allocation8], %s592
        %s594 = sand.u32 %s399, 1
        %s595 = smul.addr %s594, 32
        %s596 = scalar_lea.vmem [#allocation7], %s595
        %p597 = pneg %p438
        %p598 = pneg %p435
        %s599 = sand.u32 %s45, 1
        %s600 = scalar_lea.sflag [#allocation10], %s599
        %s601 = sand.u32 %s425, 1
        %s602 = smul.addr %s601, 32
        %s603 = scalar_lea.vmem [#allocation9], %s602
        %p604 = pneg %p464
        %p605 = pneg %p461
        %s606 = sand.u32 %s45, 1
        %s607 = scalar_lea.sflag [#allocation10], %s606
        %s608 = sand.u32 %s451, 1
        %s609 = smul.addr %s608, 32
        %s610 = scalar_lea.vmem [#allocation11], %s609
        %p611 = scmp.lt.s32.totalorder %s45, 1
        %s612 = scalar_select %p611, %s45, 1
        %s613 = smul.addr %s612, 4
        %s614 = smul.addr %s613, 4
        %s615 = scalar_lea.vmem %s1, %s614
        %p616 = scmp.lt.s32.totalorder %s45, 1
        %s617 = scalar_select %p616, %s45, 1
        %s618 = smul.addr %s617, 4
        %s619 = smul.addr %s618, 8
        %s620 = scalar_lea.vmem %s2, %s619
        %v622 = vlaneseq
        %v623 = vshrl.u32 %v622, 7
        %v624 = vadd.s32 %v623, 8
        %v625 = vadd.s32 %v623, 16
        %v626 = vadd.s32 %v623, 24
        %s627 = sld [smem:[#allocation6 + %s45]]
        %v628 = vstv %s627
        %vm629 = vcmp.lt.s32.totalorder %v623, %v628
        %vm630 = vcmp.lt.s32.totalorder %v624, %v628
        %vm631 = vcmp.lt.s32.totalorder %v625, %v628
        %vm632 = vcmp.lt.s32.totalorder %v626, %v628
        %v633 = vsel %vm629, 1, 0
        %v634 = vsel %vm630, 1, 0
        %v635 = vsel %vm631, 1, 0
        %v636 = vsel %vm632, 1, 0
        %v637 = vcvt.s32.f32 %v633
        %v638 = vcvt.s32.f32 %v634
        %v639 = vcvt.s32.f32 %v635
        %v640 = vcvt.s32.f32 %v636
        %v641 = vld [vmem:[%s615] sm:$0xf]
        %v642 = vld [vmem:[%s615 + $0x4] sm:$0xf]
        %v643 = vld [vmem:[%s615 + $0x8] sm:$0xf]
        %v644 = vld [vmem:[%s615 + $0xc] sm:$0xf]
        %v645 = vld [vmem:[%s3] sm:$0xf]
        %v646 = vld [vmem:[%s4] sm:$0x1]
        %v648 = vperm.slane %v646, 0
        %v654 = vunpack.c.l.b16 %v641
        %v655 = vunpack.c.l.b16 %v642
        %v656 = vunpack.c.l.b16 %v643
        %v657 = vunpack.c.l.b16 %v644
        %v658 = vpack.c.b16 %v655, %v654
        %v659 = vpack.c.b16 %v657, %v656
        %vm660 = vcmask 64512
        %v662 = vsel %vm660, %v658, 0
        %v665 = vsel %vm660, %v659, 0
        %vm667 = vcmask 1043456
        %v669 = vsel %vm667, %v645, 0
        %671 = vmatpush.bf16.msra.mxu0 0
        %672 = vmatpush.bf16.msra.mxu0 0
        %673 = vmatpush.bf16.msra.mxu0 0
        %674 = vmatpush.bf16.msra.mxu0 0
        %675 = vmatpush.bf16.msra.mxu0 0
        %676 = vmatpush.bf16.msra.mxu0 0
        %677 = vmatpush.bf16.msra.mxu0 0
        %678 = vmatpush.bf16.msra.mxu0 %v669
        %679 = vmatmul.bf16.gmra.mxu0 %v662
        %v680 = vpop.f32.mrf.mxu0
        %v681 = vadd.f32 %v648, %v680
        %v682 = vpop.f32.mrf.mxu0
        %v683 = vadd.f32 %v648, %v682
        %684 = vmatmul.bf16.gmra.mxu0 %v665
        %v685 = vpop.f32.mrf.mxu0
        %v686 = vadd.f32 %v648, %v685
        %v687 = vpop.f32.mrf.mxu0
        %v688 = vadd.f32 %v648, %v687
        %689 = vdwg.mxu0
        %v690 = vmul.f32 %v681, %v637
        %v691 = vmul.f32 %v683, %v638
        %v692 = vmul.f32 %v686, %v639
        %v693 = vmul.f32 %v688, %v640
        %vm694 = vcmask 130048
        %695 = vst.msk [vmem:[#allocation2] sm:$0xff] %vm694, 0.0
        %696 = vst.msk [vmem:[#allocation2 + $0x28] sm:$0xff] %vm694, 0.0
        %697 = vst.msk [vmem:[#allocation2 + $0x8] sm:$0xff] %vm694, %v690
        %698 = vst.msk [vmem:[#allocation2 + $0x10] sm:$0xff] %vm694, %v691
        %699 = vst.msk [vmem:[#allocation2 + $0x18] sm:$0xff] %vm694, %v692
        %700 = vst.msk [vmem:[#allocation2 + $0x20] sm:$0xff] %vm694, %v693
        %701 = vst.msk [vmem:[#allocation3] sm:$0xff] %vm694, 0.0
        %702 = vst.msk [vmem:[#allocation3 + $0x8] sm:$0xff] %vm694, 0.0
        %703 = vst.msk [vmem:[#allocation3 + $0x10] sm:$0xff] %vm694, 0.0
        %704 = vst.msk [vmem:[#allocation3 + $0x18] sm:$0xff] %vm694, 0.0
        %v705 = vld [vmem:[%s5] sm:$0xf]
        %v706 = vld [vmem:[%s5 + $0x4] sm:$0xf]
        %v707 = vld [vmem:[%s5 + $0x8] sm:$0xf]
        %v708 = vld [vmem:[%s5 + $0xc] sm:$0xf]
        %v709 = vld [vmem:[%s5 + $0x10] sm:$0xf]
        %v710 = vld [vmem:[%s5 + $0x14] sm:$0xf]
        %v711 = vld [vmem:[%s5 + $0x18] sm:$0xf]
        %v712 = vld [vmem:[%s5 + $0x1c] sm:$0xf]
        %v713 = vld [vmem:[%s5 + $0x20] sm:$0xf]
        %v714 = vld [vmem:[%s5 + $0x24] sm:$0xf]
        %v715 = vld [vmem:[%s6] sm:$0xf]
        %v716 = vld [vmem:[%s6 + $0x4] sm:$0xf]
        %v717 = vld [vmem:[%s6 + $0x8] sm:$0xf]
        %v718 = vld [vmem:[%s6 + $0xc] sm:$0xf]
        %v719 = vld [vmem:[%s6 + $0x10] sm:$0xf]
        %v720 = vld [vmem:[%s6 + $0x14] sm:$0xf]
        %v721 = vld [vmem:[%s6 + $0x18] sm:$0xf]
        %v722 = vld [vmem:[%s6 + $0x1c] sm:$0xf]
        %v723 = vld [vmem:[%s6 + $0x20] sm:$0xf]
        %v724 = vld [vmem:[%s6 + $0x24] sm:$0xf]
        %v725 = vld [vmem:[#allocation2 + $0x6] sm:$0xff]
        %v726 = vld [vmem:[#allocation2 + $0xe] sm:$0xff]
        %v727 = vld [vmem:[#allocation2 + $0x16] sm:$0xff]
        %v728 = vld [vmem:[#allocation2 + $0x1e] sm:$0xff]
        %v729 = vpack.c.bf16 %v725, %v725
        %v730 = vpack.c.bf16 %v726, %v726
        %v731 = vpack.c.bf16 %v727, %v727
        %v732 = vpack.c.bf16 %v728, %v728
        %vm733 = vcmask 125952
        %734 = vst.msk [vmem:[#allocation4] sm:$0xf] %vm733, %v729
        %735 = vst.msk [vmem:[#allocation4 + $0x4] sm:$0xf] %vm733, %v730
        %736 = vst.msk [vmem:[#allocation4 + $0x8] sm:$0xf] %vm733, %v731
        %737 = vst.msk [vmem:[#allocation4 + $0xc] sm:$0xf] %vm733, %v732
        %v738 = vld [vmem:[#allocation2 + $0x7] sm:$0xff]
        %v739 = vld [vmem:[#allocation2 + $0xf] sm:$0xff]
        %v740 = vld [vmem:[#allocation2 + $0x17] sm:$0xff]
        %v741 = vld [vmem:[#allocation2 + $0x1f] sm:$0xff]
        %v742 = vpack.c.bf16 %v738, %v738
        %v743 = vpack.c.bf16 %v739, %v739
        %v744 = vpack.c.bf16 %v740, %v740
        %v745 = vpack.c.bf16 %v741, %v741
        %750 = vrot.lane.b32.xlu0 %v742, 16
        %v751 = vpop.permute.xlu0 %750
        %752 = vrot.lane.b32.xlu0 %v743, 16
        %v753 = vpop.permute.xlu0 %752
        %754 = vrot.lane.b32.xlu0 %v744, 16
        %v755 = vpop.permute.xlu0 %754
        %756 = vrot.lane.b32.xlu0 %v745, 16
        %v757 = vpop.permute.xlu0 %756
        %vm762 = vcmask 257152
        %763 = vst.msk [vmem:[#allocation4] sm:$0xf] %vm762, %v751
        %764 = vst.msk [vmem:[#allocation4 + $0x4] sm:$0xf] %vm762, %v753
        %765 = vst.msk [vmem:[#allocation4 + $0x8] sm:$0xf] %vm762, %v755
        %766 = vst.msk [vmem:[#allocation4 + $0xc] sm:$0xf] %vm762, %v757
        %v767 = vld [vmem:[#allocation2 + $0x8] sm:$0xff]
        %v768 = vld [vmem:[#allocation2 + $0x10] sm:$0xff]
        %v769 = vld [vmem:[#allocation2 + $0x18] sm:$0xff]
        %v770 = vld [vmem:[#allocation2 + $0x20] sm:$0xff]
        %v771 = vpack.c.bf16 %v767, %v767
        %v772 = vpack.c.bf16 %v768, %v768
        %v773 = vpack.c.bf16 %v769, %v769
        %v774 = vpack.c.bf16 %v770, %v770
        %779 = vrot.lane.b32.xlu0 %v771, 32
        %v780 = vpop.permute.xlu0 %779
        %781 = vrot.lane.b32.xlu0 %v772, 32
        %v782 = vpop.permute.xlu0 %781
        %783 = vrot.lane.b32.xlu0 %v773, 32
        %v784 = vpop.permute.xlu0 %783
        %785 = vrot.lane.b32.xlu0 %v774, 32
        %v786 = vpop.permute.xlu0 %785
        %vm791 = vcmask 388352
        %792 = vst.msk [vmem:[#allocation4] sm:$0xf] %vm791, %v780
        %793 = vst.msk [vmem:[#allocation4 + $0x4] sm:$0xf] %vm791, %v782
        %794 = vst.msk [vmem:[#allocation4 + $0x8] sm:$0xf] %vm791, %v784
        %795 = vst.msk [vmem:[#allocation4 + $0xc] sm:$0xf] %vm791, %v786
        %v796 = vld [vmem:[#allocation2 + $0x9] sm:$0xff]
        %v797 = vld [vmem:[#allocation2 + $0x11] sm:$0xff]
        %v798 = vld [vmem:[#allocation2 + $0x19] sm:$0xff]
        %v799 = vld [vmem:[#allocation2 + $0x21] sm:$0xff]
        %v800 = vpack.c.bf16 %v796, %v796
        %v801 = vpack.c.bf16 %v797, %v797
        %v802 = vpack.c.bf16 %v798, %v798
        %v803 = vpack.c.bf16 %v799, %v799
        %808 = vrot.lane.b32.xlu0 %v800, 48
        %v809 = vpop.permute.xlu0 %808
        %810 = vrot.lane.b32.xlu0 %v801, 48
        %v811 = vpop.permute.xlu0 %810
        %812 = vrot.lane.b32.xlu0 %v802, 48
        %v813 = vpop.permute.xlu0 %812
        %814 = vrot.lane.b32.xlu0 %v803, 48
        %v815 = vpop.permute.xlu0 %814
        %vm820 = vcmask 519552
        %821 = vst.msk [vmem:[#allocation4] sm:$0xf] %vm820, %v809
        %822 = vst.msk [vmem:[#allocation4 + $0x4] sm:$0xf] %vm820, %v811
        %823 = vst.msk [vmem:[#allocation4 + $0x8] sm:$0xf] %vm820, %v813
        %824 = vst.msk [vmem:[#allocation4 + $0xc] sm:$0xf] %vm820, %v815
        %v825 = vld [vmem:[#allocation2 + $0xa] sm:$0xff]
        %v826 = vld [vmem:[#allocation2 + $0x12] sm:$0xff]
        %v827 = vld [vmem:[#allocation2 + $0x1a] sm:$0xff]
        %v828 = vld [vmem:[#allocation2 + $0x22] sm:$0xff]
        %v829 = vpack.c.bf16 %v825, %v825
        %v830 = vpack.c.bf16 %v826, %v826
        %v831 = vpack.c.bf16 %v827, %v827
        %v832 = vpack.c.bf16 %v828, %v828
        %837 = vrot.lane.b32.xlu0 %v829, 64
        %v838 = vpop.permute.xlu0 %837
        %839 = vrot.lane.b32.xlu0 %v830, 64
        %v840 = vpop.permute.xlu0 %839
        %841 = vrot.lane.b32.xlu0 %v831, 64
        %v842 = vpop.permute.xlu0 %841
        %843 = vrot.lane.b32.xlu0 %v832, 64
        %v844 = vpop.permute.xlu0 %843
        %vm849 = vcmask 650752
        %850 = vst.msk [vmem:[#allocation4] sm:$0xf] %vm849, %v838
        %851 = vst.msk [vmem:[#allocation4 + $0x4] sm:$0xf] %vm849, %v840
        %852 = vst.msk [vmem:[#allocation4 + $0x8] sm:$0xf] %vm849, %v842
        %853 = vst.msk [vmem:[#allocation4 + $0xc] sm:$0xf] %vm849, %v844
        %v854 = vld [vmem:[#allocation4] sm:$0xf]
        %v855 = vld [vmem:[#allocation4 + $0x4] sm:$0xf]
        %v856 = vld [vmem:[#allocation4 + $0x8] sm:$0xf]
        %v857 = vld [vmem:[#allocation4 + $0xc] sm:$0xf]
        %v858 = vld [vmem:[%s7] sm:$0x1]
        %v860 = vperm.slane %v858, 0
        %v866 = vunpack.c.l.b16 %v854
        %v867 = vunpack.c.l.b16 %v855
        %v868 = vunpack.c.l.b16 %v856
        %v869 = vunpack.c.l.b16 %v857
        %v870 = vpack.c.b16 %v867, %v866
        %v871 = vpack.c.b16 %v869, %v868
        %v882 = vunpack.c.l.b16 %v705
        %v883 = vunpack.c.l.b16 %v706
        %v884 = vunpack.c.l.b16 %v707
        %v885 = vunpack.c.l.b16 %v708
        %v886 = vunpack.c.l.b16 %v709
        %v887 = vunpack.c.l.b16 %v710
        %v888 = vunpack.c.l.b16 %v711
        %v889 = vunpack.c.l.b16 %v712
        %v890 = vunpack.c.l.b16 %v713
        %v891 = vunpack.c.l.b16 %v714
        %v892 = vpack.c.b16 %v883, %v882
        %v893 = vpack.c.b16 %v885, %v884
        %v894 = vpack.c.b16 %v887, %v886
        %v895 = vpack.c.b16 %v889, %v888
        %v896 = vpack.c.b16 %v891, %v890
        %vm902 = vcmask 654336
        %v904 = vsel %vm902, %v870, 0
        %v907 = vsel %vm902, %v871, 0
        %909 = vmatpush.bf16.msra.mxu0 0
        %910 = vmatpush.bf16.msra.mxu0 0
        %911 = vmatpush.bf16.msra.mxu0 0
        %912 = vmatpush.bf16.msra.mxu0 %v896
        %913 = vmatpush.bf16.msra.mxu0 %v895
        %914 = vmatpush.bf16.msra.mxu0 %v894
        %915 = vmatpush.bf16.msra.mxu0 %v893
        %916 = vmatpush.bf16.msra.mxu0 %v892
        %917 = vmatmul.bf16.gmra.mxu0 %v904
        %v918 = vpop.f32.mrf.mxu0
        %v919 = vadd.f32 %v860, %v918
        %v920 = vpop.f32.mrf.mxu0
        %v921 = vadd.f32 %v860, %v920
        %922 = vmatmul.bf16.gmra.mxu0 %v907
        %v923 = vpop.f32.mrf.mxu0
        %v924 = vadd.f32 %v860, %v923
        %v925 = vpop.f32.mrf.mxu0
        %v926 = vadd.f32 %v860, %v925
        %927 = vdwg.mxu0
        %v928 = vld [vmem:[%s8] sm:$0x1]
        %v930 = vperm.slane %v928, 0
        %v942 = vunpack.c.l.b16 %v715
        %v943 = vunpack.c.l.b16 %v716
        %v944 = vunpack.c.l.b16 %v717
        %v945 = vunpack.c.l.b16 %v718
        %v946 = vunpack.c.l.b16 %v719
        %v947 = vunpack.c.l.b16 %v720
        %v948 = vunpack.c.l.b16 %v721
        %v949 = vunpack.c.l.b16 %v722
        %v950 = vunpack.c.l.b16 %v723
        %v951 = vunpack.c.l.b16 %v724
        %v952 = vpack.c.b16 %v943, %v942
        %v953 = vpack.c.b16 %v945, %v944
        %v954 = vpack.c.b16 %v947, %v946
        %v955 = vpack.c.b16 %v949, %v948
        %v956 = vpack.c.b16 %v951, %v950
        %962 = vmatpush.bf16.msra.mxu0 0
        %963 = vmatpush.bf16.msra.mxu0 0
        %964 = vmatpush.bf16.msra.mxu0 0
        %965 = vmatpush.bf16.msra.mxu0 %v956
        %966 = vmatpush.bf16.msra.mxu0 %v955
        %967 = vmatpush.bf16.msra.mxu0 %v954
        %968 = vmatpush.bf16.msra.mxu0 %v953
        %969 = vmatpush.bf16.msra.mxu0 %v952
        %970 = vmatmul.bf16.gmra.mxu0 %v904
        %v971 = vpop.f32.mrf.mxu0
        %v972 = vadd.f32 %v930, %v971
        %v973 = vpop.f32.mrf.mxu0
        %v974 = vadd.f32 %v930, %v973
        %975 = vmatmul.bf16.gmra.mxu0 %v907
        %v976 = vpop.f32.mrf.mxu0
        %v977 = vadd.f32 %v930, %v976
        %v978 = vpop.f32.mrf.mxu0
        %v979 = vadd.f32 %v930, %v978
        %980 = vdwg.mxu0
        %v981 = vtanh.pop %v919
        %v982 = vtanh.pop %v921
        %v983 = vtanh.pop %v924
        %v984 = vtanh.pop %v926
        %v985 = vxor.u32 %v972, 2147483648
        %v986 = vxor.u32 %v974, 2147483648
        %v987 = vxor.u32 %v977, 2147483648
        %v988 = vxor.u32 %v979, 2147483648
        %v989 = vmul.f32 %v985, 1.442695
        %v990 = vpow.pop %v989
        %v991 = vmul.f32 %v986, 1.442695
        %v992 = vpow.pop %v991
        %v993 = vmul.f32 %v987, 1.442695
        %v994 = vpow.pop %v993
        %v995 = vmul.f32 %v988, 1.442695
        %v996 = vpow.pop %v995
        %v997 = vadd.f32 %v990, 1.0
        %v998 = vadd.f32 %v992, 1.0
        %v999 = vadd.f32 %v994, 1.0
        %v1000 = vadd.f32 %v996, 1.0
        %v1001 = vrcp.pop %v997
        %v1002 = vmul.f32 %v997, %v1001
        %v1003 = vsub.f32 1.0, %v1002
        %v1004 = vmul.f32 %v1001, %v1003
        %v1005 = vadd.f32 %v1001, %v1004
        %vm1006 = vweird.f32 %v997
        %vm1007 = vweird.f32 %v1001
        %vm1008 = vmor %vm1006, %vm1007
        %v1009 = vsel %vm1008, %v1001, %v1005
        %v1010 = vand.u32 2147483647, %v997
        %vm1011 = vcmp.eq.f32.partialorder %v1010, 8.507059e+37
        %v1012 = vand.u32 %v997, 2147483648
        %v1013 = vor.u32 1.1754944e-38, %v1012
        %v1014 = vsel %vm1011, %v1013, %v1009
        %v1015 = vmul.f32 1.0, %v1014
        %v1016 = vrcp.pop %v998
        %v1017 = vmul.f32 %v998, %v1016
        %v1018 = vsub.f32 1.0, %v1017
        %v1019 = vmul.f32 %v1016, %v1018
        %v1020 = vadd.f32 %v1016, %v1019
        %vm1021 = vweird.f32 %v998
        %vm1022 = vweird.f32 %v1016
        %vm1023 = vmor %vm1021, %vm1022
        %v1024 = vsel %vm1023, %v1016, %v1020
        %v1025 = vand.u32 2147483647, %v998
        %vm1026 = vcmp.eq.f32.partialorder %v1025, 8.507059e+37
        %v1027 = vand.u32 %v998, 2147483648
        %v1028 = vor.u32 1.1754944e-38, %v1027
        %v1029 = vsel %vm1026, %v1028, %v1024
        %v1030 = vmul.f32 1.0, %v1029
        %v1031 = vrcp.pop %v999
        %v1032 = vmul.f32 %v999, %v1031
        %v1033 = vsub.f32 1.0, %v1032
        %v1034 = vmul.f32 %v1031, %v1033
        %v1035 = vadd.f32 %v1031, %v1034
        %vm1036 = vweird.f32 %v999
        %vm1037 = vweird.f32 %v1031
        %vm1038 = vmor %vm1036, %vm1037
        %v1039 = vsel %vm1038, %v1031, %v1035
        %v1040 = vand.u32 2147483647, %v999
        %vm1041 = vcmp.eq.f32.partialorder %v1040, 8.507059e+37
        %v1042 = vand.u32 %v999, 2147483648
        %v1043 = vor.u32 1.1754944e-38, %v1042
        %v1044 = vsel %vm1041, %v1043, %v1039
        %v1045 = vmul.f32 1.0, %v1044
        %v1046 = vrcp.pop %v1000
        %v1047 = vmul.f32 %v1000, %v1046
        %v1048 = vsub.f32 1.0, %v1047
        %v1049 = vmul.f32 %v1046, %v1048
        %v1050 = vadd.f32 %v1046, %v1049
        %vm1051 = vweird.f32 %v1000
        %vm1052 = vweird.f32 %v1046
        %vm1053 = vmor %vm1051, %vm1052
        %v1054 = vsel %vm1053, %v1046, %v1050
        %v1055 = vand.u32 2147483647, %v1000
        %vm1056 = vcmp.eq.f32.partialorder %v1055, 8.507059e+37
        %v1057 = vand.u32 %v1000, 2147483648
        %v1058 = vor.u32 1.1754944e-38, %v1057
        %v1059 = vsel %vm1056, %v1058, %v1054
        %v1060 = vmul.f32 1.0, %v1059
        %v1061 = vmul.f32 %v981, %v1015
        %v1062 = vmul.f32 %v982, %v1030
        %v1063 = vmul.f32 %v983, %v1045
        %v1064 = vmul.f32 %v984, %v1060
        %v1065 = vpack.c.bf16 %v1062, %v1061
        %v1066 = vpack.c.bf16 %v1064, %v1063
        %v1067 = vld [vmem:[#allocation3] sm:$0xff]
        %v1068 = vld [vmem:[#allocation3 + $0x8] sm:$0xff]
        %v1069 = vld [vmem:[#allocation3 + $0x10] sm:$0xff]
        %v1070 = vld [vmem:[#allocation3 + $0x18] sm:$0xff]
        %v1071 = vld [vmem:[%s11] sm:$0xf]
        %v1072 = vld [vmem:[%s11 + $0x4] sm:$0xf]
        %v1073 = vld [vmem:[%s12] sm:$0x1]
        %v1075 = vperm.slane %v1073, 0
        %v1079 = vunpack.c.l.b16 %v1071
        %v1080 = vunpack.c.l.b16 %v1072
        %v1081 = vpack.c.b16 %v1080, %v1079
        %v1084 = vsel %vm694, %v1065, 0
        %v1087 = vsel %vm694, %v1066, 0
        %1089 = vmatpush.bf16.msra.mxu0 0
        %1090 = vmatpush.bf16.msra.mxu0 0
        %1091 = vmatpush.bf16.msra.mxu0 0
        %1092 = vmatpush.bf16.msra.mxu0 0
        %1093 = vmatpush.bf16.msra.mxu0 0
        %1094 = vmatpush.bf16.msra.mxu0 0
        %1095 = vmatpush.bf16.msra.mxu0 0
        %1096 = vmatpush.bf16.msra.mxu0 %v1081
        %1097 = vmatmul.bf16.gmra.mxu0 %v1084
        %v1098 = vpop.f32.mrf.mxu0
        %v1099 = vadd.f32 %v1075, %v1098
        %v1100 = vpop.f32.mrf.mxu0
        %v1101 = vadd.f32 %v1075, %v1100
        %1102 = vmatmul.bf16.gmra.mxu0 %v1087
        %v1103 = vpop.f32.mrf.mxu0
        %v1104 = vadd.f32 %v1075, %v1103
        %v1105 = vpop.f32.mrf.mxu0
        %v1106 = vadd.f32 %v1075, %v1105
        %1107 = vdwg.mxu0
        %v1108 = vadd.f32 %v1067, %v1099
        %v1109 = vadd.f32 %v1068, %v1101
        %v1110 = vadd.f32 %v1069, %v1104
        %v1111 = vadd.f32 %v1070, %v1106
        %1112 = vst.msk [vmem:[#allocation3] sm:$0xff] %vm694, %v1108
        %1113 = vst.msk [vmem:[#allocation3 + $0x8] sm:$0xff] %vm694, %v1109
        %1114 = vst.msk [vmem:[#allocation3 + $0x10] sm:$0xff] %vm694, %v1110
        %1115 = vst.msk [vmem:[#allocation3 + $0x18] sm:$0xff] %vm694, %v1111
        %v1116 = vld [vmem:[%s9] sm:$0xf]
        %v1117 = vld [vmem:[%s9 + $0x4] sm:$0xf]
        %v1118 = vld [vmem:[%s10] sm:$0x1]
        %v1120 = vperm.slane %v1118, 0
        %v1124 = vunpack.c.l.b16 %v1116
        %v1125 = vunpack.c.l.b16 %v1117
        %v1126 = vpack.c.b16 %v1125, %v1124
        %1128 = vmatpush.bf16.msra.mxu0 0
        %1129 = vmatpush.bf16.msra.mxu0 0
        %1130 = vmatpush.bf16.msra.mxu0 0
        %1131 = vmatpush.bf16.msra.mxu0 0
        %1132 = vmatpush.bf16.msra.mxu0 0
        %1133 = vmatpush.bf16.msra.mxu0 0
        %1134 = vmatpush.bf16.msra.mxu0 0
        %1135 = vmatpush.bf16.msra.mxu0 %v1126
        %1136 = vmatmul.bf16.gmra.mxu0 %v1084
        %v1137 = vpop.f32.mrf.mxu0
        %v1138 = vadd.f32 %v1120, %v1137
        %v1139 = vpop.f32.mrf.mxu0
        %v1140 = vadd.f32 %v1120, %v1139
        %1141 = vmatmul.bf16.gmra.mxu0 %v1087
        %v1142 = vpop.f32.mrf.mxu0
        %v1143 = vadd.f32 %v1120, %v1142
        %v1144 = vpop.f32.mrf.mxu0
        %v1145 = vadd.f32 %v1120, %v1144
        %1146 = vdwg.mxu0
        %v1147 = vld [vmem:[#allocation2 + $0x8] sm:$0xff]
        %v1148 = vld [vmem:[#allocation2 + $0x10] sm:$0xff]
        %v1149 = vld [vmem:[#allocation2 + $0x18] sm:$0xff]
        %v1150 = vld [vmem:[#allocation2 + $0x20] sm:$0xff]
        %v1151 = vadd.f32 %v1147, %v1138
        %v1152 = vadd.f32 %v1148, %v1140
        %v1153 = vadd.f32 %v1149, %v1143
        %v1154 = vadd.f32 %v1150, %v1145
        %v1155 = vmul.f32 %v1151, %v637
        %v1156 = vmul.f32 %v1152, %v638
        %v1157 = vmul.f32 %v1153, %v639
        %v1158 = vmul.f32 %v1154, %v640
        %1159 = vst.msk [vmem:[#allocation2 + $0x8] sm:$0xff] %vm694, %v1155
        %1160 = vst.msk [vmem:[#allocation2 + $0x10] sm:$0xff] %vm694, %v1156
        %1161 = vst.msk [vmem:[#allocation2 + $0x18] sm:$0xff] %vm694, %v1157
        %1162 = vst.msk [vmem:[#allocation2 + $0x20] sm:$0xff] %vm694, %v1158
        %s1163 = scalar_lea.vmem %s5, 40
        %v1164 = vld [vmem:[%s1163] sm:$0xf]
        %v1165 = vld [vmem:[%s1163 + $0x4] sm:$0xf]
        %v1166 = vld [vmem:[%s1163 + $0x8] sm:$0xf]
        %v1167 = vld [vmem:[%s1163 + $0xc] sm:$0xf]
        %v1168 = vld [vmem:[%s1163 + $0x10] sm:$0xf]
        %v1169 = vld [vmem:[%s1163 + $0x14] sm:$0xf]
        %v1170 = vld [vmem:[%s1163 + $0x18] sm:$0xf]
        %v1171 = vld [vmem:[%s1163 + $0x1c] sm:$0xf]
        %v1172 = vld [vmem:[%s1163 + $0x20] sm:$0xf]
        %v1173 = vld [vmem:[%s1163 + $0x24] sm:$0xf]
        %s1174 = scalar_lea.vmem %s6, 40
        %v1175 = vld [vmem:[%s1174] sm:$0xf]
        %v1176 = vld [vmem:[%s1174 + $0x4] sm:$0xf]
        %v1177 = vld [vmem:[%s1174 + $0x8] sm:$0xf]
        %v1178 = vld [vmem:[%s1174 + $0xc] sm:$0xf]
        %v1179 = vld [vmem:[%s1174 + $0x10] sm:$0xf]
        %v1180 = vld [vmem:[%s1174 + $0x14] sm:$0xf]
        %v1181 = vld [vmem:[%s1174 + $0x18] sm:$0xf]
        %v1182 = vld [vmem:[%s1174 + $0x1c] sm:$0xf]
        %v1183 = vld [vmem:[%s1174 + $0x20] sm:$0xf]
        %v1184 = vld [vmem:[%s1174 + $0x24] sm:$0xf]
        %v1185 = vld [vmem:[#allocation2 + $0x4] sm:$0xff]
        %v1186 = vld [vmem:[#allocation2 + $0xc] sm:$0xff]
        %v1187 = vld [vmem:[#allocation2 + $0x14] sm:$0xff]
        %v1188 = vld [vmem:[#allocation2 + $0x1c] sm:$0xff]
        %v1189 = vpack.c.bf16 %v1185, %v1185
        %v1190 = vpack.c.bf16 %v1186, %v1186
        %v1191 = vpack.c.bf16 %v1187, %v1187
        %v1192 = vpack.c.bf16 %v1188, %v1188
        %1193 = vst.msk [vmem:[#allocation4] sm:$0xf] %vm733, %v1189
        %1194 = vst.msk [vmem:[#allocation4 + $0x4] sm:$0xf] %vm733, %v1190
        %1195 = vst.msk [vmem:[#allocation4 + $0x8] sm:$0xf] %vm733, %v1191
        %1196 = vst.msk [vmem:[#allocation4 + $0xc] sm:$0xf] %vm733, %v1192
        %v1197 = vld [vmem:[#allocation2 + $0x6] sm:$0xff]
        %v1198 = vld [vmem:[#allocation2 + $0xe] sm:$0xff]
        %v1199 = vld [vmem:[#allocation2 + $0x16] sm:$0xff]
        %v1200 = vld [vmem:[#allocation2 + $0x1e] sm:$0xff]
        %v1201 = vpack.c.bf16 %v1197, %v1197
        %v1202 = vpack.c.bf16 %v1198, %v1198
        %v1203 = vpack.c.bf16 %v1199, %v1199
        %v1204 = vpack.c.bf16 %v1200, %v1200
        %1209 = vrot.lane.b32.xlu0 %v1201, 16
        %v1210 = vpop.permute.xlu0 %1209
        %1211 = vrot.lane.b32.xlu0 %v1202, 16
        %v1212 = vpop.permute.xlu0 %1211
        %1213 = vrot.lane.b32.xlu0 %v1203, 16
        %v1214 = vpop.permute.xlu0 %1213
        %1215 = vrot.lane.b32.xlu0 %v1204, 16
        %v1216 = vpop.permute.xlu0 %1215
        %1221 = vst.msk [vmem:[#allocation4] sm:$0xf] %vm762, %v1210
        %1222 = vst.msk [vmem:[#allocation4 + $0x4] sm:$0xf] %vm762, %v1212
        %1223 = vst.msk [vmem:[#allocation4 + $0x8] sm:$0xf] %vm762, %v1214
        %1224 = vst.msk [vmem:[#allocation4 + $0xc] sm:$0xf] %vm762, %v1216
        %v1225 = vld [vmem:[#allocation2 + $0x8] sm:$0xff]
        %v1226 = vld [vmem:[#allocation2 + $0x10] sm:$0xff]
        %v1227 = vld [vmem:[#allocation2 + $0x18] sm:$0xff]
        %v1228 = vld [vmem:[#allocation2 + $0x20] sm:$0xff]
        %v1229 = vpack.c.bf16 %v1225, %v1225
        %v1230 = vpack.c.bf16 %v1226, %v1226
        %v1231 = vpack.c.bf16 %v1227, %v1227
        %v1232 = vpack.c.bf16 %v1228, %v1228
        %1237 = vrot.lane.b32.xlu0 %v1229, 32
        %v1238 = vpop.permute.xlu0 %1237
        %1239 = vrot.lane.b32.xlu0 %v1230, 32
        %v1240 = vpop.permute.xlu0 %1239
        %1241 = vrot.lane.b32.xlu0 %v1231, 32
        %v1242 = vpop.permute.xlu0 %1241
        %1243 = vrot.lane.b32.xlu0 %v1232, 32
        %v1244 = vpop.permute.xlu0 %1243
        %1249 = vst.msk [vmem:[#allocation4] sm:$0xf] %vm791, %v1238
        %1250 = vst.msk [vmem:[#allocation4 + $0x4] sm:$0xf] %vm791, %v1240
        %1251 = vst.msk [vmem:[#allocation4 + $0x8] sm:$0xf] %vm791, %v1242
        %1252 = vst.msk [vmem:[#allocation4 + $0xc] sm:$0xf] %vm791, %v1244
        %v1253 = vld [vmem:[#allocation2 + $0xa] sm:$0xff]
        %v1254 = vld [vmem:[#allocation2 + $0x12] sm:$0xff]
        %v1255 = vld [vmem:[#allocation2 + $0x1a] sm:$0xff]
        %v1256 = vld [vmem:[#allocation2 + $0x22] sm:$0xff]
        %v1257 = vpack.c.bf16 %v1253, %v1253
        %v1258 = vpack.c.bf16 %v1254, %v1254
        %v1259 = vpack.c.bf16 %v1255, %v1255
        %v1260 = vpack.c.bf16 %v1256, %v1256
        %1265 = vrot.lane.b32.xlu0 %v1257, 48
        %v1266 = vpop.permute.xlu0 %1265
        %1267 = vrot.lane.b32.xlu0 %v1258, 48
        %v1268 = vpop.permute.xlu0 %1267
        %1269 = vrot.lane.b32.xlu0 %v1259, 48
        %v1270 = vpop.permute.xlu0 %1269
        %1271 = vrot.lane.b32.xlu0 %v1260, 48
        %v1272 = vpop.permute.xlu0 %1271
        %1277 = vst.msk [vmem:[#allocation4] sm:$0xf] %vm820, %v1266
        %1278 = vst.msk [vmem:[#allocation4 + $0x4] sm:$0xf] %vm820, %v1268
        %1279 = vst.msk [vmem:[#allocation4 + $0x8] sm:$0xf] %vm820, %v1270
        %1280 = vst.msk [vmem:[#allocation4 + $0xc] sm:$0xf] %vm820, %v1272
        %v1281 = vld [vmem:[#allocation2 + $0xc] sm:$0xff]
        %v1282 = vld [vmem:[#allocation2 + $0x14] sm:$0xff]
        %v1283 = vld [vmem:[#allocation2 + $0x1c] sm:$0xff]
        %v1284 = vld [vmem:[#allocation2 + $0x24] sm:$0xff]
        %v1285 = vpack.c.bf16 %v1281, %v1281
        %v1286 = vpack.c.bf16 %v1282, %v1282
        %v1287 = vpack.c.bf16 %v1283, %v1283
        %v1288 = vpack.c.bf16 %v1284, %v1284
        %1293 = vrot.lane.b32.xlu0 %v1285, 64
        %v1294 = vpop.permute.xlu0 %1293
        %1295 = vrot.lane.b32.xlu0 %v1286, 64
        %v1296 = vpop.permute.xlu0 %1295
        %1297 = vrot.lane.b32.xlu0 %v1287, 64
        %v1298 = vpop.permute.xlu0 %1297
        %1299 = vrot.lane.b32.xlu0 %v1288, 64
        %v1300 = vpop.permute.xlu0 %1299
        %1305 = vst.msk [vmem:[#allocation4] sm:$0xf] %vm849, %v1294
        %1306 = vst.msk [vmem:[#allocation4 + $0x4] sm:$0xf] %vm849, %v1296
        %1307 = vst.msk [vmem:[#allocation4 + $0x8] sm:$0xf] %vm849, %v1298
        %1308 = vst.msk [vmem:[#allocation4 + $0xc] sm:$0xf] %vm849, %v1300
        %v1309 = vld [vmem:[#allocation4] sm:$0xf]
        %v1310 = vld [vmem:[#allocation4 + $0x4] sm:$0xf]
        %v1311 = vld [vmem:[#allocation4 + $0x8] sm:$0xf]
        %v1312 = vld [vmem:[#allocation4 + $0xc] sm:$0xf]
        %s1313 = scalar_lea.vmem %s7, 1
        %v1314 = vld [vmem:[%s1313] sm:$0x1]
        %v1316 = vperm.slane %v1314, 0
        %v1322 = vunpack.c.l.b16 %v1309
        %v1323 = vunpack.c.l.b16 %v1310
        %v1324 = vunpack.c.l.b16 %v1311
        %v1325 = vunpack.c.l.b16 %v1312
        %v1326 = vpack.c.b16 %v1323, %v1322
        %v1327 = vpack.c.b16 %v1325, %v1324
        %v1338 = vunpack.c.l.b16 %v1164
        %v1339 = vunpack.c.l.b16 %v1165
        %v1340 = vunpack.c.l.b16 %v1166
        %v1341 = vunpack.c.l.b16 %v1167
        %v1342 = vunpack.c.l.b16 %v1168
        %v1343 = vunpack.c.l.b16 %v1169
        %v1344 = vunpack.c.l.b16 %v1170
        %v1345 = vunpack.c.l.b16 %v1171
        %v1346 = vunpack.c.l.b16 %v1172
        %v1347 = vunpack.c.l.b16 %v1173
        %v1348 = vpack.c.b16 %v1339, %v1338
        %v1349 = vpack.c.b16 %v1341, %v1340
        %v1350 = vpack.c.b16 %v1343, %v1342
        %v1351 = vpack.c.b16 %v1345, %v1344
        %v1352 = vpack.c.b16 %v1347, %v1346
        %v1359 = vsel %vm902, %v1326, 0
        %v1362 = vsel %vm902, %v1327, 0
        %1364 = vmatpush.bf16.msra.mxu0 0
        %1365 = vmatpush.bf16.msra.mxu0 0
        %1366 = vmatpush.bf16.msra.mxu0 0
        %1367 = vmatpush.bf16.msra.mxu0 %v1352
        %1368 = vmatpush.bf16.msra.mxu0 %v1351
        %1369 = vmatpush.bf16.msra.mxu0 %v1350
        %1370 = vmatpush.bf16.msra.mxu0 %v1349
        %1371 = vmatpush.bf16.msra.mxu0 %v1348
        %1372 = vmatmul.bf16.gmra.mxu0 %v1359
        %v1373 = vpop.f32.mrf.mxu0
        %v1374 = vadd.f32 %v1316, %v1373
        %v1375 = vpop.f32.mrf.mxu0
        %v1376 = vadd.f32 %v1316, %v1375
        %1377 = vmatmul.bf16.gmra.mxu0 %v1362
        %v1378 = vpop.f32.mrf.mxu0
        %v1379 = vadd.f32 %v1316, %v1378
        %v1380 = vpop.f32.mrf.mxu0
        %v1381 = vadd.f32 %v1316, %v1380
        %1382 = vdwg.mxu0
        %s1383 = scalar_lea.vmem %s8, 1
        %v1384 = vld [vmem:[%s1383] sm:$0x1]
        %v1386 = vperm.slane %v1384, 0
        %v1398 = vunpack.c.l.b16 %v1175
        %v1399 = vunpack.c.l.b16 %v1176
        %v1400 = vunpack.c.l.b16 %v1177
        %v1401 = vunpack.c.l.b16 %v1178
        %v1402 = vunpack.c.l.b16 %v1179
        %v1403 = vunpack.c.l.b16 %v1180
        %v1404 = vunpack.c.l.b16 %v1181
        %v1405 = vunpack.c.l.b16 %v1182
        %v1406 = vunpack.c.l.b16 %v1183
        %v1407 = vunpack.c.l.b16 %v1184
        %v1408 = vpack.c.b16 %v1399, %v1398
        %v1409 = vpack.c.b16 %v1401, %v1400
        %v1410 = vpack.c.b16 %v1403, %v1402
        %v1411 = vpack.c.b16 %v1405, %v1404
        %v1412 = vpack.c.b16 %v1407, %v1406
        %1418 = vmatpush.bf16.msra.mxu0 0
        %1419 = vmatpush.bf16.msra.mxu0 0
        %1420 = vmatpush.bf16.msra.mxu0 0
        %1421 = vmatpush.bf16.msra.mxu0 %v1412
        %1422 = vmatpush.bf16.msra.mxu0 %v1411
        %1423 = vmatpush.bf16.msra.mxu0 %v1410
        %1424 = vmatpush.bf16.msra.mxu0 %v1409
        %1425 = vmatpush.bf16.msra.mxu0 %v1408
        %1426 = vmatmul.bf16.gmra.mxu0 %v1359
        %v1427 = vpop.f32.mrf.mxu0
        %v1428 = vadd.f32 %v1386, %v1427
        %v1429 = vpop.f32.mrf.mxu0
        %v1430 = vadd.f32 %v1386, %v1429
        %1431 = vmatmul.bf16.gmra.mxu0 %v1362
        %v1432 = vpop.f32.mrf.mxu0
        %v1433 = vadd.f32 %v1386, %v1432
        %v1434 = vpop.f32.mrf.mxu0
        %v1435 = vadd.f32 %v1386, %v1434
        %1436 = vdwg.mxu0
        %v1437 = vtanh.pop %v1374
        %v1438 = vtanh.pop %v1376
        %v1439 = vtanh.pop %v1379
        %v1440 = vtanh.pop %v1381
        %v1441 = vxor.u32 %v1428, 2147483648
        %v1442 = vxor.u32 %v1430, 2147483648
        %v1443 = vxor.u32 %v1433, 2147483648
        %v1444 = vxor.u32 %v1435, 2147483648
        %v1445 = vmul.f32 %v1441, 1.442695
        %v1446 = vpow.pop %v1445
        %v1447 = vmul.f32 %v1442, 1.442695
        %v1448 = vpow.pop %v1447
        %v1449 = vmul.f32 %v1443, 1.442695
        %v1450 = vpow.pop %v1449
        %v1451 = vmul.f32 %v1444, 1.442695
        %v1452 = vpow.pop %v1451
        %v1453 = vadd.f32 %v1446, 1.0
        %v1454 = vadd.f32 %v1448, 1.0
        %v1455 = vadd.f32 %v1450, 1.0
        %v1456 = vadd.f32 %v1452, 1.0
        %v1457 = vrcp.pop %v1453
        %v1458 = vmul.f32 %v1453, %v1457
        %v1459 = vsub.f32 1.0, %v1458
        %v1460 = vmul.f32 %v1457, %v1459
        %v1461 = vadd.f32 %v1457, %v1460
        %vm1462 = vweird.f32 %v1453
        %vm1463 = vweird.f32 %v1457
        %vm1464 = vmor %vm1462, %vm1463
        %v1465 = vsel %vm1464, %v1457, %v1461
        %v1466 = vand.u32 2147483647, %v1453
        %vm1467 = vcmp.eq.f32.partialorder %v1466, 8.507059e+37
        %v1468 = vand.u32 %v1453, 2147483648
        %v1469 = vor.u32 1.1754944e-38, %v1468
        %v1470 = vsel %vm1467, %v1469, %v1465
        %v1471 = vmul.f32 1.0, %v1470
        %v1472 = vrcp.pop %v1454
        %v1473 = vmul.f32 %v1454, %v1472
        %v1474 = vsub.f32 1.0, %v1473
        %v1475 = vmul.f32 %v1472, %v1474
        %v1476 = vadd.f32 %v1472, %v1475
        %vm1477 = vweird.f32 %v1454
        %vm1478 = vweird.f32 %v1472
        %vm1479 = vmor %vm1477, %vm1478
        %v1480 = vsel %vm1479, %v1472, %v1476
        %v1481 = vand.u32 2147483647, %v1454
        %vm1482 = vcmp.eq.f32.partialorder %v1481, 8.507059e+37
        %v1483 = vand.u32 %v1454, 2147483648
        %v1484 = vor.u32 1.1754944e-38, %v1483
        %v1485 = vsel %vm1482, %v1484, %v1480
        %v1486 = vmul.f32 1.0, %v1485
        %v1487 = vrcp.pop %v1455
        %v1488 = vmul.f32 %v1455, %v1487
        %v1489 = vsub.f32 1.0, %v1488
        %v1490 = vmul.f32 %v1487, %v1489
        %v1491 = vadd.f32 %v1487, %v1490
        %vm1492 = vweird.f32 %v1455
        %vm1493 = vweird.f32 %v1487
        %vm1494 = vmor %vm1492, %vm1493
        %v1495 = vsel %vm1494, %v1487, %v1491
        %v1496 = vand.u32 2147483647, %v1455
        %vm1497 = vcmp.eq.f32.partialorder %v1496, 8.507059e+37
        %v1498 = vand.u32 %v1455, 2147483648
        %v1499 = vor.u32 1.1754944e-38, %v1498
        %v1500 = vsel %vm1497, %v1499, %v1495
        %v1501 = vmul.f32 1.0, %v1500
        %v1502 = vrcp.pop %v1456
        %v1503 = vmul.f32 %v1456, %v1502
        %v1504 = vsub.f32 1.0, %v1503
        %v1505 = vmul.f32 %v1502, %v1504
        %v1506 = vadd.f32 %v1502, %v1505
        %vm1507 = vweird.f32 %v1456
        %vm1508 = vweird.f32 %v1502
        %vm1509 = vmor %vm1507, %vm1508
        %v1510 = vsel %vm1509, %v1502, %v1506
        %v1511 = vand.u32 2147483647, %v1456
        %vm1512 = vcmp.eq.f32.partialorder %v1511, 8.507059e+37
        %v1513 = vand.u32 %v1456, 2147483648
        %v1514 = vor.u32 1.1754944e-38, %v1513
        %v1515 = vsel %vm1512, %v1514, %v1510
        %v1516 = vmul.f32 1.0, %v1515
        %v1517 = vmul.f32 %v1437, %v1471
        %v1518 = vmul.f32 %v1438, %v1486
        %v1519 = vmul.f32 %v1439, %v1501
        %v1520 = vmul.f32 %v1440, %v1516
        %v1521 = vpack.c.bf16 %v1518, %v1517
        %v1522 = vpack.c.bf16 %v1520, %v1519
        %v1523 = vld [vmem:[#allocation3] sm:$0xff]
        %v1524 = vld [vmem:[#allocation3 + $0x8] sm:$0xff]
        %v1525 = vld [vmem:[#allocation3 + $0x10] sm:$0xff]
        %v1526 = vld [vmem:[#allocation3 + $0x18] sm:$0xff]
        %s1527 = scalar_lea.vmem %s11, 8
        %v1528 = vld [vmem:[%s1527] sm:$0xf]
        %v1529 = vld [vmem:[%s1527 + $0x4] sm:$0xf]
        %s1530 = scalar_lea.vmem %s12, 1
        %v1531 = vld [vmem:[%s1530] sm:$0x1]
        %v1533 = vperm.slane %v1531, 0
        %v1537 = vunpack.c.l.b16 %v1528
        %v1538 = vunpack.c.l.b16 %v1529
        %v1539 = vpack.c.b16 %v1538, %v1537
        %v1542 = vsel %vm694, %v1521, 0
        %v1545 = vsel %vm694, %v1522, 0
        %1547 = vmatpush.bf16.msra.mxu0 0
        %1548 = vmatpush.bf16.msra.mxu0 0
        %1549 = vmatpush.bf16.msra.mxu0 0
        %1550 = vmatpush.bf16.msra.mxu0 0
        %1551 = vmatpush.bf16.msra.mxu0 0
        %1552 = vmatpush.bf16.msra.mxu0 0
        %1553 = vmatpush.bf16.msra.mxu0 0
        %1554 = vmatpush.bf16.msra.mxu0 %v1539
        %1555 = vmatmul.bf16.gmra.mxu0 %v1542
        %v1556 = vpop.f32.mrf.mxu0
        %v1557 = vadd.f32 %v1533, %v1556
        %v1558 = vpop.f32.mrf.mxu0
        %v1559 = vadd.f32 %v1533, %v1558
        %1560 = vmatmul.bf16.gmra.mxu0 %v1545
        %v1561 = vpop.f32.mrf.mxu0
        %v1562 = vadd.f32 %v1533, %v1561
        %v1563 = vpop.f32.mrf.mxu0
        %v1564 = vadd.f32 %v1533, %v1563
        %1565 = vdwg.mxu0
        %v1566 = vadd.f32 %v1523, %v1557
        %v1567 = vadd.f32 %v1524, %v1559
        %v1568 = vadd.f32 %v1525, %v1562
        %v1569 = vadd.f32 %v1526, %v1564
        %1570 = vst.msk [vmem:[#allocation3] sm:$0xff] %vm694, %v1566
        %1571 = vst.msk [vmem:[#allocation3 + $0x8] sm:$0xff] %vm694, %v1567
        %1572 = vst.msk [vmem:[#allocation3 + $0x10] sm:$0xff] %vm694, %v1568
        %1573 = vst.msk [vmem:[#allocation3 + $0x18] sm:$0xff] %vm694, %v1569
        %s1574 = scalar_lea.vmem %s9, 8
        %v1575 = vld [vmem:[%s1574] sm:$0xf]
        %v1576 = vld [vmem:[%s1574 + $0x4] sm:$0xf]
        %s1577 = scalar_lea.vmem %s10, 1
        %v1578 = vld [vmem:[%s1577] sm:$0x1]
        %v1580 = vperm.slane %v1578, 0
        %v1584 = vunpack.c.l.b16 %v1575
        %v1585 = vunpack.c.l.b16 %v1576
        %v1586 = vpack.c.b16 %v1585, %v1584
        %1588 = vmatpush.bf16.msra.mxu0 0
        %1589 = vmatpush.bf16.msra.mxu0 0
        %1590 = vmatpush.bf16.msra.mxu0 0
        %1591 = vmatpush.bf16.msra.mxu0 0
        %1592 = vmatpush.bf16.msra.mxu0 0
        %1593 = vmatpush.bf16.msra.mxu0 0
        %1594 = vmatpush.bf16.msra.mxu0 0
        %1595 = vmatpush.bf16.msra.mxu0 %v1586
        %1596 = vmatmul.bf16.gmra.mxu0 %v1542
        %v1597 = vpop.f32.mrf.mxu0
        %v1598 = vadd.f32 %v1580, %v1597
        %v1599 = vpop.f32.mrf.mxu0
        %v1600 = vadd.f32 %v1580, %v1599
        %1601 = vmatmul.bf16.gmra.mxu0 %v1545
        %v1602 = vpop.f32.mrf.mxu0
        %v1603 = vadd.f32 %v1580, %v1602
        %v1604 = vpop.f32.mrf.mxu0
        %v1605 = vadd.f32 %v1580, %v1604
        %1606 = vdwg.mxu0
        %v1607 = vld [vmem:[#allocation2 + $0x8] sm:$0xff]
        %v1608 = vld [vmem:[#allocation2 + $0x10] sm:$0xff]
        %v1609 = vld [vmem:[#allocation2 + $0x18] sm:$0xff]
        %v1610 = vld [vmem:[#allocation2 + $0x20] sm:$0xff]
        %v1611 = vadd.f32 %v1607, %v1598
        %v1612 = vadd.f32 %v1608, %v1600
        %v1613 = vadd.f32 %v1609, %v1603
        %v1614 = vadd.f32 %v1610, %v1605
        %v1615 = vmul.f32 %v1611, %v637
        %v1616 = vmul.f32 %v1612, %v638
        %v1617 = vmul.f32 %v1613, %v639
        %v1618 = vmul.f32 %v1614, %v640
        %1619 = vst.msk [vmem:[#allocation2 + $0x8] sm:$0xff] %vm694, %v1615
        %1620 = vst.msk [vmem:[#allocation2 + $0x10] sm:$0xff] %vm694, %v1616
        %1621 = vst.msk [vmem:[#allocation2 + $0x18] sm:$0xff] %vm694, %v1617
        %1622 = vst.msk [vmem:[#allocation2 + $0x20] sm:$0xff] %vm694, %v1618
        %s1623 = scalar_lea.vmem %s5, 80
        %v1624 = vld [vmem:[%s1623] sm:$0xf]
        %v1625 = vld [vmem:[%s1623 + $0x4] sm:$0xf]
        %v1626 = vld [vmem:[%s1623 + $0x8] sm:$0xf]
        %v1627 = vld [vmem:[%s1623 + $0xc] sm:$0xf]
        %v1628 = vld [vmem:[%s1623 + $0x10] sm:$0xf]
        %v1629 = vld [vmem:[%s1623 + $0x14] sm:$0xf]
        %v1630 = vld [vmem:[%s1623 + $0x18] sm:$0xf]
        %v1631 = vld [vmem:[%s1623 + $0x1c] sm:$0xf]
        %v1632 = vld [vmem:[%s1623 + $0x20] sm:$0xf]
        %v1633 = vld [vmem:[%s1623 + $0x24] sm:$0xf]
        %s1634 = scalar_lea.vmem %s6, 80
        %v1635 = vld [vmem:[%s1634] sm:$0xf]
        %v1636 = vld [vmem:[%s1634 + $0x4] sm:$0xf]
        %v1637 = vld [vmem:[%s1634 + $0x8] sm:$0xf]
        %v1638 = vld [vmem:[%s1634 + $0xc] sm:$0xf]
        %v1639 = vld [vmem:[%s1634 + $0x10] sm:$0xf]
        %v1640 = vld [vmem:[%s1634 + $0x14] sm:$0xf]
        %v1641 = vld [vmem:[%s1634 + $0x18] sm:$0xf]
        %v1642 = vld [vmem:[%s1634 + $0x1c] sm:$0xf]
        %v1643 = vld [vmem:[%s1634 + $0x20] sm:$0xf]
        %v1644 = vld [vmem:[%s1634 + $0x24] sm:$0xf]
        %v1645 = vld [vmem:[#allocation2] sm:$0xff]
        %v1646 = vld [vmem:[#allocation2 + $0x8] sm:$0xff]
        %v1647 = vld [vmem:[#allocation2 + $0x10] sm:$0xff]
        %v1648 = vld [vmem:[#allocation2 + $0x18] sm:$0xff]
        %v1649 = vpack.c.bf16 %v1645, %v1645
        %v1650 = vpack.c.bf16 %v1646, %v1646
        %v1651 = vpack.c.bf16 %v1647, %v1647
        %v1652 = vpack.c.bf16 %v1648, %v1648
        %1653 = vst.msk [vmem:[#allocation4] sm:$0xf] %vm733, %v1649
        %1654 = vst.msk [vmem:[#allocation4 + $0x4] sm:$0xf] %vm733, %v1650
        %1655 = vst.msk [vmem:[#allocation4 + $0x8] sm:$0xf] %vm733, %v1651
        %1656 = vst.msk [vmem:[#allocation4 + $0xc] sm:$0xf] %vm733, %v1652
        %v1657 = vld [vmem:[#allocation2 + $0x4] sm:$0xff]
        %v1658 = vld [vmem:[#allocation2 + $0xc] sm:$0xff]
        %v1659 = vld [vmem:[#allocation2 + $0x14] sm:$0xff]
        %v1660 = vld [vmem:[#allocation2 + $0x1c] sm:$0xff]
        %v1661 = vpack.c.bf16 %v1657, %v1657
        %v1662 = vpack.c.bf16 %v1658, %v1658
        %v1663 = vpack.c.bf16 %v1659, %v1659
        %v1664 = vpack.c.bf16 %v1660, %v1660
        %1669 = vrot.lane.b32.xlu0 %v1661, 16
        %v1670 = vpop.permute.xlu0 %1669
        %1671 = vrot.lane.b32.xlu0 %v1662, 16
        %v1672 = vpop.permute.xlu0 %1671
        %1673 = vrot.lane.b32.xlu0 %v1663, 16
        %v1674 = vpop.permute.xlu0 %1673
        %1675 = vrot.lane.b32.xlu0 %v1664, 16
        %v1676 = vpop.permute.xlu0 %1675
        %1681 = vst.msk [vmem:[#allocation4] sm:$0xf] %vm762, %v1670
        %1682 = vst.msk [vmem:[#allocation4 + $0x4] sm:$0xf] %vm762, %v1672
        %1683 = vst.msk [vmem:[#allocation4 + $0x8] sm:$0xf] %vm762, %v1674
        %1684 = vst.msk [vmem:[#allocation4 + $0xc] sm:$0xf] %vm762, %v1676
        %v1685 = vld [vmem:[#allocation2 + $0x8] sm:$0xff]
        %v1686 = vld [vmem:[#allocation2 + $0x10] sm:$0xff]
        %v1687 = vld [vmem:[#allocation2 + $0x18] sm:$0xff]
        %v1688 = vld [vmem:[#allocation2 + $0x20] sm:$0xff]
        %v1689 = vpack.c.bf16 %v1685, %v1685
        %v1690 = vpack.c.bf16 %v1686, %v1686
        %v1691 = vpack.c.bf16 %v1687, %v1687
        %v1692 = vpack.c.bf16 %v1688, %v1688
        %1697 = vrot.lane.b32.xlu0 %v1689, 32
        %v1698 = vpop.permute.xlu0 %1697
        %1699 = vrot.lane.b32.xlu0 %v1690, 32
        %v1700 = vpop.permute.xlu0 %1699
        %1701 = vrot.lane.b32.xlu0 %v1691, 32
        %v1702 = vpop.permute.xlu0 %1701
        %1703 = vrot.lane.b32.xlu0 %v1692, 32
        %v1704 = vpop.permute.xlu0 %1703
        %1709 = vst.msk [vmem:[#allocation4] sm:$0xf] %vm791, %v1698
        %1710 = vst.msk [vmem:[#allocation4 + $0x4] sm:$0xf] %vm791, %v1700
        %1711 = vst.msk [vmem:[#allocation4 + $0x8] sm:$0xf] %vm791, %v1702
        %1712 = vst.msk [vmem:[#allocation4 + $0xc] sm:$0xf] %vm791, %v1704
        %v1713 = vld [vmem:[#allocation2 + $0xc] sm:$0xff]
        %v1714 = vld [vmem:[#allocation2 + $0x14] sm:$0xff]
        %v1715 = vld [vmem:[#allocation2 + $0x1c] sm:$0xff]
        %v1716 = vld [vmem:[#allocation2 + $0x24] sm:$0xff]
        %v1717 = vpack.c.bf16 %v1713, %v1713
        %v1718 = vpack.c.bf16 %v1714, %v1714
        %v1719 = vpack.c.bf16 %v1715, %v1715
        %v1720 = vpack.c.bf16 %v1716, %v1716
        %1725 = vrot.lane.b32.xlu0 %v1717, 48
        %v1726 = vpop.permute.xlu0 %1725
        %1727 = vrot.lane.b32.xlu0 %v1718, 48
        %v1728 = vpop.permute.xlu0 %1727
        %1729 = vrot.lane.b32.xlu0 %v1719, 48
        %v1730 = vpop.permute.xlu0 %1729
        %1731 = vrot.lane.b32.xlu0 %v1720, 48
        %v1732 = vpop.permute.xlu0 %1731
        %1737 = vst.msk [vmem:[#allocation4] sm:$0xf] %vm820, %v1726
        %1738 = vst.msk [vmem:[#allocation4 + $0x4] sm:$0xf] %vm820, %v1728
        %1739 = vst.msk [vmem:[#allocation4 + $0x8] sm:$0xf] %vm820, %v1730
        %1740 = vst.msk [vmem:[#allocation4 + $0xc] sm:$0xf] %vm820, %v1732
        %v1741 = vld [vmem:[#allocation2 + $0x10] sm:$0xff]
        %v1742 = vld [vmem:[#allocation2 + $0x18] sm:$0xff]
        %v1743 = vld [vmem:[#allocation2 + $0x20] sm:$0xff]
        %v1744 = vld [vmem:[#allocation2 + $0x28] sm:$0xff]
        %v1745 = vpack.c.bf16 %v1741, %v1741
        %v1746 = vpack.c.bf16 %v1742, %v1742
        %v1747 = vpack.c.bf16 %v1743, %v1743
        %v1748 = vpack.c.bf16 %v1744, %v1744
        %1753 = vrot.lane.b32.xlu0 %v1745, 64
        %v1754 = vpop.permute.xlu0 %1753
        %1755 = vrot.lane.b32.xlu0 %v1746, 64
        %v1756 = vpop.permute.xlu0 %1755
        %1757 = vrot.lane.b32.xlu0 %v1747, 64
        %v1758 = vpop.permute.xlu0 %1757
        %1759 = vrot.lane.b32.xlu0 %v1748, 64
        %v1760 = vpop.permute.xlu0 %1759
        %1765 = vst.msk [vmem:[#allocation4] sm:$0xf] %vm849, %v1754
        %1766 = vst.msk [vmem:[#allocation4 + $0x4] sm:$0xf] %vm849, %v1756
        %1767 = vst.msk [vmem:[#allocation4 + $0x8] sm:$0xf] %vm849, %v1758
        %1768 = vst.msk [vmem:[#allocation4 + $0xc] sm:$0xf] %vm849, %v1760
        %v1769 = vld [vmem:[#allocation4] sm:$0xf]
        %v1770 = vld [vmem:[#allocation4 + $0x4] sm:$0xf]
        %v1771 = vld [vmem:[#allocation4 + $0x8] sm:$0xf]
        %v1772 = vld [vmem:[#allocation4 + $0xc] sm:$0xf]
        %s1773 = scalar_lea.vmem %s7, 2
        %v1774 = vld [vmem:[%s1773] sm:$0x1]
        %v1776 = vperm.slane %v1774, 0
        %v1782 = vunpack.c.l.b16 %v1769
        %v1783 = vunpack.c.l.b16 %v1770
        %v1784 = vunpack.c.l.b16 %v1771
        %v1785 = vunpack.c.l.b16 %v1772
        %v1786 = vpack.c.b16 %v1783, %v1782
        %v1787 = vpack.c.b16 %v1785, %v1784
        %v1798 = vunpack.c.l.b16 %v1624
        %v1799 = vunpack.c.l.b16 %v1625
        %v1800 = vunpack.c.l.b16 %v1626
        %v1801 = vunpack.c.l.b16 %v1627
        %v1802 = vunpack.c.l.b16 %v1628
        %v1803 = vunpack.c.l.b16 %v1629
        %v1804 = vunpack.c.l.b16 %v1630
        %v1805 = vunpack.c.l.b16 %v1631
        %v1806 = vunpack.c.l.b16 %v1632
        %v1807 = vunpack.c.l.b16 %v1633
        %v1808 = vpack.c.b16 %v1799, %v1798
        %v1809 = vpack.c.b16 %v1801, %v1800
        %v1810 = vpack.c.b16 %v1803, %v1802
        %v1811 = vpack.c.b16 %v1805, %v1804
        %v1812 = vpack.c.b16 %v1807, %v1806
        %v1819 = vsel %vm902, %v1786, 0
        %v1822 = vsel %vm902, %v1787, 0
        %1824 = vmatpush.bf16.msra.mxu0 0
        %1825 = vmatpush.bf16.msra.mxu0 0
        %1826 = vmatpush.bf16.msra.mxu0 0
        %1827 = vmatpush.bf16.msra.mxu0 %v1812
        %1828 = vmatpush.bf16.msra.mxu0 %v1811
        %1829 = vmatpush.bf16.msra.mxu0 %v1810
        %1830 = vmatpush.bf16.msra.mxu0 %v1809
        %1831 = vmatpush.bf16.msra.mxu0 %v1808
        %1832 = vmatmul.bf16.gmra.mxu0 %v1819
        %v1833 = vpop.f32.mrf.mxu0
        %v1834 = vadd.f32 %v1776, %v1833
        %v1835 = vpop.f32.mrf.mxu0
        %v1836 = vadd.f32 %v1776, %v1835
        %1837 = vmatmul.bf16.gmra.mxu0 %v1822
        %v1838 = vpop.f32.mrf.mxu0
        %v1839 = vadd.f32 %v1776, %v1838
        %v1840 = vpop.f32.mrf.mxu0
        %v1841 = vadd.f32 %v1776, %v1840
        %1842 = vdwg.mxu0
        %s1843 = scalar_lea.vmem %s8, 2
        %v1844 = vld [vmem:[%s1843] sm:$0x1]
        %v1846 = vperm.slane %v1844, 0
        %v1858 = vunpack.c.l.b16 %v1635
        %v1859 = vunpack.c.l.b16 %v1636
        %v1860 = vunpack.c.l.b16 %v1637
        %v1861 = vunpack.c.l.b16 %v1638
        %v1862 = vunpack.c.l.b16 %v1639
        %v1863 = vunpack.c.l.b16 %v1640
        %v1864 = vunpack.c.l.b16 %v1641
        %v1865 = vunpack.c.l.b16 %v1642
        %v1866 = vunpack.c.l.b16 %v1643
        %v1867 = vunpack.c.l.b16 %v1644
        %v1868 = vpack.c.b16 %v1859, %v1858
        %v1869 = vpack.c.b16 %v1861, %v1860
        %v1870 = vpack.c.b16 %v1863, %v1862
        %v1871 = vpack.c.b16 %v1865, %v1864
        %v1872 = vpack.c.b16 %v1867, %v1866
        %1878 = vmatpush.bf16.msra.mxu0 0
        %1879 = vmatpush.bf16.msra.mxu0 0
        %1880 = vmatpush.bf16.msra.mxu0 0
        %1881 = vmatpush.bf16.msra.mxu0 %v1872
        %1882 = vmatpush.bf16.msra.mxu0 %v1871
        %1883 = vmatpush.bf16.msra.mxu0 %v1870
        %1884 = vmatpush.bf16.msra.mxu0 %v1869
        %1885 = vmatpush.bf16.msra.mxu0 %v1868
        %1886 = vmatmul.bf16.gmra.mxu0 %v1819
        %v1887 = vpop.f32.mrf.mxu0
        %v1888 = vadd.f32 %v1846, %v1887
        %v1889 = vpop.f32.mrf.mxu0
        %v1890 = vadd.f32 %v1846, %v1889
        %1891 = vmatmul.bf16.gmra.mxu0 %v1822
        %v1892 = vpop.f32.mrf.mxu0
        %v1893 = vadd.f32 %v1846, %v1892
        %v1894 = vpop.f32.mrf.mxu0
        %v1895 = vadd.f32 %v1846, %v1894
        %1896 = vdwg.mxu0
        %v1897 = vtanh.pop %v1834
        %v1898 = vtanh.pop %v1836
        %v1899 = vtanh.pop %v1839
        %v1900 = vtanh.pop %v1841
        %v1901 = vxor.u32 %v1888, 2147483648
        %v1902 = vxor.u32 %v1890, 2147483648
        %v1903 = vxor.u32 %v1893, 2147483648
        %v1904 = vxor.u32 %v1895, 2147483648
        %v1905 = vmul.f32 %v1901, 1.442695
        %v1906 = vpow.pop %v1905
        %v1907 = vmul.f32 %v1902, 1.442695
        %v1908 = vpow.pop %v1907
        %v1909 = vmul.f32 %v1903, 1.442695
        %v1910 = vpow.pop %v1909
        %v1911 = vmul.f32 %v1904, 1.442695
        %v1912 = vpow.pop %v1911
        %v1913 = vadd.f32 %v1906, 1.0
        %v1914 = vadd.f32 %v1908, 1.0
        %v1915 = vadd.f32 %v1910, 1.0
        %v1916 = vadd.f32 %v1912, 1.0
        %v1917 = vrcp.pop %v1913
        %v1918 = vmul.f32 %v1913, %v1917
        %v1919 = vsub.f32 1.0, %v1918
        %v1920 = vmul.f32 %v1917, %v1919
        %v1921 = vadd.f32 %v1917, %v1920
        %vm1922 = vweird.f32 %v1913
        %vm1923 = vweird.f32 %v1917
        %vm1924 = vmor %vm1922, %vm1923
        %v1925 = vsel %vm1924, %v1917, %v1921
        %v1926 = vand.u32 2147483647, %v1913
        %vm1927 = vcmp.eq.f32.partialorder %v1926, 8.507059e+37
        %v1928 = vand.u32 %v1913, 2147483648
        %v1929 = vor.u32 1.1754944e-38, %v1928
        %v1930 = vsel %vm1927, %v1929, %v1925
        %v1931 = vmul.f32 1.0, %v1930
        %v1932 = vrcp.pop %v1914
        %v1933 = vmul.f32 %v1914, %v1932
        %v1934 = vsub.f32 1.0, %v1933
        %v1935 = vmul.f32 %v1932, %v1934
        %v1936 = vadd.f32 %v1932, %v1935
        %vm1937 = vweird.f32 %v1914
        %vm1938 = vweird.f32 %v1932
        %vm1939 = vmor %vm1937, %vm1938
        %v1940 = vsel %vm1939, %v1932, %v1936
        %v1941 = vand.u32 2147483647, %v1914
        %vm1942 = vcmp.eq.f32.partialorder %v1941, 8.507059e+37
        %v1943 = vand.u32 %v1914, 2147483648
        %v1944 = vor.u32 1.1754944e-38, %v1943
        %v1945 = vsel %vm1942, %v1944, %v1940
        %v1946 = vmul.f32 1.0, %v1945
        %v1947 = vrcp.pop %v1915
        %v1948 = vmul.f32 %v1915, %v1947
        %v1949 = vsub.f32 1.0, %v1948
        %v1950 = vmul.f32 %v1947, %v1949
        %v1951 = vadd.f32 %v1947, %v1950
        %vm1952 = vweird.f32 %v1915
        %vm1953 = vweird.f32 %v1947
        %vm1954 = vmor %vm1952, %vm1953
        %v1955 = vsel %vm1954, %v1947, %v1951
        %v1956 = vand.u32 2147483647, %v1915
        %vm1957 = vcmp.eq.f32.partialorder %v1956, 8.507059e+37
        %v1958 = vand.u32 %v1915, 2147483648
        %v1959 = vor.u32 1.1754944e-38, %v1958
        %v1960 = vsel %vm1957, %v1959, %v1955
        %v1961 = vmul.f32 1.0, %v1960
        %v1962 = vrcp.pop %v1916
        %v1963 = vmul.f32 %v1916, %v1962
        %v1964 = vsub.f32 1.0, %v1963
        %v1965 = vmul.f32 %v1962, %v1964
        %v1966 = vadd.f32 %v1962, %v1965
        %vm1967 = vweird.f32 %v1916
        %vm1968 = vweird.f32 %v1962
        %vm1969 = vmor %vm1967, %vm1968
        %v1970 = vsel %vm1969, %v1962, %v1966
        %v1971 = vand.u32 2147483647, %v1916
        %vm1972 = vcmp.eq.f32.partialorder %v1971, 8.507059e+37
        %v1973 = vand.u32 %v1916, 2147483648
        %v1974 = vor.u32 1.1754944e-38, %v1973
        %v1975 = vsel %vm1972, %v1974, %v1970
        %v1976 = vmul.f32 1.0, %v1975
        %v1977 = vmul.f32 %v1897, %v1931
        %v1978 = vmul.f32 %v1898, %v1946
        %v1979 = vmul.f32 %v1899, %v1961
        %v1980 = vmul.f32 %v1900, %v1976
        %v1981 = vpack.c.bf16 %v1978, %v1977
        %v1982 = vpack.c.bf16 %v1980, %v1979
        %v1983 = vld [vmem:[#allocation3] sm:$0xff]
        %v1984 = vld [vmem:[#allocation3 + $0x8] sm:$0xff]
        %v1985 = vld [vmem:[#allocation3 + $0x10] sm:$0xff]
        %v1986 = vld [vmem:[#allocation3 + $0x18] sm:$0xff]
        %s1987 = scalar_lea.vmem %s11, 16
        %v1988 = vld [vmem:[%s1987] sm:$0xf]
        %v1989 = vld [vmem:[%s1987 + $0x4] sm:$0xf]
        %s1990 = scalar_lea.vmem %s12, 2
        %v1991 = vld [vmem:[%s1990] sm:$0x1]
        %v1993 = vperm.slane %v1991, 0
        %v1997 = vunpack.c.l.b16 %v1988
        %v1998 = vunpack.c.l.b16 %v1989
        %v1999 = vpack.c.b16 %v1998, %v1997
        %v2002 = vsel %vm694, %v1981, 0
        %v2005 = vsel %vm694, %v1982, 0
        %2007 = vmatpush.bf16.msra.mxu0 0
        %2008 = vmatpush.bf16.msra.mxu0 0
        %2009 = vmatpush.bf16.msra.mxu0 0
        %2010 = vmatpush.bf16.msra.mxu0 0
        %2011 = vmatpush.bf16.msra.mxu0 0
        %2012 = vmatpush.bf16.msra.mxu0 0
        %2013 = vmatpush.bf16.msra.mxu0 0
        %2014 = vmatpush.bf16.msra.mxu0 %v1999
        %2015 = vmatmul.bf16.gmra.mxu0 %v2002
        %v2016 = vpop.f32.mrf.mxu0
        %v2017 = vadd.f32 %v1993, %v2016
        %v2018 = vpop.f32.mrf.mxu0
        %v2019 = vadd.f32 %v1993, %v2018
        %2020 = vmatmul.bf16.gmra.mxu0 %v2005
        %v2021 = vpop.f32.mrf.mxu0
        %v2022 = vadd.f32 %v1993, %v2021
        %v2023 = vpop.f32.mrf.mxu0
        %v2024 = vadd.f32 %v1993, %v2023
        %2025 = vdwg.mxu0
        %v2026 = vadd.f32 %v1983, %v2017
        %v2027 = vadd.f32 %v1984, %v2019
        %v2028 = vadd.f32 %v1985, %v2022
        %v2029 = vadd.f32 %v1986, %v2024
        %2030 = vst.msk [vmem:[#allocation3] sm:$0xff] %vm694, %v2026
        %2031 = vst.msk [vmem:[#allocation3 + $0x8] sm:$0xff] %vm694, %v2027
        %2032 = vst.msk [vmem:[#allocation3 + $0x10] sm:$0xff] %vm694, %v2028
        %2033 = vst.msk [vmem:[#allocation3 + $0x18] sm:$0xff] %vm694, %v2029
        %v2034 = vld [vmem:[#allocation3] sm:$0xff]
        %v2035 = vld [vmem:[#allocation3 + $0x8] sm:$0xff]
        %v2036 = vld [vmem:[#allocation3 + $0x10] sm:$0xff]
        %v2037 = vld [vmem:[#allocation3 + $0x18] sm:$0xff]
        %v2038 = vmul.f32 %v2034, %v637
        %v2039 = vmul.f32 %v2035, %v638
        %v2040 = vmul.f32 %v2036, %v639
        %v2041 = vmul.f32 %v2037, %v640
        %v2042 = vpack.c.bf16 %v2039, %v2038
        %v2043 = vpack.c.bf16 %v2041, %v2040
        %v2044 = vld [vmem:[%s13] sm:$0xf]
        %v2045 = vld [vmem:[%s13 + $0x4] sm:$0xf]
        %v2046 = vld [vmem:[%s14] sm:$0x1]
        %v2048 = vperm.slane %v2046, 0
        %v2052 = vunpack.c.l.b16 %v2044
        %v2053 = vunpack.c.l.b16 %v2045
        %v2054 = vpack.c.b16 %v2053, %v2052
        %v2057 = vsel %vm694, %v2042, 0
        %v2060 = vsel %vm694, %v2043, 0
        %2062 = vmatpush.bf16.msra.mxu0 0
        %2063 = vmatpush.bf16.msra.mxu0 0
        %2064 = vmatpush.bf16.msra.mxu0 0
        %2065 = vmatpush.bf16.msra.mxu0 0
        %2066 = vmatpush.bf16.msra.mxu0 0
        %2067 = vmatpush.bf16.msra.mxu0 0
        %2068 = vmatpush.bf16.msra.mxu0 0
        %2069 = vmatpush.bf16.msra.mxu0 %v2054
        %2070 = vmatmul.bf16.gmra.mxu0 %v2057
        %v2071 = vpop.f32.mrf.mxu0
        %v2072 = vadd.f32 %v2048, %v2071
        %v2073 = vpop.f32.mrf.mxu0
        %v2074 = vadd.f32 %v2048, %v2073
        %2075 = vmatmul.bf16.gmra.mxu0 %v2060
        %v2076 = vpop.f32.mrf.mxu0
        %v2077 = vadd.f32 %v2048, %v2076
        %v2078 = vpop.f32.mrf.mxu0
        %v2079 = vadd.f32 %v2048, %v2078
        %2080 = vdwg.mxu0
        %v2081 = vmul.f32 %v2072, %v637
        %v2082 = vmul.f32 %v2074, %v638
        %v2083 = vmul.f32 %v2077, %v639
        %v2084 = vmul.f32 %v2079, %v640
        %v2085 = vld [vmem:[%s15] sm:$0xf]
        %v2086 = vld [vmem:[%s15 + $0x4] sm:$0xf]
        %v2087 = vld [vmem:[%s16] sm:$0x1]
        %v2089 = vperm.slane %v2087, 0
        %v2093 = vunpack.c.l.b16 %v2085
        %v2094 = vunpack.c.l.b16 %v2086
        %v2095 = vpack.c.b16 %v2094, %v2093
        %2097 = vmatpush.bf16.msra.mxu0 0
        %2098 = vmatpush.bf16.msra.mxu0 0
        %2099 = vmatpush.bf16.msra.mxu0 0
        %2100 = vmatpush.bf16.msra.mxu0 0
        %2101 = vmatpush.bf16.msra.mxu0 0
        %2102 = vmatpush.bf16.msra.mxu0 0
        %2103 = vmatpush.bf16.msra.mxu0 0
        %2104 = vmatpush.bf16.msra.mxu0 %v2095
        %2105 = vmatmul.bf16.gmra.mxu0 %v2057
        %v2106 = vpop.f32.mrf.mxu0
        %v2107 = vadd.f32 %v2089, %v2106
        %v2108 = vpop.f32.mrf.mxu0
        %v2109 = vadd.f32 %v2089, %v2108
        %2110 = vmatmul.bf16.gmra.mxu0 %v2060
        %v2111 = vpop.f32.mrf.mxu0
        %v2112 = vadd.f32 %v2089, %v2111
        %v2113 = vpop.f32.mrf.mxu0
        %v2114 = vadd.f32 %v2089, %v2113
        %2115 = vdwg.mxu0
        %v2116 = vmul.f32 %v2107, %v637
        %v2117 = vmul.f32 %v2109, %v638
        %v2118 = vmul.f32 %v2112, %v639
        %v2119 = vmul.f32 %v2114, %v640
        %v2120 = vld [vmem:[%s620] sm:$0xff]
        %v2121 = vld [vmem:[%s620 + $0x8] sm:$0xff]
        %v2122 = vld [vmem:[%s620 + $0x10] sm:$0xff]
        %v2123 = vld [vmem:[%s620 + $0x18] sm:$0xff]
        %v2124 = vmul.f32 %v2116, 1.442695
        %v2125 = vpow.pop %v2124
        %v2126 = vmul.f32 %v2117, 1.442695
        %v2127 = vpow.pop %v2126
        %v2128 = vmul.f32 %v2118, 1.442695
        %v2129 = vpow.pop %v2128
        %v2130 = vmul.f32 %v2119, 1.442695
        %v2131 = vpow.pop %v2130
        %v2132 = vmul.f32 %v2120, %v2125
        %v2133 = vmul.f32 %v2121, %v2127
        %v2134 = vmul.f32 %v2122, %v2129
        %v2135 = vmul.f32 %v2123, %v2131
        %v2136 = vadd.f32 %v2081, %v2132
        %v2137 = vadd.f32 %v2082, %v2133
        %v2138 = vadd.f32 %v2083, %v2134
        %v2139 = vadd.f32 %v2084, %v2135
        %v2140 = vmul.f32 %v2136, %v637
        %v2141 = vmul.f32 %v2137, %v638
        %v2142 = vmul.f32 %v2138, %v639
        %v2143 = vmul.f32 %v2139, %v640
        %2144 = vst [vmem:[%s596] sm:$0xff] %v2140
        %2145 = vst [vmem:[%s596 + $0x8] sm:$0xff] %v2141
        %2146 = vst [vmem:[%s596 + $0x10] sm:$0xff] %v2142
        %2147 = vst [vmem:[%s596 + $0x18] sm:$0xff] %v2143
        %2148 = vst [vmem:[%s603] sm:$0xff] %v2081
        %2149 = vst [vmem:[%s603 + $0x8] sm:$0xff] %v2082
        %2150 = vst [vmem:[%s603 + $0x10] sm:$0xff] %v2083
        %2151 = vst [vmem:[%s603 + $0x18] sm:$0xff] %v2084
        %2152 = vst [vmem:[%s610] sm:$0xff] %v2116
        %2153 = vst [vmem:[%s610 + $0x8] sm:$0xff] %v2117
        %2154 = vst [vmem:[%s610 + $0x10] sm:$0xff] %v2118
        %2155 = vst [vmem:[%s610 + $0x18] sm:$0xff] %v2119
        %s2156 = sand.u32 %s399, 1
        %s2157 = scalar_lea.sflag [#allocation8], %s2156
        %s2158 = sand.u32 %s399, 1
        %s2159 = smul.addr %s2158, 32
        %s2160 = scalar_lea.vmem [#allocation7], %s2159
        %s2161 = sand.u32 %s45, 1
        %s2162 = scalar_lea.sflag [#allocation10], %s2161
        %s2163 = sand.u32 %s425, 1
        %s2164 = smul.addr %s2163, 32
        %s2165 = scalar_lea.vmem [#allocation9], %s2164
        %s2166 = sand.u32 %s45, 1
        %s2167 = scalar_lea.sflag [#allocation10], %s2166
        %s2168 = sand.u32 %s451, 1
        %s2169 = smul.addr %s2168, 32
        %s2170 = scalar_lea.vmem [#allocation11], %s2169
        // Predicated region
        $region85: #{tpu_custom_call.1} parent=83 // pred_check
          %p2171 = pneg %p409
        $region86: #{tpu_custom_call.1} parent=83 // pred_check_branch
          %2173 = sbr.rel (%p2171) target = $region88
        $region87: #{tpu_custom_call.1} parent=83 // pred_region
          %2175 = vsyncadd %s2157, 0
          %s2176 = smul.addr %s45, 4
          %s2177 = smul.addr %s2176, 8
          %s2178 = scalar_lea.hbm %s17, %s2177
          %s2179 = sshll.u32 %s2160, 4
          %s2180 = int_to_ptr.vmem [resolvable:$true] %s2179
          %s2181 = sshll.u32 %s2178, 4
          %s2182 = int_to_ptr.hbm [resolvable:$true] %s2181
          %2187 = dma.vmem_to_hbm [thread:$0]  %s2180, 512, %s2182, %s2157, 128, 128, 8
        $region88: #{tpu_custom_call.1} parent=83 // pred_fallthru
          _
        // Predicated region
        $region89: #{tpu_custom_call.1} parent=83 // pred_check
          %p2188 = pneg %p435
        $region90: #{tpu_custom_call.1} parent=83 // pred_check_branch
          %2190 = sbr.rel (%p2188) target = $region92
        $region91: #{tpu_custom_call.1} parent=83 // pred_region
          %2192 = vsyncadd %s2162, 0
          %s2193 = smul.addr %s45, 4
          %s2194 = smul.addr %s2193, 8
          %s2195 = scalar_lea.hbm %s18, %s2194
          %s2196 = sshll.u32 %s2165, 4
          %s2197 = int_to_ptr.vmem [resolvable:$true] %s2196
          %s2198 = sshll.u32 %s2195, 4
          %s2199 = int_to_ptr.hbm [resolvable:$true] %s2198
          %2204 = dma.vmem_to_hbm [thread:$0]  %s2197, 512, %s2199, %s2162, 128, 128, 8
        $region92: #{tpu_custom_call.1} parent=83 // pred_fallthru
          _
        // Predicated region
        $region93: #{tpu_custom_call.1} parent=83 // pred_check
          %p2205 = pneg %p461
        $region94: #{tpu_custom_call.1} parent=83 // pred_check_branch
          %2207 = sbr.rel (%p2205) target = $region96
        $region95: #{tpu_custom_call.1} parent=83 // pred_region
          %2209 = vsyncadd %s2167, 0
          %s2210 = smul.addr %s45, 4
          %s2211 = smul.addr %s2210, 8
          %s2212 = scalar_lea.hbm %s19, %s2211
          %s2213 = sshll.u32 %s2170, 4
          %s2214 = int_to_ptr.vmem [resolvable:$true] %s2213
          %s2215 = sshll.u32 %s2212, 4
          %s2216 = int_to_ptr.hbm [resolvable:$true] %s2215
          %2221 = dma.vmem_to_hbm [thread:$0]  %s2214, 512, %s2216, %s2167, 128, 128, 8
        $region96: #{tpu_custom_call.1} parent=83 // pred_fallthru
          _
      $region84: #{tpu_custom_call.1} parent=5 // pred_fallthru
        _
      %p2222 = scmp.le.s32.totalorder 2, %s40
      // Predicated region
      $region97: #{tpu_custom_call.1} parent=5 // pred_check
        %p2223 = pneg %p2222
      $region98: #{tpu_custom_call.1} parent=5 // pred_check_branch
        %2225 = sbr.rel (%p2223) target = $region100
      $region99: #{tpu_custom_call.1} parent=5 // pred_region
        %s2226 = ssub.s32 %s40, 2
        // Predicated region
        $region101: #{tpu_custom_call.1} parent=99 // pred_check
          %p2227 = pneg %p415
        $region102: #{tpu_custom_call.1} parent=99 // pred_check_branch
          %2229 = sbr.rel (%p2227) target = $region104
        $region103: #{tpu_custom_call.1} parent=99 // pred_region
          %s2230 = sand.u32 %s400, 1
          %s2231 = scalar_lea.sflag [#allocation8], %s2230
          %s2232 = sand.u32 %s400, 1
          %s2233 = smul.addr %s2232, 32
          %s2234 = scalar_lea.vmem [#allocation7], %s2233
          %2236 = dma.done %s2231, 512
        $region104: #{tpu_custom_call.1} parent=99 // pred_fallthru
          _
        // Predicated region
        $region105: #{tpu_custom_call.1} parent=99 // pred_check
          %p2237 = pneg %p441
        $region106: #{tpu_custom_call.1} parent=99 // pred_check_branch
          %2239 = sbr.rel (%p2237) target = $region108
        $region107: #{tpu_custom_call.1} parent=99 // pred_region
          %s2240 = sand.u32 %s46, 1
          %s2241 = scalar_lea.sflag [#allocation10], %s2240
          %s2242 = sand.u32 %s426, 1
          %s2243 = smul.addr %s2242, 32
          %s2244 = scalar_lea.vmem [#allocation9], %s2243
          %2246 = dma.done %s2241, 512
        $region108: #{tpu_custom_call.1} parent=99 // pred_fallthru
          _
        // Predicated region
        $region109: #{tpu_custom_call.1} parent=99 // pred_check
          %p2247 = pneg %p467
        $region110: #{tpu_custom_call.1} parent=99 // pred_check_branch
          %2249 = sbr.rel (%p2247) target = $region112
        $region111: #{tpu_custom_call.1} parent=99 // pred_region
          %s2250 = sand.u32 %s46, 1
          %s2251 = scalar_lea.sflag [#allocation10], %s2250
          %s2252 = sand.u32 %s452, 1
          %s2253 = smul.addr %s2252, 32
          %s2254 = scalar_lea.vmem [#allocation11], %s2253
          %2256 = dma.done %s2251, 512
        $region112: #{tpu_custom_call.1} parent=99 // pred_fallthru
          _
      $region100: #{tpu_custom_call.1} parent=5 // pred_fallthru
        _
    $region6: #{tpu_custom_call.1} parent=1 // loop_footer
      %s44 = sadd.s32 1, %s40
    $region7: #{tpu_custom_call.1} parent=1 // loop_footer_branch
      %39 = sbr.rel target = $region3
    $region8: #{tpu_custom_call.1} parent=1 // loop_exit
      _
    %2257 = vsyncpa [#allocation8], 1
    %s2258 = scalar_lea.sflag [#allocation8], 1
    %2259 = vsyncpa %s2258, 1
    %2260 = vsyncpa [#allocation10], 1
    %s2261 = scalar_lea.sflag [#allocation10], 1
    %2262 = vsyncpa %s2261, 1

</llo_original>
